<compile_context>
chip_gen: v5e
topology: v5e:2x2
jax: 0.10.0
libtpu: 0.0.40
codegen_flags: <defaults>
</compile_context>

<pallas_src>
import jax
import jax.numpy as jnp
from jax.experimental import pallas as pl
from jax.experimental.pallas import tpu as pltpu

NEG_SLOPE = 0.01  # nn.LeakyReLU() default negative_slope


def _cnn_fused_kernel(cols_ref, w1c_ref, b1_ref, w2_ref, b2_ref, wf_ref,
                      bfc_ref, out_ref, hp1_ref, x2_ref, hp2_ref, y2w_ref):
    """One image per grid step.

    cols_ref: (896, 9)  bf16  im2col of the padded image over a 28x32 grid
                              (rows r = h*32 + w, w >= 28 are zero-pad garbage)
    w1c_ref:  (9, 32)   bf16  conv1 weights, row k = (dy*3 + dx)
    b1_ref:   (1, 32)   f32
    w2_ref:   (9, 32, 64) bf16 conv2 weights, leading k = (dy*3 + dx)
    b2_ref:   (1, 64)   f32
    wf_ref:   (7, 448, 10) bf16 fc weights, (ho, wo*64 + c, n)
    bfc_ref:  (1, 10)   f32
    out_ref:  (1, 10)   f32
    scratch:  hp1 (448,32) f32, x2 (17,16,32) f32, hp2 (112,64) f32,
              y2w (8,448) bf16
    """
    f32, bf16 = jnp.float32, jnp.bfloat16

    # ---------------- layer 1: conv3x3(1->32) + bias + LeakyReLU -------------
    z1 = jnp.dot(cols_ref[...], w1c_ref[...],
                 preferred_element_type=f32)              # (896, 32)
    z1 = z1 + b1_ref[...]
    z1 = jnp.where(z1 > 0, z1, NEG_SLOPE * z1)

    # 2x2/2 max-pool, H direction: rows are h*32 + w, so pairing h with h+1 is
    # a tile-aligned reshape + one maximum (no loops, no masked stores).
    z1 = z1.reshape(14, 64, 32)                           # (h//2, (h%2)*32+w, c)
    hp1_ref[...] = jnp.maximum(z1[:, :32, :], z1[:, 32:, :]).reshape(448, 32)

    # W direction: even/odd rows of hp1 via stride-2 reads; keep 14 valid cols.
    y1 = jnp.maximum(hp1_ref[pl.ds(0, 224, 2), :],
                     hp1_ref[pl.ds(1, 224, 2), :])        # rows = ho*16 + wo
    y1 = y1.reshape(14, 16, 32)[:, :14, :]                # (14, 14, 32)

    # ---------------- layer 2: conv3x3(32->64) + bias + LeakyReLU ------------
    # Zero-padded input laid out so every tap (dy, dx) is a contiguous
    # 224-row slice of the flattened (17*16, 32) buffer (start = dy*16 + dx).
    x2_ref[...] = jnp.zeros_like(x2_ref)
    x2_ref[1:15, 1:15, :] = y1
    x2_flat = x2_ref[...].reshape(272, 32)

    acc2 = jnp.zeros((224, 64), f32)
    for k in range(9):                                    # static unroll
        start = (k // 3) * 16 + (k % 3)
        lhs = x2_flat[start:start + 224, :].astype(bf16)
        acc2 = acc2 + jnp.dot(lhs, w2_ref[k], preferred_element_type=f32)
    z2 = acc2 + b2_ref[...]
    z2 = jnp.where(z2 > 0, z2, NEG_SLOPE * z2)            # (224, 64), r = h*16+w

    # H-pool (aligned reshape + max).
    z2 = z2.reshape(7, 32, 64)
    hp2_ref[...] = jnp.maximum(z2[:, :16, :], z2[:, 16:, :]).reshape(112, 64)

    # W-pool, written lane-dense as (7, 448) = (ho, wo*64 + c) so the fc needs
    # no flatten/transpose.
    for wo in range(7):                                   # static unroll
        m = jnp.maximum(hp2_ref[pl.ds(2 * wo, 7, 16), :],
                        hp2_ref[pl.ds(2 * wo + 1, 7, 16), :])   # (7, 64)
        y2w_ref[0:7, wo * 64:(wo + 1) * 64] = m.astype(bf16)

    # ---------------- fc: Linear(3136 -> 10) ---------------------------------
    acc = jnp.zeros((1, 10), f32)
    for h in range(7):                                    # static unroll
        acc = acc + jnp.dot(y2w_ref[h:h + 1, :], wf_ref[h],
                            preferred_element_type=f32)
    out_ref[...] = (acc + bfc_ref[...]).astype(out_ref.dtype)


def init_params(key):
    k = jax.random.split(key, 6)
    # conv1 weights in HWIO (3, 3, 1, 32); consumed reshaped to (9, 32).
    w1 = jax.random.normal(k[0], (3, 3, 1, 32), jnp.float32) * 0.3
    b1 = jax.random.normal(k[1], (1, 32), jnp.float32) * 0.1
    # conv2 weights in HWIO (3, 3, 32, 64); consumed reshaped to (9, 32, 64).
    w2 = jax.random.normal(k[2], (3, 3, 32, 64), jnp.float32) * 0.06
    b2 = jax.random.normal(k[3], (1, 64), jnp.float32) * 0.1
    # fc weight stored directly in the kernel's (ho, wo*64 + c, 10) layout,
    # xavier_uniform like the PyTorch module.  From a PyTorch Linear weight
    # W (10, 3136):  wf[ho, wo*64 + c, n] = W[n, c*49 + ho*7 + wo].
    lim = (6.0 / (3136 + 10)) ** 0.5
    wf = jax.random.uniform(k[4], (7, 448, 10), jnp.float32, -lim, lim)
    bf = jax.random.normal(k[5], (1, 10), jnp.float32) * 0.05
    return dict(w1=w1, b1=b1, w2=w2, b2=b2, wf=wf, bf=bf)


@jax.jit
def cnn_forward(x_nchw, params):
    B = x_nchw.shape[0]
    assert x_nchw.shape[1:] == (1, 28, 28), "fc dim fixes the input to 1x28x28"

    # Host-side im2col for layer 1 (tiny, one fused XLA op on ~3 KB/image):
    # padded image (30, 34); rows r = h*32 + w cover a width-padded 28x32 grid
    # (w >= 28 columns are zero-pad filler, discarded by the pooling reads).
    x = x_nchw[:, 0]                                       # (B, 28, 28)
    xp = jnp.pad(x, ((0, 0), (1, 1), (1, 5)))              # (B, 30, 34)
    cols = jnp.stack(
        [xp[:, dy:dy + 28, dx:dx + 32] for dy in range(3) for dx in range(3)],
        axis=-1,
    )                                                      # (B, 28, 32, 9)
    cols = cols.reshape(B, 896, 9).astype(jnp.bfloat16)

    # bf16 MXU operands (f32 accumulation inside the kernel).
    w1c = params["w1"].reshape(9, 32).astype(jnp.bfloat16)
    w2 = params["w2"].reshape(9, 32, 64).astype(jnp.bfloat16)
    wf = params["wf"].astype(jnp.bfloat16)

    out = pl.pallas_call(
        _cnn_fused_kernel,
        out_shape=jax.ShapeDtypeStruct((B, 1, 10), jnp.float32),
        grid_spec=pltpu.PrefetchScalarGridSpec(
            num_scalar_prefetch=0,
            grid=(B,),
            in_specs=[
                pl.BlockSpec((None, 896, 9), lambda b: (b, 0, 0)),   # cols
                pl.BlockSpec((9, 32), lambda b: (0, 0)),             # w1c
                pl.BlockSpec((1, 32), lambda b: (0, 0)),             # b1
                pl.BlockSpec((9, 32, 64), lambda b: (0, 0, 0)),      # w2
                pl.BlockSpec((1, 64), lambda b: (0, 0)),             # b2
                pl.BlockSpec((7, 448, 10), lambda b: (0, 0, 0)),     # wf
                pl.BlockSpec((1, 10), lambda b: (0, 0)),             # bfc
            ],
            out_specs=pl.BlockSpec((None, 1, 10), lambda b: (b, 0, 0)),
            scratch_shapes=[
                pltpu.VMEM((448, 32), jnp.float32),    # hp1: layer-1 H-pooled
                pltpu.VMEM((17, 16, 32), jnp.float32), # x2: padded conv2 input
                pltpu.VMEM((112, 64), jnp.float32),    # hp2: layer-2 H-pooled
                pltpu.VMEM((8, 448), jnp.bfloat16),    # y2w: pooled, fc-ready
            ],
        ),
        compiler_params=pltpu.CompilerParams(
            dimension_semantics=("parallel",),         # v7x: 2 TCs split batch
        ),
    )(cols, w1c, params["b1"], w2, params["b2"], wf, params["bf"])

    return out.reshape(B, 10)


if __name__ == "__main__":
    key = jax.random.PRNGKey(0)
    kx, kp = jax.random.split(key)
    # fc expects 7*7*64 features, so the spatial size is fixed at 28x28 (MNIST).
    x = jax.random.normal(kx, (2, 1, 28, 28), jnp.float32)   # NCHW like PyTorch
    params = init_params(kp)
    out = cnn_forward(x, params)
    jax.block_until_ready(out)
    assert out.shape == (2, 10) and out.dtype == jnp.float32
    print("KERNEL_OK")
</pallas_src>

<mosaic_0001>
module attributes {stable_mosaic.version = 11 : i64} {
  func.func @_cnn_fused_kernel(%arg0: i32, %arg1: memref<1x896x9xbf16, #tpu.memory_space<vmem>>, %arg2: memref<9x32xbf16, #tpu.memory_space<vmem>>, %arg3: memref<1x32xf32, #tpu.memory_space<vmem>>, %arg4: memref<9x32x64xbf16, #tpu.memory_space<vmem>>, %arg5: memref<1x64xf32, #tpu.memory_space<vmem>>, %arg6: memref<7x448x10xbf16, #tpu.memory_space<vmem>>, %arg7: memref<1x10xf32, #tpu.memory_space<vmem>>, %arg8: memref<1x1x10xf32, #tpu.memory_space<vmem>>, %arg9: memref<448x32xf32, #tpu.memory_space<vmem>>, %arg10: memref<17x16x32xf32, #tpu.memory_space<vmem>>, %arg11: memref<112x64xf32, #tpu.memory_space<vmem>>, %arg12: memref<8x448xbf16, #tpu.memory_space<vmem>>) attributes {dimension_semantics = [#tpu.dimension_semantics<parallel>], iteration_bounds = array<i64: 2>, scalar_prefetch = 0 : i64, scratch_operands = 4 : i64, tpu.core_type = #tpu.core_type<tc>, window_params = [{transform_indices = @transform_0, window_bounds = array<i64: 1, 896, 9>}, {pipeline_mode = #tpu.pipeline_mode<synchronous>, transform_indices = @transform_1, window_bounds = array<i64: 9, 32>}, {pipeline_mode = #tpu.pipeline_mode<synchronous>, transform_indices = @transform_2, window_bounds = array<i64: 1, 32>}, {pipeline_mode = #tpu.pipeline_mode<synchronous>, transform_indices = @transform_3, window_bounds = array<i64: 9, 32, 64>}, {pipeline_mode = #tpu.pipeline_mode<synchronous>, transform_indices = @transform_4, window_bounds = array<i64: 1, 64>}, {pipeline_mode = #tpu.pipeline_mode<synchronous>, transform_indices = @transform_5, window_bounds = array<i64: 7, 448, 10>}, {pipeline_mode = #tpu.pipeline_mode<synchronous>, transform_indices = @transform_6, window_bounds = array<i64: 1, 10>}, {transform_indices = @transform_7, window_bounds = array<i64: 1, 1, 10>}]} {
    %c0 = arith.constant 0 : index
    %c0_0 = arith.constant 0 : index
    %c0_1 = arith.constant 0 : index
    %0 = vector.load %arg1[%c0, %c0_0, %c0_1] : memref<1x896x9xbf16, #tpu.memory_space<vmem>>, vector<1x896x9xbf16>
    %1 = vector.shape_cast %0 : vector<1x896x9xbf16> to vector<896x9xbf16>
    %c0_2 = arith.constant 0 : index
    %c0_3 = arith.constant 0 : index
    %2 = vector.load %arg2[%c0_2, %c0_3] : memref<9x32xbf16, #tpu.memory_space<vmem>>, vector<9x32xbf16>
    %cst = arith.constant dense<0.000000e+00> : vector<896x32xf32>
    %3 = tpu.matmul %1, %2, %cst {dimension_numbers = #tpu.dot_dimension_numbers<[1], [0], [0], [1], [0, 0, 1, 1], [], []>} : vector<896x9xbf16>, vector<9x32xbf16>, vector<896x32xf32> -> vector<896x32xf32>
    %c0_4 = arith.constant 0 : index
    %c0_5 = arith.constant 0 : index
    %4 = vector.load %arg3[%c0_4, %c0_5] : memref<1x32xf32, #tpu.memory_space<vmem>>, vector<1x32xf32>
    %5 = vector.broadcast %4 : vector<1x32xf32> to vector<896x32xf32>
    %6 = arith.addf %3, %5 : vector<896x32xf32>
    %cst_6 = arith.constant 0.000000e+00 : f32
    %7 = vector.broadcast %cst_6 : f32 to vector<896x32xf32>
    %8 = arith.cmpf ogt, %6, %7 : vector<896x32xf32>
    %cst_7 = arith.constant 0.00999999977 : f32
    %9 = vector.broadcast %cst_7 : f32 to vector<896x32xf32>
    %10 = arith.mulf %9, %6 : vector<896x32xf32>
    %11 = arith.select %8, %6, %10 : vector<896x32xi1>, vector<896x32xf32>
    %12 = vector.shape_cast %11 : vector<896x32xf32> to vector<14x64x32xf32>
    %13 = vector.extract_strided_slice %12 {offsets = [0, 0, 0], sizes = [14, 32, 32], strides = [1, 1, 1]} : vector<14x64x32xf32> to vector<14x32x32xf32>
    %14 = vector.extract_strided_slice %12 {offsets = [0, 32, 0], sizes = [14, 32, 32], strides = [1, 1, 1]} : vector<14x64x32xf32> to vector<14x32x32xf32>
    %15 = arith.maximumf %13, %14 : vector<14x32x32xf32>
    %16 = vector.shape_cast %15 : vector<14x32x32xf32> to vector<448x32xf32>
    %c0_8 = arith.constant 0 : index
    %c0_9 = arith.constant 0 : index
    %17 = vector.load %arg9[%c0_8, %c0_9] : memref<448x32xf32, #tpu.memory_space<vmem>>, vector<448x32xf32>
    tpu.vector_store %arg9[%c0_8, %c0_9], %16 {strides = array<i32>} : memref<448x32xf32, #tpu.memory_space<vmem>>, vector<448x32xf32>,
    %c0_10 = arith.constant 0 : index
    %c0_11 = arith.constant 0 : index
    %18 = tpu.strided_load %arg9[%c0_10, %c0_11] {strides = array<i32: 2, 1>} : memref<448x32xf32, #tpu.memory_space<vmem>>, vector<224x32xf32>
    %c1 = arith.constant 1 : index
    %c0_12 = arith.constant 0 : index
    %19 = tpu.strided_load %arg9[%c1, %c0_12] {strides = array<i32: 2, 1>} : memref<448x32xf32, #tpu.memory_space<vmem>>, vector<224x32xf32>
    %20 = arith.maximumf %18, %19 : vector<224x32xf32>
    %21 = vector.shape_cast %20 : vector<224x32xf32> to vector<14x16x32xf32>
    %22 = vector.extract_strided_slice %21 {offsets = [0, 0, 0], sizes = [14, 14, 32], strides = [1, 1, 1]} : vector<14x16x32xf32> to vector<14x14x32xf32>
    %cst_13 = arith.constant 0.000000e+00 : f32
    %23 = vector.broadcast %cst_13 : f32 to vector<17x16x32xf32>
    %c0_14 = arith.constant 0 : index
    %c0_15 = arith.constant 0 : index
    %c0_16 = arith.constant 0 : index
    %24 = vector.load %arg10[%c0_14, %c0_15, %c0_16] : memref<17x16x32xf32, #tpu.memory_space<vmem>>, vector<17x16x32xf32>
    tpu.vector_store %arg10[%c0_14, %c0_15, %c0_16], %23 {strides = array<i32>} : memref<17x16x32xf32, #tpu.memory_space<vmem>>, vector<17x16x32xf32>,
    %c1_17 = arith.constant 1 : index
    %c1_18 = arith.constant 1 : index
    %c0_19 = arith.constant 0 : index
    %25 = vector.load %arg10[%c1_17, %c1_18, %c0_19] : memref<17x16x32xf32, #tpu.memory_space<vmem>>, vector<14x14x32xf32>
    tpu.vector_store %arg10[%c1_17, %c1_18, %c0_19], %22 {strides = array<i32>} : memref<17x16x32xf32, #tpu.memory_space<vmem>>, vector<14x14x32xf32>,
    %c0_20 = arith.constant 0 : index
    %c0_21 = arith.constant 0 : index
    %c0_22 = arith.constant 0 : index
    %26 = vector.load %arg10[%c0_20, %c0_21, %c0_22] : memref<17x16x32xf32, #tpu.memory_space<vmem>>, vector<17x16x32xf32>
    %27 = vector.shape_cast %26 : vector<17x16x32xf32> to vector<272x32xf32>
    %cst_23 = arith.constant 0.000000e+00 : f32
    %28 = vector.broadcast %cst_23 : f32 to vector<224x64xf32>
    %29 = vector.extract_strided_slice %27 {offsets = [0, 0], sizes = [224, 32], strides = [1, 1]} : vector<272x32xf32> to vector<224x32xf32>
    %30 = arith.truncf %29 : vector<224x32xf32> to vector<224x32xbf16>
    %c0_24 = arith.constant 0 : index
    %c0_25 = arith.constant 0 : index
    %c0_26 = arith.constant 0 : index
    %31 = vector.load %arg4[%c0_24, %c0_25, %c0_26] : memref<9x32x64xbf16, #tpu.memory_space<vmem>>, vector<1x32x64xbf16>
    %32 = vector.shape_cast %31 : vector<1x32x64xbf16> to vector<32x64xbf16>
    %cst_27 = arith.constant dense<0.000000e+00> : vector<224x64xf32>
    %33 = tpu.matmul %30, %32, %cst_27 {dimension_numbers = #tpu.dot_dimension_numbers<[1], [0], [0], [1], [0, 0, 1, 1], [], []>} : vector<224x32xbf16>, vector<32x64xbf16>, vector<224x64xf32> -> vector<224x64xf32>
    %34 = arith.addf %28, %33 : vector<224x64xf32>
    %35 = vector.extract_strided_slice %27 {offsets = [1, 0], sizes = [224, 32], strides = [1, 1]} : vector<272x32xf32> to vector<224x32xf32>
    %36 = arith.truncf %35 : vector<224x32xf32> to vector<224x32xbf16>
    %c1_28 = arith.constant 1 : index
    %c0_29 = arith.constant 0 : index
    %c0_30 = arith.constant 0 : index
    %37 = vector.load %arg4[%c1_28, %c0_29, %c0_30] : memref<9x32x64xbf16, #tpu.memory_space<vmem>>, vector<1x32x64xbf16>
    %38 = vector.shape_cast %37 : vector<1x32x64xbf16> to vector<32x64xbf16>
    %cst_31 = arith.constant dense<0.000000e+00> : vector<224x64xf32>
    %39 = tpu.matmul %36, %38, %cst_31 {dimension_numbers = #tpu.dot_dimension_numbers<[1], [0], [0], [1], [0, 0, 1, 1], [], []>} : vector<224x32xbf16>, vector<32x64xbf16>, vector<224x64xf32> -> vector<224x64xf32>
    %40 = arith.addf %34, %39 : vector<224x64xf32>
    %41 = vector.extract_strided_slice %27 {offsets = [2, 0], sizes = [224, 32], strides = [1, 1]} : vector<272x32xf32> to vector<224x32xf32>
    %42 = arith.truncf %41 : vector<224x32xf32> to vector<224x32xbf16>
    %c2 = arith.constant 2 : index
    %c0_32 = arith.constant 0 : index
    %c0_33 = arith.constant 0 : index
    %43 = vector.load %arg4[%c2, %c0_32, %c0_33] : memref<9x32x64xbf16, #tpu.memory_space<vmem>>, vector<1x32x64xbf16>
    %44 = vector.shape_cast %43 : vector<1x32x64xbf16> to vector<32x64xbf16>
    %cst_34 = arith.constant dense<0.000000e+00> : vector<224x64xf32>
    %45 = tpu.matmul %42, %44, %cst_34 {dimension_numbers = #tpu.dot_dimension_numbers<[1], [0], [0], [1], [0, 0, 1, 1], [], []>} : vector<224x32xbf16>, vector<32x64xbf16>, vector<224x64xf32> -> vector<224x64xf32>
    %46 = arith.addf %40, %45 : vector<224x64xf32>
    %47 = vector.extract_strided_slice %27 {offsets = [16, 0], sizes = [224, 32], strides = [1, 1]} : vector<272x32xf32> to vector<224x32xf32>
    %48 = arith.truncf %47 : vector<224x32xf32> to vector<224x32xbf16>
    %c3 = arith.constant 3 : index
    %c0_35 = arith.constant 0 : index
    %c0_36 = arith.constant 0 : index
    %49 = vector.load %arg4[%c3, %c0_35, %c0_36] : memref<9x32x64xbf16, #tpu.memory_space<vmem>>, vector<1x32x64xbf16>
    %50 = vector.shape_cast %49 : vector<1x32x64xbf16> to vector<32x64xbf16>
    %cst_37 = arith.constant dense<0.000000e+00> : vector<224x64xf32>
    %51 = tpu.matmul %48, %50, %cst_37 {dimension_numbers = #tpu.dot_dimension_numbers<[1], [0], [0], [1], [0, 0, 1, 1], [], []>} : vector<224x32xbf16>, vector<32x64xbf16>, vector<224x64xf32> -> vector<224x64xf32>
    %52 = arith.addf %46, %51 : vector<224x64xf32>
    %53 = vector.extract_strided_slice %27 {offsets = [17, 0], sizes = [224, 32], strides = [1, 1]} : vector<272x32xf32> to vector<224x32xf32>
    %54 = arith.truncf %53 : vector<224x32xf32> to vector<224x32xbf16>
    %c4 = arith.constant 4 : index
    %c0_38 = arith.constant 0 : index
    %c0_39 = arith.constant 0 : index
    %55 = vector.load %arg4[%c4, %c0_38, %c0_39] : memref<9x32x64xbf16, #tpu.memory_space<vmem>>, vector<1x32x64xbf16>
    %56 = vector.shape_cast %55 : vector<1x32x64xbf16> to vector<32x64xbf16>
    %cst_40 = arith.constant dense<0.000000e+00> : vector<224x64xf32>
    %57 = tpu.matmul %54, %56, %cst_40 {dimension_numbers = #tpu.dot_dimension_numbers<[1], [0], [0], [1], [0, 0, 1, 1], [], []>} : vector<224x32xbf16>, vector<32x64xbf16>, vector<224x64xf32> -> vector<224x64xf32>
    %58 = arith.addf %52, %57 : vector<224x64xf32>
    %59 = vector.extract_strided_slice %27 {offsets = [18, 0], sizes = [224, 32], strides = [1, 1]} : vector<272x32xf32> to vector<224x32xf32>
    %60 = arith.truncf %59 : vector<224x32xf32> to vector<224x32xbf16>
    %c5 = arith.constant 5 : index
    %c0_41 = arith.constant 0 : index
    %c0_42 = arith.constant 0 : index
    %61 = vector.load %arg4[%c5, %c0_41, %c0_42] : memref<9x32x64xbf16, #tpu.memory_space<vmem>>, vector<1x32x64xbf16>
    %62 = vector.shape_cast %61 : vector<1x32x64xbf16> to vector<32x64xbf16>
    %cst_43 = arith.constant dense<0.000000e+00> : vector<224x64xf32>
    %63 = tpu.matmul %60, %62, %cst_43 {dimension_numbers = #tpu.dot_dimension_numbers<[1], [0], [0], [1], [0, 0, 1, 1], [], []>} : vector<224x32xbf16>, vector<32x64xbf16>, vector<224x64xf32> -> vector<224x64xf32>
    %64 = arith.addf %58, %63 : vector<224x64xf32>
    %65 = vector.extract_strided_slice %27 {offsets = [32, 0], sizes = [224, 32], strides = [1, 1]} : vector<272x32xf32> to vector<224x32xf32>
    %66 = arith.truncf %65 : vector<224x32xf32> to vector<224x32xbf16>
    %c6 = arith.constant 6 : index
    %c0_44 = arith.constant 0 : index
    %c0_45 = arith.constant 0 : index
    %67 = vector.load %arg4[%c6, %c0_44, %c0_45] : memref<9x32x64xbf16, #tpu.memory_space<vmem>>, vector<1x32x64xbf16>
    %68 = vector.shape_cast %67 : vector<1x32x64xbf16> to vector<32x64xbf16>
    %cst_46 = arith.constant dense<0.000000e+00> : vector<224x64xf32>
    %69 = tpu.matmul %66, %68, %cst_46 {dimension_numbers = #tpu.dot_dimension_numbers<[1], [0], [0], [1], [0, 0, 1, 1], [], []>} : vector<224x32xbf16>, vector<32x64xbf16>, vector<224x64xf32> -> vector<224x64xf32>
    %70 = arith.addf %64, %69 : vector<224x64xf32>
    %71 = vector.extract_strided_slice %27 {offsets = [33, 0], sizes = [224, 32], strides = [1, 1]} : vector<272x32xf32> to vector<224x32xf32>
    %72 = arith.truncf %71 : vector<224x32xf32> to vector<224x32xbf16>
    %c7 = arith.constant 7 : index
    %c0_47 = arith.constant 0 : index
    %c0_48 = arith.constant 0 : index
    %73 = vector.load %arg4[%c7, %c0_47, %c0_48] : memref<9x32x64xbf16, #tpu.memory_space<vmem>>, vector<1x32x64xbf16>
    %74 = vector.shape_cast %73 : vector<1x32x64xbf16> to vector<32x64xbf16>
    %cst_49 = arith.constant dense<0.000000e+00> : vector<224x64xf32>
    %75 = tpu.matmul %72, %74, %cst_49 {dimension_numbers = #tpu.dot_dimension_numbers<[1], [0], [0], [1], [0, 0, 1, 1], [], []>} : vector<224x32xbf16>, vector<32x64xbf16>, vector<224x64xf32> -> vector<224x64xf32>
    %76 = arith.addf %70, %75 : vector<224x64xf32>
    %77 = vector.extract_strided_slice %27 {offsets = [34, 0], sizes = [224, 32], strides = [1, 1]} : vector<272x32xf32> to vector<224x32xf32>
    %78 = arith.truncf %77 : vector<224x32xf32> to vector<224x32xbf16>
    %c8 = arith.constant 8 : index
    %c0_50 = arith.constant 0 : index
    %c0_51 = arith.constant 0 : index
    %79 = vector.load %arg4[%c8, %c0_50, %c0_51] : memref<9x32x64xbf16, #tpu.memory_space<vmem>>, vector<1x32x64xbf16>
    %80 = vector.shape_cast %79 : vector<1x32x64xbf16> to vector<32x64xbf16>
    %cst_52 = arith.constant dense<0.000000e+00> : vector<224x64xf32>
    %81 = tpu.matmul %78, %80, %cst_52 {dimension_numbers = #tpu.dot_dimension_numbers<[1], [0], [0], [1], [0, 0, 1, 1], [], []>} : vector<224x32xbf16>, vector<32x64xbf16>, vector<224x64xf32> -> vector<224x64xf32>
    %82 = arith.addf %76, %81 : vector<224x64xf32>
    %c0_53 = arith.constant 0 : index
    %c0_54 = arith.constant 0 : index
    %83 = vector.load %arg5[%c0_53, %c0_54] : memref<1x64xf32, #tpu.memory_space<vmem>>, vector<1x64xf32>
    %84 = vector.broadcast %83 : vector<1x64xf32> to vector<224x64xf32>
    %85 = arith.addf %82, %84 : vector<224x64xf32>
    %cst_55 = arith.constant 0.000000e+00 : f32
    %86 = vector.broadcast %cst_55 : f32 to vector<224x64xf32>
    %87 = arith.cmpf ogt, %85, %86 : vector<224x64xf32>
    %cst_56 = arith.constant 0.00999999977 : f32
    %88 = vector.broadcast %cst_56 : f32 to vector<224x64xf32>
    %89 = arith.mulf %88, %85 : vector<224x64xf32>
    %90 = arith.select %87, %85, %89 : vector<224x64xi1>, vector<224x64xf32>
    %91 = vector.shape_cast %90 : vector<224x64xf32> to vector<7x32x64xf32>
    %92 = vector.extract_strided_slice %91 {offsets = [0, 0, 0], sizes = [7, 16, 64], strides = [1, 1, 1]} : vector<7x32x64xf32> to vector<7x16x64xf32>
    %93 = vector.extract_strided_slice %91 {offsets = [0, 16, 0], sizes = [7, 16, 64], strides = [1, 1, 1]} : vector<7x32x64xf32> to vector<7x16x64xf32>
    %94 = arith.maximumf %92, %93 : vector<7x16x64xf32>
    %95 = vector.shape_cast %94 : vector<7x16x64xf32> to vector<112x64xf32>
    %c0_57 = arith.constant 0 : index
    %c0_58 = arith.constant 0 : index
    %96 = vector.load %arg11[%c0_57, %c0_58] : memref<112x64xf32, #tpu.memory_space<vmem>>, vector<112x64xf32>
    tpu.vector_store %arg11[%c0_57, %c0_58], %95 {strides = array<i32>} : memref<112x64xf32, #tpu.memory_space<vmem>>, vector<112x64xf32>,
    %c0_59 = arith.constant 0 : index
    %c0_60 = arith.constant 0 : index
    %97 = tpu.strided_load %arg11[%c0_59, %c0_60] {strides = array<i32: 16, 1>} : memref<112x64xf32, #tpu.memory_space<vmem>>, vector<7x64xf32>
    %c1_61 = arith.constant 1 : index
    %c0_62 = arith.constant 0 : index
    %98 = tpu.strided_load %arg11[%c1_61, %c0_62] {strides = array<i32: 16, 1>} : memref<112x64xf32, #tpu.memory_space<vmem>>, vector<7x64xf32>
    %99 = arith.maximumf %97, %98 : vector<7x64xf32>
    %100 = arith.truncf %99 : vector<7x64xf32> to vector<7x64xbf16>
    %c0_63 = arith.constant 0 : index
    %c0_64 = arith.constant 0 : index
    %101 = vector.load %arg12[%c0_63, %c0_64] : memref<8x448xbf16, #tpu.memory_space<vmem>>, vector<7x64xbf16>
    tpu.vector_store %arg12[%c0_63, %c0_64], %100 {strides = array<i32>} : memref<8x448xbf16, #tpu.memory_space<vmem>>, vector<7x64xbf16>,
    %c2_65 = arith.constant 2 : index
    %c0_66 = arith.constant 0 : index
    %102 = tpu.strided_load %arg11[%c2_65, %c0_66] {strides = array<i32: 16, 1>} : memref<112x64xf32, #tpu.memory_space<vmem>>, vector<7x64xf32>
    %c3_67 = arith.constant 3 : index
    %c0_68 = arith.constant 0 : index
    %103 = tpu.strided_load %arg11[%c3_67, %c0_68] {strides = array<i32: 16, 1>} : memref<112x64xf32, #tpu.memory_space<vmem>>, vector<7x64xf32>
    %104 = arith.maximumf %102, %103 : vector<7x64xf32>
    %105 = arith.truncf %104 : vector<7x64xf32> to vector<7x64xbf16>
    %c0_69 = arith.constant 0 : index
    %c64 = arith.constant 64 : index
    %106 = vector.load %arg12[%c0_69, %c64] : memref<8x448xbf16, #tpu.memory_space<vmem>>, vector<7x64xbf16>
    tpu.vector_store %arg12[%c0_69, %c64], %105 {strides = array<i32>} : memref<8x448xbf16, #tpu.memory_space<vmem>>, vector<7x64xbf16>,
    %c4_70 = arith.constant 4 : index
    %c0_71 = arith.constant 0 : index
    %107 = tpu.strided_load %arg11[%c4_70, %c0_71] {strides = array<i32: 16, 1>} : memref<112x64xf32, #tpu.memory_space<vmem>>, vector<7x64xf32>
    %c5_72 = arith.constant 5 : index
    %c0_73 = arith.constant 0 : index
    %108 = tpu.strided_load %arg11[%c5_72, %c0_73] {strides = array<i32: 16, 1>} : memref<112x64xf32, #tpu.memory_space<vmem>>, vector<7x64xf32>
    %109 = arith.maximumf %107, %108 : vector<7x64xf32>
    %110 = arith.truncf %109 : vector<7x64xf32> to vector<7x64xbf16>
    %c0_74 = arith.constant 0 : index
    %c128 = arith.constant 128 : index
    %111 = vector.load %arg12[%c0_74, %c128] : memref<8x448xbf16, #tpu.memory_space<vmem>>, vector<7x64xbf16>
    tpu.vector_store %arg12[%c0_74, %c128], %110 {strides = array<i32>} : memref<8x448xbf16, #tpu.memory_space<vmem>>, vector<7x64xbf16>,
    %c6_75 = arith.constant 6 : index
    %c0_76 = arith.constant 0 : index
    %112 = tpu.strided_load %arg11[%c6_75, %c0_76] {strides = array<i32: 16, 1>} : memref<112x64xf32, #tpu.memory_space<vmem>>, vector<7x64xf32>
    %c7_77 = arith.constant 7 : index
    %c0_78 = arith.constant 0 : index
    %113 = tpu.strided_load %arg11[%c7_77, %c0_78] {strides = array<i32: 16, 1>} : memref<112x64xf32, #tpu.memory_space<vmem>>, vector<7x64xf32>
    %114 = arith.maximumf %112, %113 : vector<7x64xf32>
    %115 = arith.truncf %114 : vector<7x64xf32> to vector<7x64xbf16>
    %c0_79 = arith.constant 0 : index
    %c192 = arith.constant 192 : index
    %116 = vector.load %arg12[%c0_79, %c192] : memref<8x448xbf16, #tpu.memory_space<vmem>>, vector<7x64xbf16>
    tpu.vector_store %arg12[%c0_79, %c192], %115 {strides = array<i32>} : memref<8x448xbf16, #tpu.memory_space<vmem>>, vector<7x64xbf16>,
    %c8_80 = arith.constant 8 : index
    %c0_81 = arith.constant 0 : index
    %117 = tpu.strided_load %arg11[%c8_80, %c0_81] {strides = array<i32: 16, 1>} : memref<112x64xf32, #tpu.memory_space<vmem>>, vector<7x64xf32>
    %c9 = arith.constant 9 : index
    %c0_82 = arith.constant 0 : index
    %118 = tpu.strided_load %arg11[%c9, %c0_82] {strides = array<i32: 16, 1>} : memref<112x64xf32, #tpu.memory_space<vmem>>, vector<7x64xf32>
    %119 = arith.maximumf %117, %118 : vector<7x64xf32>
    %120 = arith.truncf %119 : vector<7x64xf32> to vector<7x64xbf16>
    %c0_83 = arith.constant 0 : index
    %c256 = arith.constant 256 : index
    %121 = vector.load %arg12[%c0_83, %c256] : memref<8x448xbf16, #tpu.memory_space<vmem>>, vector<7x64xbf16>
    tpu.vector_store %arg12[%c0_83, %c256], %120 {strides = array<i32>} : memref<8x448xbf16, #tpu.memory_space<vmem>>, vector<7x64xbf16>,
    %c10 = arith.constant 10 : index
    %c0_84 = arith.constant 0 : index
    %122 = tpu.strided_load %arg11[%c10, %c0_84] {strides = array<i32: 16, 1>} : memref<112x64xf32, #tpu.memory_space<vmem>>, vector<7x64xf32>
    %c11 = arith.constant 11 : index
    %c0_85 = arith.constant 0 : index
    %123 = tpu.strided_load %arg11[%c11, %c0_85] {strides = array<i32: 16, 1>} : memref<112x64xf32, #tpu.memory_space<vmem>>, vector<7x64xf32>
    %124 = arith.maximumf %122, %123 : vector<7x64xf32>
    %125 = arith.truncf %124 : vector<7x64xf32> to vector<7x64xbf16>
    %c0_86 = arith.constant 0 : index
    %c320 = arith.constant 320 : index
    %126 = vector.load %arg12[%c0_86, %c320] : memref<8x448xbf16, #tpu.memory_space<vmem>>, vector<7x64xbf16>
    tpu.vector_store %arg12[%c0_86, %c320], %125 {strides = array<i32>} : memref<8x448xbf16, #tpu.memory_space<vmem>>, vector<7x64xbf16>,
    %c12 = arith.constant 12 : index
    %c0_87 = arith.constant 0 : index
    %127 = tpu.strided_load %arg11[%c12, %c0_87] {strides = array<i32: 16, 1>} : memref<112x64xf32, #tpu.memory_space<vmem>>, vector<7x64xf32>
    %c13 = arith.constant 13 : index
    %c0_88 = arith.constant 0 : index
    %128 = tpu.strided_load %arg11[%c13, %c0_88] {strides = array<i32: 16, 1>} : memref<112x64xf32, #tpu.memory_space<vmem>>, vector<7x64xf32>
    %129 = arith.maximumf %127, %128 : vector<7x64xf32>
    %130 = arith.truncf %129 : vector<7x64xf32> to vector<7x64xbf16>
    %c0_89 = arith.constant 0 : index
    %c384 = arith.constant 384 : index
    %131 = vector.load %arg12[%c0_89, %c384] : memref<8x448xbf16, #tpu.memory_space<vmem>>, vector<7x64xbf16>
    tpu.vector_store %arg12[%c0_89, %c384], %130 {strides = array<i32>} : memref<8x448xbf16, #tpu.memory_space<vmem>>, vector<7x64xbf16>,
    %cst_90 = arith.constant 0.000000e+00 : f32
    %132 = vector.broadcast %cst_90 : f32 to vector<1x10xf32>
    %c0_91 = arith.constant 0 : index
    %c0_92 = arith.constant 0 : index
    %133 = vector.load %arg12[%c0_91, %c0_92] : memref<8x448xbf16, #tpu.memory_space<vmem>>, vector<1x448xbf16>
    %c0_93 = arith.constant 0 : index
    %c0_94 = arith.constant 0 : index
    %c0_95 = arith.constant 0 : index
    %134 = vector.load %arg6[%c0_93, %c0_94, %c0_95] : memref<7x448x10xbf16, #tpu.memory_space<vmem>>, vector<1x448x10xbf16>
    %135 = vector.shape_cast %134 : vector<1x448x10xbf16> to vector<448x10xbf16>
    %cst_96 = arith.constant dense<0.000000e+00> : vector<1x10xf32>
    %136 = tpu.matmul %133, %135, %cst_96 {dimension_numbers = #tpu.dot_dimension_numbers<[1], [0], [0], [1], [0, 0, 1, 1], [], []>} : vector<1x448xbf16>, vector<448x10xbf16>, vector<1x10xf32> -> vector<1x10xf32>
    %137 = arith.addf %132, %136 : vector<1x10xf32>
    %c1_97 = arith.constant 1 : index
    %c0_98 = arith.constant 0 : index
    %138 = vector.load %arg12[%c1_97, %c0_98] : memref<8x448xbf16, #tpu.memory_space<vmem>>, vector<1x448xbf16>
    %c1_99 = arith.constant 1 : index
    %c0_100 = arith.constant 0 : index
    %c0_101 = arith.constant 0 : index
    %139 = vector.load %arg6[%c1_99, %c0_100, %c0_101] : memref<7x448x10xbf16, #tpu.memory_space<vmem>>, vector<1x448x10xbf16>
    %140 = vector.shape_cast %139 : vector<1x448x10xbf16> to vector<448x10xbf16>
    %cst_102 = arith.constant dense<0.000000e+00> : vector<1x10xf32>
    %141 = tpu.matmul %138, %140, %cst_102 {dimension_numbers = #tpu.dot_dimension_numbers<[1], [0], [0], [1], [0, 0, 1, 1], [], []>} : vector<1x448xbf16>, vector<448x10xbf16>, vector<1x10xf32> -> vector<1x10xf32>
    %142 = arith.addf %137, %141 : vector<1x10xf32>
    %c2_103 = arith.constant 2 : index
    %c0_104 = arith.constant 0 : index
    %143 = vector.load %arg12[%c2_103, %c0_104] : memref<8x448xbf16, #tpu.memory_space<vmem>>, vector<1x448xbf16>
    %c2_105 = arith.constant 2 : index
    %c0_106 = arith.constant 0 : index
    %c0_107 = arith.constant 0 : index
    %144 = vector.load %arg6[%c2_105, %c0_106, %c0_107] : memref<7x448x10xbf16, #tpu.memory_space<vmem>>, vector<1x448x10xbf16>
    %145 = vector.shape_cast %144 : vector<1x448x10xbf16> to vector<448x10xbf16>
    %cst_108 = arith.constant dense<0.000000e+00> : vector<1x10xf32>
    %146 = tpu.matmul %143, %145, %cst_108 {dimension_numbers = #tpu.dot_dimension_numbers<[1], [0], [0], [1], [0, 0, 1, 1], [], []>} : vector<1x448xbf16>, vector<448x10xbf16>, vector<1x10xf32> -> vector<1x10xf32>
    %147 = arith.addf %142, %146 : vector<1x10xf32>
    %c3_109 = arith.constant 3 : index
    %c0_110 = arith.constant 0 : index
    %148 = vector.load %arg12[%c3_109, %c0_110] : memref<8x448xbf16, #tpu.memory_space<vmem>>, vector<1x448xbf16>
    %c3_111 = arith.constant 3 : index
    %c0_112 = arith.constant 0 : index
    %c0_113 = arith.constant 0 : index
    %149 = vector.load %arg6[%c3_111, %c0_112, %c0_113] : memref<7x448x10xbf16, #tpu.memory_space<vmem>>, vector<1x448x10xbf16>
    %150 = vector.shape_cast %149 : vector<1x448x10xbf16> to vector<448x10xbf16>
    %cst_114 = arith.constant dense<0.000000e+00> : vector<1x10xf32>
    %151 = tpu.matmul %148, %150, %cst_114 {dimension_numbers = #tpu.dot_dimension_numbers<[1], [0], [0], [1], [0, 0, 1, 1], [], []>} : vector<1x448xbf16>, vector<448x10xbf16>, vector<1x10xf32> -> vector<1x10xf32>
    %152 = arith.addf %147, %151 : vector<1x10xf32>
    %c4_115 = arith.constant 4 : index
    %c0_116 = arith.constant 0 : index
    %153 = vector.load %arg12[%c4_115, %c0_116] : memref<8x448xbf16, #tpu.memory_space<vmem>>, vector<1x448xbf16>
    %c4_117 = arith.constant 4 : index
    %c0_118 = arith.constant 0 : index
    %c0_119 = arith.constant 0 : index
    %154 = vector.load %arg6[%c4_117, %c0_118, %c0_119] : memref<7x448x10xbf16, #tpu.memory_space<vmem>>, vector<1x448x10xbf16>
    %155 = vector.shape_cast %154 : vector<1x448x10xbf16> to vector<448x10xbf16>
    %cst_120 = arith.constant dense<0.000000e+00> : vector<1x10xf32>
    %156 = tpu.matmul %153, %155, %cst_120 {dimension_numbers = #tpu.dot_dimension_numbers<[1], [0], [0], [1], [0, 0, 1, 1], [], []>} : vector<1x448xbf16>, vector<448x10xbf16>, vector<1x10xf32> -> vector<1x10xf32>
    %157 = arith.addf %152, %156 : vector<1x10xf32>
    %c5_121 = arith.constant 5 : index
    %c0_122 = arith.constant 0 : index
    %158 = vector.load %arg12[%c5_121, %c0_122] : memref<8x448xbf16, #tpu.memory_space<vmem>>, vector<1x448xbf16>
    %c5_123 = arith.constant 5 : index
    %c0_124 = arith.constant 0 : index
    %c0_125 = arith.constant 0 : index
    %159 = vector.load %arg6[%c5_123, %c0_124, %c0_125] : memref<7x448x10xbf16, #tpu.memory_space<vmem>>, vector<1x448x10xbf16>
    %160 = vector.shape_cast %159 : vector<1x448x10xbf16> to vector<448x10xbf16>
    %cst_126 = arith.constant dense<0.000000e+00> : vector<1x10xf32>
    %161 = tpu.matmul %158, %160, %cst_126 {dimension_numbers = #tpu.dot_dimension_numbers<[1], [0], [0], [1], [0, 0, 1, 1], [], []>} : vector<1x448xbf16>, vector<448x10xbf16>, vector<1x10xf32> -> vector<1x10xf32>
    %162 = arith.addf %157, %161 : vector<1x10xf32>
    %c6_127 = arith.constant 6 : index
    %c0_128 = arith.constant 0 : index
    %163 = vector.load %arg12[%c6_127, %c0_128] : memref<8x448xbf16, #tpu.memory_space<vmem>>, vector<1x448xbf16>
    %c6_129 = arith.constant 6 : index
    %c0_130 = arith.constant 0 : index
    %c0_131 = arith.constant 0 : index
    %164 = vector.load %arg6[%c6_129, %c0_130, %c0_131] : memref<7x448x10xbf16, #tpu.memory_space<vmem>>, vector<1x448x10xbf16>
    %165 = vector.shape_cast %164 : vector<1x448x10xbf16> to vector<448x10xbf16>
    %cst_132 = arith.constant dense<0.000000e+00> : vector<1x10xf32>
    %166 = tpu.matmul %163, %165, %cst_132 {dimension_numbers = #tpu.dot_dimension_numbers<[1], [0], [0], [1], [0, 0, 1, 1], [], []>} : vector<1x448xbf16>, vector<448x10xbf16>, vector<1x10xf32> -> vector<1x10xf32>
    %167 = arith.addf %162, %166 : vector<1x10xf32>
    %c0_133 = arith.constant 0 : index
    %c0_134 = arith.constant 0 : index
    %168 = vector.load %arg7[%c0_133, %c0_134] : memref<1x10xf32, #tpu.memory_space<vmem>>, vector<1x10xf32>
    %169 = arith.addf %167, %168 : vector<1x10xf32>
    %c0_135 = arith.constant 0 : index
    %c0_136 = arith.constant 0 : index
    %c0_137 = arith.constant 0 : index
    %170 = vector.load %arg8[%c0_135, %c0_136, %c0_137] : memref<1x1x10xf32, #tpu.memory_space<vmem>>, vector<1x1x10xf32>
    %171 = vector.shape_cast %170 : vector<1x1x10xf32> to vector<1x10xf32>
    %172 = vector.shape_cast %169 : vector<1x10xf32> to vector<1x1x10xf32>
    tpu.vector_store %arg8[%c0_135, %c0_136, %c0_137], %172 {strides = array<i32>} : memref<1x1x10xf32, #tpu.memory_space<vmem>>, vector<1x1x10xf32>,
    return
  }
  func.func @transform_0(%arg0: i32) -> (i32, i32, i32) {
    %c0_i32 = arith.constant 0 : i32
    %c0_i32_0 = arith.constant 0 : i32
    %c0_i32_1 = arith.constant 0 : i32
    return %arg0, %c0_i32, %c0_i32_0 : i32, i32, i32
  }
  func.func @transform_1(%arg0: i32) -> (i32, i32) {
    %c0_i32 = arith.constant 0 : i32
    %c0_i32_0 = arith.constant 0 : i32
    %c0_i32_1 = arith.constant 0 : i32
    return %c0_i32, %c0_i32_0 : i32, i32
  }
  func.func @transform_2(%arg0: i32) -> (i32, i32) {
    %c0_i32 = arith.constant 0 : i32
    %c0_i32_0 = arith.constant 0 : i32
    %c0_i32_1 = arith.constant 0 : i32
    return %c0_i32, %c0_i32_0 : i32, i32
  }
  func.func @transform_3(%arg0: i32) -> (i32, i32, i32) {
    %c0_i32 = arith.constant 0 : i32
    %c0_i32_0 = arith.constant 0 : i32
    %c0_i32_1 = arith.constant 0 : i32
    %c0_i32_2 = arith.constant 0 : i32
    return %c0_i32, %c0_i32_0, %c0_i32_1 : i32, i32, i32
  }
  func.func @transform_4(%arg0: i32) -> (i32, i32) {
    %c0_i32 = arith.constant 0 : i32
    %c0_i32_0 = arith.constant 0 : i32
    %c0_i32_1 = arith.constant 0 : i32
    return %c0_i32, %c0_i32_0 : i32, i32
  }
  func.func @transform_5(%arg0: i32) -> (i32, i32, i32) {
    %c0_i32 = arith.constant 0 : i32
    %c0_i32_0 = arith.constant 0 : i32
    %c0_i32_1 = arith.constant 0 : i32
    %c0_i32_2 = arith.constant 0 : i32
    return %c0_i32, %c0_i32_0, %c0_i32_1 : i32, i32, i32
  }
  func.func @transform_6(%arg0: i32) -> (i32, i32) {
    %c0_i32 = arith.constant 0 : i32
    %c0_i32_0 = arith.constant 0 : i32
    %c0_i32_1 = arith.constant 0 : i32
    return %c0_i32, %c0_i32_0 : i32, i32
  }
  func.func @transform_7(%arg0: i32) -> (i32, i32, i32) {
    %c0_i32 = arith.constant 0 : i32
    %c0_i32_0 = arith.constant 0 : i32
    %c0_i32_1 = arith.constant 0 : i32
    return %arg0, %c0_i32, %c0_i32_0 : i32, i32, i32
  }
}

</mosaic_0001>

<llo_original>
// kernel: cnn_forward.1
$region0: #{cnn_forward.1}
  #allocation0 [shape = 'u32[]', space=smem, size = 0x4, offset = 0x4, fixed_abs, tag = 'smem constant byte address 0x4 - core index']
  #allocation1 [shape = 'u32[72,128]{1,0:T(1,128)}', space=vmem, size = 0x9000, scoped, tag = 'internal scratch']
  #allocation2 [shape = 'f32[448,32]{1,0:T(8,128)}', space=vmem, size = 0x38000, scoped, tag = 'scratch operand']
  #allocation3 [shape = 'f32[17,16,32]{2,1,0:T(8,128)}', space=vmem, size = 0x22000, scoped, tag = 'scratch operand']
  #allocation4 [shape = 'f32[112,64]{1,0:T(8,128)}', space=vmem, size = 0xe000, scoped, tag = 'scratch operand']
  #allocation5 [shape = 'bf16[8,448]{1,0:T(8,128)(2,1)}', space=vmem, size = 0x2000, scoped, tag = 'scratch operand']
  %s0 = inlined_call_operand.vmem [shape: bf16[2,896,9], index: 0, kind: input, shape index: {}]
  %s1 = inlined_call_operand.vmem [shape: bf16[9,32], index: 1, kind: input, shape index: {}]
  %s2 = inlined_call_operand.vmem [shape: f32[1,32], index: 2, kind: input, shape index: {}]
  %s3 = inlined_call_operand.vmem [shape: bf16[9,32,64], index: 3, kind: input, shape index: {}]
  %s4 = inlined_call_operand.vmem [shape: f32[1,64], index: 4, kind: input, shape index: {}]
  %s5 = inlined_call_operand.vmem [shape: bf16[7,448,10], index: 5, kind: input, shape index: {}]
  %s6 = inlined_call_operand.vmem [shape: f32[1,10], index: 6, kind: input, shape index: {}]
  %s7 = inlined_call_operand.hbm [shape: f32[2,1,10], index: 7, kind: output, shape index: {}]
  %s8 = sld [smem:[#allocation0]]
  $region61: #{cnn_forward.1} parent=0
    _
  %s10 = ssub.s32 1, %s8
  %s11 = scalar_select 0, %s10, %s8
  $region1: #{cnn_forward.1} parent=0
    #allocation6 [shape = 'u8[1024]{0}', space=vmem, size = 0x400, scoped, tag = 'output window, operand 0']
    #allocation7 [shape = 's32[2]{0}', space=sflag, size = 0x8, scoped, tag = 'scoped memory for cnn_forward.1']
    %12 = vsyncpa [#allocation7], 0
    %s13 = scalar_lea.sflag [#allocation7], 1
    %14 = vsyncpa %s13, 0
    loop: start=0, step=1, limit=4
    $region2: #{cnn_forward.1} parent=1 // loop_pre_header
      _
    $region3: #{cnn_forward.1} parent=1 // loop_header
      %s16 = sphi 0, %s20
      %p17 = scmp.ge.s32.totalorder %s16, 4
      %s26 = sphi 0, %s28
      %s29 = sphi 0, %s26
      %s30 = sphi 0, %s29
      %s46 = sphi 0, %s30
      %s50 = sphi 0, %s50
      %s52 = sphi 0, %s50
      %s53 = sphi 0, %s52
      %s67 = sphi 0, %s53
      %s71 = sphi 0, %s71
      %s73 = sphi 0, %s71
      %s74 = sphi 0, %s73
      %s88 = sphi 0, %s74
      %s92 = sphi 0, %s92
      %s94 = sphi 0, %s92
      %s95 = sphi 0, %s94
      %s109 = sphi 0, %s95
      %s113 = sphi 0, %s113
      %s115 = sphi 0, %s113
      %s116 = sphi 0, %s115
      %s130 = sphi 0, %s116
      %s134 = sphi 0, %s134
      %s136 = sphi 0, %s134
      %s137 = sphi 0, %s136
      %s151 = sphi 0, %s137
      %s155 = sphi 0, %s155
      %s157 = sphi 0, %s155
      %s158 = sphi 0, %s157
      %s172 = sphi 0, %s158
      %s178 = sphi 0, %s180
      %s181 = sphi 0, %s178
      %s182 = sphi 0, %s181
      %s198 = sphi 0, %s182
    $region4: #{cnn_forward.1} parent=1 // loop_header_branch
      %19 = sbr.rel (%p17) target = $region8
    $region5: #{cnn_forward.1} parent=1 // loop_body
      %s21 = ssub.s32 %s16, 1
      %s22 = ssub.s32 %s16, 2
      %s23 = sadd.s32 %s16, 1
      %s24 = ssub.s32 %s16, %s23
      %p25 = scmp.eq.s32.totalorder %s24, 0
      %s27 = sadd.s32 %s26, 1
      %s28 = scalar_select %p25, %s26, %s27
      %p31 = pneg %p25
      %p32 = scmp.eq.s32.totalorder %s16, 1
      %p33 = por %p31, %p32
      %p34 = scmp.ne.s32.totalorder %s26, %s29
      %p35 = scmp.eq.s32.totalorder %s16, 0
      %p36 = por %p34, %p35
      %p37 = scmp.ne.s32.totalorder %s26, %s29
      %p38 = scmp.eq.s32.totalorder %s21, 1
      %p39 = por %p37, %p38
      %p40 = scmp.ne.s32.totalorder %s29, %s30
      %p41 = scmp.eq.s32.totalorder %s21, 0
      %p42 = por %p40, %p41
      %p43 = scmp.ne.s32.totalorder %s29, %s30
      %p44 = scmp.eq.s32.totalorder %s22, 1
      %p45 = por %p43, %p44
      %p47 = scmp.ne.s32.totalorder %s30, %s46
      %p48 = scmp.eq.s32.totalorder %s22, 0
      %p49 = por %p47, %p48
      %s51 = sadd.s32 %s50, 1
      %p54 = scmp.eq.s32.totalorder %s16, 1
      %p55 = scmp.ne.s32.totalorder %s50, %s52
      %p56 = scmp.eq.s32.totalorder %s16, 0
      %p57 = por %p55, %p56
      %p58 = scmp.ne.s32.totalorder %s50, %s52
      %p59 = scmp.eq.s32.totalorder %s21, 1
      %p60 = por %p58, %p59
      %p61 = scmp.ne.s32.totalorder %s52, %s53
      %p62 = scmp.eq.s32.totalorder %s21, 0
      %p63 = por %p61, %p62
      %p64 = scmp.ne.s32.totalorder %s52, %s53
      %p65 = scmp.eq.s32.totalorder %s22, 1
      %p66 = por %p64, %p65
      %p68 = scmp.ne.s32.totalorder %s53, %s67
      %p69 = scmp.eq.s32.totalorder %s22, 0
      %p70 = por %p68, %p69
      %s72 = sadd.s32 %s71, 1
      %p75 = scmp.eq.s32.totalorder %s16, 1
      %p76 = scmp.ne.s32.totalorder %s71, %s73
      %p77 = scmp.eq.s32.totalorder %s16, 0
      %p78 = por %p76, %p77
      %p79 = scmp.ne.s32.totalorder %s71, %s73
      %p80 = scmp.eq.s32.totalorder %s21, 1
      %p81 = por %p79, %p80
      %p82 = scmp.ne.s32.totalorder %s73, %s74
      %p83 = scmp.eq.s32.totalorder %s21, 0
      %p84 = por %p82, %p83
      %p85 = scmp.ne.s32.totalorder %s73, %s74
      %p86 = scmp.eq.s32.totalorder %s22, 1
      %p87 = por %p85, %p86
      %p89 = scmp.ne.s32.totalorder %s74, %s88
      %p90 = scmp.eq.s32.totalorder %s22, 0
      %p91 = por %p89, %p90
      %s93 = sadd.s32 %s92, 1
      %p96 = scmp.eq.s32.totalorder %s16, 1
      %p97 = scmp.ne.s32.totalorder %s92, %s94
      %p98 = scmp.eq.s32.totalorder %s16, 0
      %p99 = por %p97, %p98
      %p100 = scmp.ne.s32.totalorder %s92, %s94
      %p101 = scmp.eq.s32.totalorder %s21, 1
      %p102 = por %p100, %p101
      %p103 = scmp.ne.s32.totalorder %s94, %s95
      %p104 = scmp.eq.s32.totalorder %s21, 0
      %p105 = por %p103, %p104
      %p106 = scmp.ne.s32.totalorder %s94, %s95
      %p107 = scmp.eq.s32.totalorder %s22, 1
      %p108 = por %p106, %p107
      %p110 = scmp.ne.s32.totalorder %s95, %s109
      %p111 = scmp.eq.s32.totalorder %s22, 0
      %p112 = por %p110, %p111
      %s114 = sadd.s32 %s113, 1
      %p117 = scmp.eq.s32.totalorder %s16, 1
      %p118 = scmp.ne.s32.totalorder %s113, %s115
      %p119 = scmp.eq.s32.totalorder %s16, 0
      %p120 = por %p118, %p119
      %p121 = scmp.ne.s32.totalorder %s113, %s115
      %p122 = scmp.eq.s32.totalorder %s21, 1
      %p123 = por %p121, %p122
      %p124 = scmp.ne.s32.totalorder %s115, %s116
      %p125 = scmp.eq.s32.totalorder %s21, 0
      %p126 = por %p124, %p125
      %p127 = scmp.ne.s32.totalorder %s115, %s116
      %p128 = scmp.eq.s32.totalorder %s22, 1
      %p129 = por %p127, %p128
      %p131 = scmp.ne.s32.totalorder %s116, %s130
      %p132 = scmp.eq.s32.totalorder %s22, 0
      %p133 = por %p131, %p132
      %s135 = sadd.s32 %s134, 1
      %p138 = scmp.eq.s32.totalorder %s16, 1
      %p139 = scmp.ne.s32.totalorder %s134, %s136
      %p140 = scmp.eq.s32.totalorder %s16, 0
      %p141 = por %p139, %p140
      %p142 = scmp.ne.s32.totalorder %s134, %s136
      %p143 = scmp.eq.s32.totalorder %s21, 1
      %p144 = por %p142, %p143
      %p145 = scmp.ne.s32.totalorder %s136, %s137
      %p146 = scmp.eq.s32.totalorder %s21, 0
      %p147 = por %p145, %p146
      %p148 = scmp.ne.s32.totalorder %s136, %s137
      %p149 = scmp.eq.s32.totalorder %s22, 1
      %p150 = por %p148, %p149
      %p152 = scmp.ne.s32.totalorder %s137, %s151
      %p153 = scmp.eq.s32.totalorder %s22, 0
      %p154 = por %p152, %p153
      %s156 = sadd.s32 %s155, 1
      %p159 = scmp.eq.s32.totalorder %s16, 1
      %p160 = scmp.ne.s32.totalorder %s155, %s157
      %p161 = scmp.eq.s32.totalorder %s16, 0
      %p162 = por %p160, %p161
      %p163 = scmp.ne.s32.totalorder %s155, %s157
      %p164 = scmp.eq.s32.totalorder %s21, 1
      %p165 = por %p163, %p164
      %p166 = scmp.ne.s32.totalorder %s157, %s158
      %p167 = scmp.eq.s32.totalorder %s21, 0
      %p168 = por %p166, %p167
      %p169 = scmp.ne.s32.totalorder %s157, %s158
      %p170 = scmp.eq.s32.totalorder %s22, 1
      %p171 = por %p169, %p170
      %p173 = scmp.ne.s32.totalorder %s158, %s172
      %p174 = scmp.eq.s32.totalorder %s22, 0
      %p175 = por %p173, %p174
      %s176 = ssub.s32 %s16, %s23
      %p177 = scmp.eq.s32.totalorder %s176, 0
      %s179 = sadd.s32 %s178, 1
      %s180 = scalar_select %p177, %s178, %s179
      %p183 = pneg %p177
      %p184 = scmp.eq.s32.totalorder %s16, 1
      %p185 = por %p183, %p184
      %p186 = scmp.ne.s32.totalorder %s178, %s181
      %p187 = scmp.eq.s32.totalorder %s16, 0
      %p188 = por %p186, %p187
      %p189 = scmp.ne.s32.totalorder %s178, %s181
      %p190 = scmp.eq.s32.totalorder %s21, 1
      %p191 = por %p189, %p190
      %p192 = scmp.ne.s32.totalorder %s181, %s182
      %p193 = scmp.eq.s32.totalorder %s21, 0
      %p194 = por %p192, %p193
      %p195 = scmp.ne.s32.totalorder %s181, %s182
      %p196 = scmp.eq.s32.totalorder %s22, 1
      %p197 = por %p195, %p196
      %p199 = scmp.ne.s32.totalorder %s182, %s198
      %p200 = scmp.eq.s32.totalorder %s22, 0
      %p201 = por %p199, %p200
      %p202 = scmp.le.s32.totalorder 1, %s16
      %p203 = scmp.lt.s32.totalorder %s16, 3
      %p204 = pnand %p202, %p203
      %p205 = pneg %p204
      // Predicated region
      $region9: #{cnn_forward.1} parent=5 // pred_check
        _
      $region10: #{cnn_forward.1} parent=5 // pred_check_branch
        %207 = sbr.rel (%p204) target = $region12
      $region11: #{cnn_forward.1} parent=5 // pred_region
        %s208 = ssub.s32 %s16, 1
        // Predicated region
        $region13: #{cnn_forward.1} parent=11 // pred_check
          %p209 = pneg %p63
        $region14: #{cnn_forward.1} parent=11 // pred_check_branch
          %211 = sbr.rel (%p209) target = $region16
        $region15: #{cnn_forward.1} parent=11 // pred_region
          _
        $region16: #{cnn_forward.1} parent=11 // pred_fallthru
          _
        // Predicated region
        $region17: #{cnn_forward.1} parent=11 // pred_check
          %p212 = pneg %p84
        $region18: #{cnn_forward.1} parent=11 // pred_check_branch
          %214 = sbr.rel (%p212) target = $region20
        $region19: #{cnn_forward.1} parent=11 // pred_region
          _
        $region20: #{cnn_forward.1} parent=11 // pred_fallthru
          _
        // Predicated region
        $region21: #{cnn_forward.1} parent=11 // pred_check
          %p215 = pneg %p105
        $region22: #{cnn_forward.1} parent=11 // pred_check_branch
          %217 = sbr.rel (%p215) target = $region24
        $region23: #{cnn_forward.1} parent=11 // pred_region
          _
        $region24: #{cnn_forward.1} parent=11 // pred_fallthru
          _
        // Predicated region
        $region25: #{cnn_forward.1} parent=11 // pred_check
          %p218 = pneg %p126
        $region26: #{cnn_forward.1} parent=11 // pred_check_branch
          %220 = sbr.rel (%p218) target = $region28
        $region27: #{cnn_forward.1} parent=11 // pred_region
          _
        $region28: #{cnn_forward.1} parent=11 // pred_fallthru
          _
        // Predicated region
        $region29: #{cnn_forward.1} parent=11 // pred_check
          %p221 = pneg %p147
        $region30: #{cnn_forward.1} parent=11 // pred_check_branch
          %223 = sbr.rel (%p221) target = $region32
        $region31: #{cnn_forward.1} parent=11 // pred_region
          _
        $region32: #{cnn_forward.1} parent=11 // pred_fallthru
          _
        // Predicated region
        $region33: #{cnn_forward.1} parent=11 // pred_check
          %p224 = pneg %p168
        $region34: #{cnn_forward.1} parent=11 // pred_check_branch
          %226 = sbr.rel (%p224) target = $region36
        $region35: #{cnn_forward.1} parent=11 // pred_region
          _
        $region36: #{cnn_forward.1} parent=11 // pred_fallthru
          _
      $region12: #{cnn_forward.1} parent=5 // pred_fallthru
        _
      %p227 = scmp.lt.s32.totalorder %s16, 2
      // Predicated region
      $region37: #{cnn_forward.1} parent=5 // pred_check
        %p228 = pneg %p227
      $region38: #{cnn_forward.1} parent=5 // pred_check_branch
        %230 = sbr.rel (%p228) target = $region40
      $region39: #{cnn_forward.1} parent=5 // pred_region
        // Predicated region
        $region41: #{cnn_forward.1} parent=39 // pred_check
          %p231 = pneg %p36
        $region42: #{cnn_forward.1} parent=39 // pred_check_branch
          %233 = sbr.rel (%p231) target = $region44
        $region43: #{cnn_forward.1} parent=39 // pred_region
          %p234 = scmp.lt.s32.totalorder %s16, 1
          %s235 = scalar_select %p234, %s16, 1
          %s236 = smul.addr %s235, 112
          %s237 = smul.addr %s236, 4
          %s238 = scalar_lea.vmem %s0, %s237
        $region44: #{cnn_forward.1} parent=39 // pred_fallthru
          _
      $region40: #{cnn_forward.1} parent=5 // pred_fallthru
        _
      %p239 = scmp.le.s32.totalorder 1, %s16
      %p240 = scmp.lt.s32.totalorder %s16, 3
      %p241 = pnand %p239, %p240
      %p242 = pneg %p241
      // Predicated region
      $region45: #{cnn_forward.1} parent=5 // pred_check
        _
      $region46: #{cnn_forward.1} parent=5 // pred_check_branch
        %244 = sbr.rel (%p241) target = $region48
      $region47: #{cnn_forward.1} parent=5 // pred_region
        %s245 = ssub.s32 %s16, 1
        %p246 = scmp.lt.s32.totalorder %s21, 1
        %s247 = scalar_select %p246, %s21, 1
        %s248 = smul.addr %s247, 112
        %s249 = smul.addr %s248, 4
        %s250 = scalar_lea.vmem %s0, %s249
        %p251 = pneg %p42
        %p252 = pneg %p39
        %p253 = pneg %p63
        %p254 = pneg %p60
        %p255 = pneg %p84
        %p256 = pneg %p81
        %p257 = pneg %p105
        %p258 = pneg %p102
        %p259 = pneg %p126
        %p260 = pneg %p123
        %p261 = pneg %p147
        %p262 = pneg %p144
        %p263 = pneg %p168
        %p264 = pneg %p165
        %p265 = pneg %p194
        %p266 = pneg %p191
        %s267 = sand.u32 %s181, 1
        %s268 = scalar_lea.sflag [#allocation7], %s267
        %s269 = sand.u32 %s181, 1
        %s270 = scalar_lea.vmem [#allocation6], %s269
        %p271 = scmp.lt.s32.totalorder %s21, 1
        %s272 = scalar_select %p271, %s21, 1
        %s273 = smul.addr %s272, 112
        %s274 = smul.addr %s273, 4
        %s275 = scalar_lea.vmem %s0, %s274
        %v277 = vld [vmem:[%s275] sm:$0xf]
        %v278 = vld [vmem:[%s275 + $0x4] sm:$0xf]
        %v279 = vld [vmem:[%s275 + $0x8] sm:$0xf]
        %v280 = vld [vmem:[%s275 + $0xc] sm:$0xf]
        %v281 = vld [vmem:[%s275 + $0x10] sm:$0xf]
        %v282 = vld [vmem:[%s275 + $0x14] sm:$0xf]
        %v283 = vld [vmem:[%s275 + $0x18] sm:$0xf]
        %v284 = vld [vmem:[%s275 + $0x1c] sm:$0xf]
        %v285 = vld [vmem:[%s275 + $0x20] sm:$0xf]
        %v286 = vld [vmem:[%s275 + $0x24] sm:$0xf]
        %v287 = vld [vmem:[%s275 + $0x28] sm:$0xf]
        %v288 = vld [vmem:[%s275 + $0x2c] sm:$0xf]
        %v289 = vld [vmem:[%s275 + $0x30] sm:$0xf]
        %v290 = vld [vmem:[%s275 + $0x34] sm:$0xf]
        %v291 = vld [vmem:[%s275 + $0x38] sm:$0xf]
        %v292 = vld [vmem:[%s275 + $0x3c] sm:$0xf]
        %v293 = vld [vmem:[%s275 + $0x40] sm:$0xf]
        %v294 = vld [vmem:[%s275 + $0x44] sm:$0xf]
        %v295 = vld [vmem:[%s275 + $0x48] sm:$0xf]
        %v296 = vld [vmem:[%s275 + $0x4c] sm:$0xf]
        %v297 = vld [vmem:[%s275 + $0x50] sm:$0xf]
        %v298 = vld [vmem:[%s275 + $0x54] sm:$0xf]
        %v299 = vld [vmem:[%s275 + $0x58] sm:$0xf]
        %v300 = vld [vmem:[%s275 + $0x5c] sm:$0xf]
        %v301 = vld [vmem:[%s275 + $0x60] sm:$0xf]
        %v302 = vld [vmem:[%s275 + $0x64] sm:$0xf]
        %v303 = vld [vmem:[%s275 + $0x68] sm:$0xf]
        %v304 = vld [vmem:[%s275 + $0x6c] sm:$0xf]
        %v305 = vld [vmem:[%s275 + $0x70] sm:$0xf]
        %v306 = vld [vmem:[%s275 + $0x74] sm:$0xf]
        %v307 = vld [vmem:[%s275 + $0x78] sm:$0xf]
        %v308 = vld [vmem:[%s275 + $0x7c] sm:$0xf]
        %v309 = vld [vmem:[%s275 + $0x80] sm:$0xf]
        %v310 = vld [vmem:[%s275 + $0x84] sm:$0xf]
        %v311 = vld [vmem:[%s275 + $0x88] sm:$0xf]
        %v312 = vld [vmem:[%s275 + $0x8c] sm:$0xf]
        %v313 = vld [vmem:[%s275 + $0x90] sm:$0xf]
        %v314 = vld [vmem:[%s275 + $0x94] sm:$0xf]
        %v315 = vld [vmem:[%s275 + $0x98] sm:$0xf]
        %v316 = vld [vmem:[%s275 + $0x9c] sm:$0xf]
        %v317 = vld [vmem:[%s275 + $0xa0] sm:$0xf]
        %v318 = vld [vmem:[%s275 + $0xa4] sm:$0xf]
        %v319 = vld [vmem:[%s275 + $0xa8] sm:$0xf]
        %v320 = vld [vmem:[%s275 + $0xac] sm:$0xf]
        %v321 = vld [vmem:[%s275 + $0xb0] sm:$0xf]
        %v322 = vld [vmem:[%s275 + $0xb4] sm:$0xf]
        %v323 = vld [vmem:[%s275 + $0xb8] sm:$0xf]
        %v324 = vld [vmem:[%s275 + $0xbc] sm:$0xf]
        %v325 = vld [vmem:[%s275 + $0xc0] sm:$0xf]
        %v326 = vld [vmem:[%s275 + $0xc4] sm:$0xf]
        %v327 = vld [vmem:[%s275 + $0xc8] sm:$0xf]
        %v328 = vld [vmem:[%s275 + $0xcc] sm:$0xf]
        %v329 = vld [vmem:[%s275 + $0xd0] sm:$0xf]
        %v330 = vld [vmem:[%s275 + $0xd4] sm:$0xf]
        %v331 = vld [vmem:[%s275 + $0xd8] sm:$0xf]
        %v332 = vld [vmem:[%s275 + $0xdc] sm:$0xf]
        %v333 = vld [vmem:[%s275 + $0xe0] sm:$0xf]
        %v334 = vld [vmem:[%s275 + $0xe4] sm:$0xf]
        %v335 = vld [vmem:[%s275 + $0xe8] sm:$0xf]
        %v336 = vld [vmem:[%s275 + $0xec] sm:$0xf]
        %v337 = vld [vmem:[%s275 + $0xf0] sm:$0xf]
        %v338 = vld [vmem:[%s275 + $0xf4] sm:$0xf]
        %v339 = vld [vmem:[%s275 + $0xf8] sm:$0xf]
        %v340 = vld [vmem:[%s275 + $0xfc] sm:$0xf]
        %v341 = vld [vmem:[%s275 + $0x100] sm:$0xf]
        %v342 = vld [vmem:[%s275 + $0x104] sm:$0xf]
        %v343 = vld [vmem:[%s275 + $0x108] sm:$0xf]
        %v344 = vld [vmem:[%s275 + $0x10c] sm:$0xf]
        %v345 = vld [vmem:[%s275 + $0x110] sm:$0xf]
        %v346 = vld [vmem:[%s275 + $0x114] sm:$0xf]
        %v347 = vld [vmem:[%s275 + $0x118] sm:$0xf]
        %v348 = vld [vmem:[%s275 + $0x11c] sm:$0xf]
        %v349 = vld [vmem:[%s275 + $0x120] sm:$0xf]
        %v350 = vld [vmem:[%s275 + $0x124] sm:$0xf]
        %v351 = vld [vmem:[%s275 + $0x128] sm:$0xf]
        %v352 = vld [vmem:[%s275 + $0x12c] sm:$0xf]
        %v353 = vld [vmem:[%s275 + $0x130] sm:$0xf]
        %v354 = vld [vmem:[%s275 + $0x134] sm:$0xf]
        %v355 = vld [vmem:[%s275 + $0x138] sm:$0xf]
        %v356 = vld [vmem:[%s275 + $0x13c] sm:$0xf]
        %v357 = vld [vmem:[%s275 + $0x140] sm:$0xf]
        %v358 = vld [vmem:[%s275 + $0x144] sm:$0xf]
        %v359 = vld [vmem:[%s275 + $0x148] sm:$0xf]
        %v360 = vld [vmem:[%s275 + $0x14c] sm:$0xf]
        %v361 = vld [vmem:[%s275 + $0x150] sm:$0xf]
        %v362 = vld [vmem:[%s275 + $0x154] sm:$0xf]
        %v363 = vld [vmem:[%s275 + $0x158] sm:$0xf]
        %v364 = vld [vmem:[%s275 + $0x15c] sm:$0xf]
        %v365 = vld [vmem:[%s275 + $0x160] sm:$0xf]
        %v366 = vld [vmem:[%s275 + $0x164] sm:$0xf]
        %v367 = vld [vmem:[%s275 + $0x168] sm:$0xf]
        %v368 = vld [vmem:[%s275 + $0x16c] sm:$0xf]
        %v369 = vld [vmem:[%s275 + $0x170] sm:$0xf]
        %v370 = vld [vmem:[%s275 + $0x174] sm:$0xf]
        %v371 = vld [vmem:[%s275 + $0x178] sm:$0xf]
        %v372 = vld [vmem:[%s275 + $0x17c] sm:$0xf]
        %v373 = vld [vmem:[%s275 + $0x180] sm:$0xf]
        %v374 = vld [vmem:[%s275 + $0x184] sm:$0xf]
        %v375 = vld [vmem:[%s275 + $0x188] sm:$0xf]
        %v376 = vld [vmem:[%s275 + $0x18c] sm:$0xf]
        %v377 = vld [vmem:[%s275 + $0x190] sm:$0xf]
        %v378 = vld [vmem:[%s275 + $0x194] sm:$0xf]
        %v379 = vld [vmem:[%s275 + $0x198] sm:$0xf]
        %v380 = vld [vmem:[%s275 + $0x19c] sm:$0xf]
        %v381 = vld [vmem:[%s275 + $0x1a0] sm:$0xf]
        %v382 = vld [vmem:[%s275 + $0x1a4] sm:$0xf]
        %v383 = vld [vmem:[%s275 + $0x1a8] sm:$0xf]
        %v384 = vld [vmem:[%s275 + $0x1ac] sm:$0xf]
        %v385 = vld [vmem:[%s275 + $0x1b0] sm:$0xf]
        %v386 = vld [vmem:[%s275 + $0x1b4] sm:$0xf]
        %v387 = vld [vmem:[%s275 + $0x1b8] sm:$0xf]
        %v388 = vld [vmem:[%s275 + $0x1bc] sm:$0xf]
        %v389 = vld [vmem:[%s1] sm:$0xf]
        %v390 = vld [vmem:[%s1 + $0x4] sm:$0x1]
        %v391 = vld [vmem:[%s2] sm:$0x1]
        %v393 = vperm.slane %v391, 0
        %v507 = vunpack.c.l.b16 %v277
        %v508 = vunpack.c.l.b16 %v278
        %v509 = vunpack.c.l.b16 %v279
        %v510 = vunpack.c.l.b16 %v280
        %v511 = vunpack.c.l.b16 %v281
        %v512 = vunpack.c.l.b16 %v282
        %v513 = vunpack.c.l.b16 %v283
        %v514 = vunpack.c.l.b16 %v284
        %v515 = vunpack.c.l.b16 %v285
        %v516 = vunpack.c.l.b16 %v286
        %v517 = vunpack.c.l.b16 %v287
        %v518 = vunpack.c.l.b16 %v288
        %v519 = vunpack.c.l.b16 %v289
        %v520 = vunpack.c.l.b16 %v290
        %v521 = vunpack.c.l.b16 %v291
        %v522 = vunpack.c.l.b16 %v292
        %v523 = vunpack.c.l.b16 %v293
        %v524 = vunpack.c.l.b16 %v294
        %v525 = vunpack.c.l.b16 %v295
        %v526 = vunpack.c.l.b16 %v296
        %v527 = vunpack.c.l.b16 %v297
        %v528 = vunpack.c.l.b16 %v298
        %v529 = vunpack.c.l.b16 %v299
        %v530 = vunpack.c.l.b16 %v300
        %v531 = vunpack.c.l.b16 %v301
        %v532 = vunpack.c.l.b16 %v302
        %v533 = vunpack.c.l.b16 %v303
        %v534 = vunpack.c.l.b16 %v304
        %v535 = vunpack.c.l.b16 %v305
        %v536 = vunpack.c.l.b16 %v306
        %v537 = vunpack.c.l.b16 %v307
        %v538 = vunpack.c.l.b16 %v308
        %v539 = vunpack.c.l.b16 %v309
        %v540 = vunpack.c.l.b16 %v310
        %v541 = vunpack.c.l.b16 %v311
        %v542 = vunpack.c.l.b16 %v312
        %v543 = vunpack.c.l.b16 %v313
        %v544 = vunpack.c.l.b16 %v314
        %v545 = vunpack.c.l.b16 %v315
        %v546 = vunpack.c.l.b16 %v316
        %v547 = vunpack.c.l.b16 %v317
        %v548 = vunpack.c.l.b16 %v318
        %v549 = vunpack.c.l.b16 %v319
        %v550 = vunpack.c.l.b16 %v320
        %v551 = vunpack.c.l.b16 %v321
        %v552 = vunpack.c.l.b16 %v322
        %v553 = vunpack.c.l.b16 %v323
        %v554 = vunpack.c.l.b16 %v324
        %v555 = vunpack.c.l.b16 %v325
        %v556 = vunpack.c.l.b16 %v326
        %v557 = vunpack.c.l.b16 %v327
        %v558 = vunpack.c.l.b16 %v328
        %v559 = vunpack.c.l.b16 %v329
        %v560 = vunpack.c.l.b16 %v330
        %v561 = vunpack.c.l.b16 %v331
        %v562 = vunpack.c.l.b16 %v332
        %v563 = vunpack.c.l.b16 %v333
        %v564 = vunpack.c.l.b16 %v334
        %v565 = vunpack.c.l.b16 %v335
        %v566 = vunpack.c.l.b16 %v336
        %v567 = vunpack.c.l.b16 %v337
        %v568 = vunpack.c.l.b16 %v338
        %v569 = vunpack.c.l.b16 %v339
        %v570 = vunpack.c.l.b16 %v340
        %v571 = vunpack.c.l.b16 %v341
        %v572 = vunpack.c.l.b16 %v342
        %v573 = vunpack.c.l.b16 %v343
        %v574 = vunpack.c.l.b16 %v344
        %v575 = vunpack.c.l.b16 %v345
        %v576 = vunpack.c.l.b16 %v346
        %v577 = vunpack.c.l.b16 %v347
        %v578 = vunpack.c.l.b16 %v348
        %v579 = vunpack.c.l.b16 %v349
        %v580 = vunpack.c.l.b16 %v350
        %v581 = vunpack.c.l.b16 %v351
        %v582 = vunpack.c.l.b16 %v352
        %v583 = vunpack.c.l.b16 %v353
        %v584 = vunpack.c.l.b16 %v354
        %v585 = vunpack.c.l.b16 %v355
        %v586 = vunpack.c.l.b16 %v356
        %v587 = vunpack.c.l.b16 %v357
        %v588 = vunpack.c.l.b16 %v358
        %v589 = vunpack.c.l.b16 %v359
        %v590 = vunpack.c.l.b16 %v360
        %v591 = vunpack.c.l.b16 %v361
        %v592 = vunpack.c.l.b16 %v362
        %v593 = vunpack.c.l.b16 %v363
        %v594 = vunpack.c.l.b16 %v364
        %v595 = vunpack.c.l.b16 %v365
        %v596 = vunpack.c.l.b16 %v366
        %v597 = vunpack.c.l.b16 %v367
        %v598 = vunpack.c.l.b16 %v368
        %v599 = vunpack.c.l.b16 %v369
        %v600 = vunpack.c.l.b16 %v370
        %v601 = vunpack.c.l.b16 %v371
        %v602 = vunpack.c.l.b16 %v372
        %v603 = vunpack.c.l.b16 %v373
        %v604 = vunpack.c.l.b16 %v374
        %v605 = vunpack.c.l.b16 %v375
        %v606 = vunpack.c.l.b16 %v376
        %v607 = vunpack.c.l.b16 %v377
        %v608 = vunpack.c.l.b16 %v378
        %v609 = vunpack.c.l.b16 %v379
        %v610 = vunpack.c.l.b16 %v380
        %v611 = vunpack.c.l.b16 %v381
        %v612 = vunpack.c.l.b16 %v382
        %v613 = vunpack.c.l.b16 %v383
        %v614 = vunpack.c.l.b16 %v384
        %v615 = vunpack.c.l.b16 %v385
        %v616 = vunpack.c.l.b16 %v386
        %v617 = vunpack.c.l.b16 %v387
        %v618 = vunpack.c.l.b16 %v388
        %v619 = vpack.c.b16 %v508, %v507
        %v620 = vpack.c.b16 %v510, %v509
        %v621 = vpack.c.b16 %v512, %v511
        %v622 = vpack.c.b16 %v514, %v513
        %v623 = vpack.c.b16 %v516, %v515
        %v624 = vpack.c.b16 %v518, %v517
        %v625 = vpack.c.b16 %v520, %v519
        %v626 = vpack.c.b16 %v522, %v521
        %v627 = vpack.c.b16 %v524, %v523
        %v628 = vpack.c.b16 %v526, %v525
        %v629 = vpack.c.b16 %v528, %v527
        %v630 = vpack.c.b16 %v530, %v529
        %v631 = vpack.c.b16 %v532, %v531
        %v632 = vpack.c.b16 %v534, %v533
        %v633 = vpack.c.b16 %v536, %v535
        %v634 = vpack.c.b16 %v538, %v537
        %v635 = vpack.c.b16 %v540, %v539
        %v636 = vpack.c.b16 %v542, %v541
        %v637 = vpack.c.b16 %v544, %v543
        %v638 = vpack.c.b16 %v546, %v545
        %v639 = vpack.c.b16 %v548, %v547
        %v640 = vpack.c.b16 %v550, %v549
        %v641 = vpack.c.b16 %v552, %v551
        %v642 = vpack.c.b16 %v554, %v553
        %v643 = vpack.c.b16 %v556, %v555
        %v644 = vpack.c.b16 %v558, %v557
        %v645 = vpack.c.b16 %v560, %v559
        %v646 = vpack.c.b16 %v562, %v561
        %v647 = vpack.c.b16 %v564, %v563
        %v648 = vpack.c.b16 %v566, %v565
        %v649 = vpack.c.b16 %v568, %v567
        %v650 = vpack.c.b16 %v570, %v569
        %v651 = vpack.c.b16 %v572, %v571
        %v652 = vpack.c.b16 %v574, %v573
        %v653 = vpack.c.b16 %v576, %v575
        %v654 = vpack.c.b16 %v578, %v577
        %v655 = vpack.c.b16 %v580, %v579
        %v656 = vpack.c.b16 %v582, %v581
        %v657 = vpack.c.b16 %v584, %v583
        %v658 = vpack.c.b16 %v586, %v585
        %v659 = vpack.c.b16 %v588, %v587
        %v660 = vpack.c.b16 %v590, %v589
        %v661 = vpack.c.b16 %v592, %v591
        %v662 = vpack.c.b16 %v594, %v593
        %v663 = vpack.c.b16 %v596, %v595
        %v664 = vpack.c.b16 %v598, %v597
        %v665 = vpack.c.b16 %v600, %v599
        %v666 = vpack.c.b16 %v602, %v601
        %v667 = vpack.c.b16 %v604, %v603
        %v668 = vpack.c.b16 %v606, %v605
        %v669 = vpack.c.b16 %v608, %v607
        %v670 = vpack.c.b16 %v610, %v609
        %v671 = vpack.c.b16 %v612, %v611
        %v672 = vpack.c.b16 %v614, %v613
        %v673 = vpack.c.b16 %v616, %v615
        %v674 = vpack.c.b16 %v618, %v617
        %v677 = vunpack.c.l.b16 %v389
        %v678 = vunpack.c.l.b16 %v390
        %v679 = vpack.c.b16 %v678, %v677
        %vm680 = vcmask 72704
        %v682 = vsel %vm680, %v619, 0
        %v685 = vsel %vm680, %v620, 0
        %v688 = vsel %vm680, %v621, 0
        %v691 = vsel %vm680, %v622, 0
        %v694 = vsel %vm680, %v623, 0
        %v697 = vsel %vm680, %v624, 0
        %v700 = vsel %vm680, %v625, 0
        %v703 = vsel %vm680, %v626, 0
        %v706 = vsel %vm680, %v627, 0
        %v709 = vsel %vm680, %v628, 0
        %v712 = vsel %vm680, %v629, 0
        %v715 = vsel %vm680, %v630, 0
        %v718 = vsel %vm680, %v631, 0
        %v721 = vsel %vm680, %v632, 0
        %v724 = vsel %vm680, %v633, 0
        %v727 = vsel %vm680, %v634, 0
        %v730 = vsel %vm680, %v635, 0
        %v733 = vsel %vm680, %v636, 0
        %v736 = vsel %vm680, %v637, 0
        %v739 = vsel %vm680, %v638, 0
        %v742 = vsel %vm680, %v639, 0
        %v745 = vsel %vm680, %v640, 0
        %v748 = vsel %vm680, %v641, 0
        %v751 = vsel %vm680, %v642, 0
        %v754 = vsel %vm680, %v643, 0
        %v757 = vsel %vm680, %v644, 0
        %v760 = vsel %vm680, %v645, 0
        %v763 = vsel %vm680, %v646, 0
        %v766 = vsel %vm680, %v647, 0
        %v769 = vsel %vm680, %v648, 0
        %v772 = vsel %vm680, %v649, 0
        %v775 = vsel %vm680, %v650, 0
        %v778 = vsel %vm680, %v651, 0
        %v781 = vsel %vm680, %v652, 0
        %v784 = vsel %vm680, %v653, 0
        %v787 = vsel %vm680, %v654, 0
        %v790 = vsel %vm680, %v655, 0
        %v793 = vsel %vm680, %v656, 0
        %v796 = vsel %vm680, %v657, 0
        %v799 = vsel %vm680, %v658, 0
        %v802 = vsel %vm680, %v659, 0
        %v805 = vsel %vm680, %v660, 0
        %v808 = vsel %vm680, %v661, 0
        %v811 = vsel %vm680, %v662, 0
        %v814 = vsel %vm680, %v663, 0
        %v817 = vsel %vm680, %v664, 0
        %v820 = vsel %vm680, %v665, 0
        %v823 = vsel %vm680, %v666, 0
        %v826 = vsel %vm680, %v667, 0
        %v829 = vsel %vm680, %v668, 0
        %v832 = vsel %vm680, %v669, 0
        %v835 = vsel %vm680, %v670, 0
        %v838 = vsel %vm680, %v671, 0
        %v841 = vsel %vm680, %v672, 0
        %v844 = vsel %vm680, %v673, 0
        %v847 = vsel %vm680, %v674, 0
        %vm849 = vcmask 1043456
        %vm850 = vcmask 1044480
        %v851 = vsel %vm849, 4294967295, 65535
        %v852 = vsel %vm850, %v851, 0
        %v854 = vand.u32 %v679, %v852
        %856 = vmatpush.bf16.msra.mxu0 0
        %857 = vmatpush.bf16.msra.mxu0 0
        %858 = vmatpush.bf16.msra.mxu0 0
        %859 = vmatpush.bf16.msra.mxu0 0
        %860 = vmatpush.bf16.msra.mxu0 0
        %861 = vmatpush.bf16.msra.mxu0 0
        %862 = vmatpush.bf16.msra.mxu0 0
        %863 = vmatpush.bf16.msra.mxu0 %v854
        %864 = vmatmul.bf16.gmra.mxu0 %v682
        %v865 = vpop.f32.mrf.mxu0
        %v866 = vadd.f32 %v393, %v865
        %v867 = vpop.f32.mrf.mxu0
        %v868 = vadd.f32 %v393, %v867
        %869 = vmatmul.bf16.gmra.mxu0 %v685
        %v870 = vpop.f32.mrf.mxu0
        %v871 = vadd.f32 %v393, %v870
        %v872 = vpop.f32.mrf.mxu0
        %v873 = vadd.f32 %v393, %v872
        %874 = vmatmul.bf16.gmra.mxu0 %v688
        %v875 = vpop.f32.mrf.mxu0
        %v876 = vadd.f32 %v393, %v875
        %v877 = vpop.f32.mrf.mxu0
        %v878 = vadd.f32 %v393, %v877
        %879 = vmatmul.bf16.gmra.mxu0 %v691
        %v880 = vpop.f32.mrf.mxu0
        %v881 = vadd.f32 %v393, %v880
        %v882 = vpop.f32.mrf.mxu0
        %v883 = vadd.f32 %v393, %v882
        %884 = vmatmul.bf16.gmra.mxu0 %v694
        %v885 = vpop.f32.mrf.mxu0
        %v886 = vadd.f32 %v393, %v885
        %v887 = vpop.f32.mrf.mxu0
        %v888 = vadd.f32 %v393, %v887
        %889 = vmatmul.bf16.gmra.mxu0 %v697
        %v890 = vpop.f32.mrf.mxu0
        %v891 = vadd.f32 %v393, %v890
        %v892 = vpop.f32.mrf.mxu0
        %v893 = vadd.f32 %v393, %v892
        %894 = vmatmul.bf16.gmra.mxu0 %v700
        %v895 = vpop.f32.mrf.mxu0
        %v896 = vadd.f32 %v393, %v895
        %v897 = vpop.f32.mrf.mxu0
        %v898 = vadd.f32 %v393, %v897
        %899 = vmatmul.bf16.gmra.mxu0 %v703
        %v900 = vpop.f32.mrf.mxu0
        %v901 = vadd.f32 %v393, %v900
        %v902 = vpop.f32.mrf.mxu0
        %v903 = vadd.f32 %v393, %v902
        %904 = vmatmul.bf16.gmra.mxu0 %v706
        %v905 = vpop.f32.mrf.mxu0
        %v906 = vadd.f32 %v393, %v905
        %v907 = vpop.f32.mrf.mxu0
        %v908 = vadd.f32 %v393, %v907
        %909 = vmatmul.bf16.gmra.mxu0 %v709
        %v910 = vpop.f32.mrf.mxu0
        %v911 = vadd.f32 %v393, %v910
        %v912 = vpop.f32.mrf.mxu0
        %v913 = vadd.f32 %v393, %v912
        %914 = vmatmul.bf16.gmra.mxu0 %v712
        %v915 = vpop.f32.mrf.mxu0
        %v916 = vadd.f32 %v393, %v915
        %v917 = vpop.f32.mrf.mxu0
        %v918 = vadd.f32 %v393, %v917
        %919 = vmatmul.bf16.gmra.mxu0 %v715
        %v920 = vpop.f32.mrf.mxu0
        %v921 = vadd.f32 %v393, %v920
        %v922 = vpop.f32.mrf.mxu0
        %v923 = vadd.f32 %v393, %v922
        %924 = vmatmul.bf16.gmra.mxu0 %v718
        %v925 = vpop.f32.mrf.mxu0
        %v926 = vadd.f32 %v393, %v925
        %v927 = vpop.f32.mrf.mxu0
        %v928 = vadd.f32 %v393, %v927
        %929 = vmatmul.bf16.gmra.mxu0 %v721
        %v930 = vpop.f32.mrf.mxu0
        %v931 = vadd.f32 %v393, %v930
        %v932 = vpop.f32.mrf.mxu0
        %v933 = vadd.f32 %v393, %v932
        %934 = vmatmul.bf16.gmra.mxu0 %v724
        %v935 = vpop.f32.mrf.mxu0
        %v936 = vadd.f32 %v393, %v935
        %v937 = vpop.f32.mrf.mxu0
        %v938 = vadd.f32 %v393, %v937
        %939 = vmatmul.bf16.gmra.mxu0 %v727
        %v940 = vpop.f32.mrf.mxu0
        %v941 = vadd.f32 %v393, %v940
        %v942 = vpop.f32.mrf.mxu0
        %v943 = vadd.f32 %v393, %v942
        %944 = vmatmul.bf16.gmra.mxu0 %v730
        %v945 = vpop.f32.mrf.mxu0
        %v946 = vadd.f32 %v393, %v945
        %v947 = vpop.f32.mrf.mxu0
        %v948 = vadd.f32 %v393, %v947
        %949 = vmatmul.bf16.gmra.mxu0 %v733
        %v950 = vpop.f32.mrf.mxu0
        %v951 = vadd.f32 %v393, %v950
        %v952 = vpop.f32.mrf.mxu0
        %v953 = vadd.f32 %v393, %v952
        %954 = vmatmul.bf16.gmra.mxu0 %v736
        %v955 = vpop.f32.mrf.mxu0
        %v956 = vadd.f32 %v393, %v955
        %v957 = vpop.f32.mrf.mxu0
        %v958 = vadd.f32 %v393, %v957
        %959 = vmatmul.bf16.gmra.mxu0 %v739
        %v960 = vpop.f32.mrf.mxu0
        %v961 = vadd.f32 %v393, %v960
        %v962 = vpop.f32.mrf.mxu0
        %v963 = vadd.f32 %v393, %v962
        %964 = vmatmul.bf16.gmra.mxu0 %v742
        %v965 = vpop.f32.mrf.mxu0
        %v966 = vadd.f32 %v393, %v965
        %v967 = vpop.f32.mrf.mxu0
        %v968 = vadd.f32 %v393, %v967
        %969 = vmatmul.bf16.gmra.mxu0 %v745
        %v970 = vpop.f32.mrf.mxu0
        %v971 = vadd.f32 %v393, %v970
        %v972 = vpop.f32.mrf.mxu0
        %v973 = vadd.f32 %v393, %v972
        %974 = vmatmul.bf16.gmra.mxu0 %v748
        %v975 = vpop.f32.mrf.mxu0
        %v976 = vadd.f32 %v393, %v975
        %v977 = vpop.f32.mrf.mxu0
        %v978 = vadd.f32 %v393, %v977
        %979 = vmatmul.bf16.gmra.mxu0 %v751
        %v980 = vpop.f32.mrf.mxu0
        %v981 = vadd.f32 %v393, %v980
        %v982 = vpop.f32.mrf.mxu0
        %v983 = vadd.f32 %v393, %v982
        %984 = vmatmul.bf16.gmra.mxu0 %v754
        %v985 = vpop.f32.mrf.mxu0
        %v986 = vadd.f32 %v393, %v985
        %v987 = vpop.f32.mrf.mxu0
        %v988 = vadd.f32 %v393, %v987
        %989 = vmatmul.bf16.gmra.mxu0 %v757
        %v990 = vpop.f32.mrf.mxu0
        %v991 = vadd.f32 %v393, %v990
        %v992 = vpop.f32.mrf.mxu0
        %v993 = vadd.f32 %v393, %v992
        %994 = vmatmul.bf16.gmra.mxu0 %v760
        %v995 = vpop.f32.mrf.mxu0
        %v996 = vadd.f32 %v393, %v995
        %v997 = vpop.f32.mrf.mxu0
        %v998 = vadd.f32 %v393, %v997
        %999 = vmatmul.bf16.gmra.mxu0 %v763
        %v1000 = vpop.f32.mrf.mxu0
        %v1001 = vadd.f32 %v393, %v1000
        %v1002 = vpop.f32.mrf.mxu0
        %v1003 = vadd.f32 %v393, %v1002
        %1004 = vmatmul.bf16.gmra.mxu0 %v766
        %v1005 = vpop.f32.mrf.mxu0
        %v1006 = vadd.f32 %v393, %v1005
        %v1007 = vpop.f32.mrf.mxu0
        %v1008 = vadd.f32 %v393, %v1007
        %1009 = vmatmul.bf16.gmra.mxu0 %v769
        %v1010 = vpop.f32.mrf.mxu0
        %v1011 = vadd.f32 %v393, %v1010
        %v1012 = vpop.f32.mrf.mxu0
        %v1013 = vadd.f32 %v393, %v1012
        %1014 = vmatmul.bf16.gmra.mxu0 %v772
        %v1015 = vpop.f32.mrf.mxu0
        %v1016 = vadd.f32 %v393, %v1015
        %v1017 = vpop.f32.mrf.mxu0
        %v1018 = vadd.f32 %v393, %v1017
        %1019 = vmatmul.bf16.gmra.mxu0 %v775
        %v1020 = vpop.f32.mrf.mxu0
        %v1021 = vadd.f32 %v393, %v1020
        %v1022 = vpop.f32.mrf.mxu0
        %v1023 = vadd.f32 %v393, %v1022
        %1024 = vmatmul.bf16.gmra.mxu0 %v778
        %v1025 = vpop.f32.mrf.mxu0
        %v1026 = vadd.f32 %v393, %v1025
        %v1027 = vpop.f32.mrf.mxu0
        %v1028 = vadd.f32 %v393, %v1027
        %1029 = vmatmul.bf16.gmra.mxu0 %v781
        %v1030 = vpop.f32.mrf.mxu0
        %v1031 = vadd.f32 %v393, %v1030
        %v1032 = vpop.f32.mrf.mxu0
        %v1033 = vadd.f32 %v393, %v1032
        %1034 = vmatmul.bf16.gmra.mxu0 %v784
        %v1035 = vpop.f32.mrf.mxu0
        %v1036 = vadd.f32 %v393, %v1035
        %v1037 = vpop.f32.mrf.mxu0
        %v1038 = vadd.f32 %v393, %v1037
        %1039 = vmatmul.bf16.gmra.mxu0 %v787
        %v1040 = vpop.f32.mrf.mxu0
        %v1041 = vadd.f32 %v393, %v1040
        %v1042 = vpop.f32.mrf.mxu0
        %v1043 = vadd.f32 %v393, %v1042
        %1044 = vmatmul.bf16.gmra.mxu0 %v790
        %v1045 = vpop.f32.mrf.mxu0
        %v1046 = vadd.f32 %v393, %v1045
        %v1047 = vpop.f32.mrf.mxu0
        %v1048 = vadd.f32 %v393, %v1047
        %1049 = vmatmul.bf16.gmra.mxu0 %v793
        %v1050 = vpop.f32.mrf.mxu0
        %v1051 = vadd.f32 %v393, %v1050
        %v1052 = vpop.f32.mrf.mxu0
        %v1053 = vadd.f32 %v393, %v1052
        %1054 = vmatmul.bf16.gmra.mxu0 %v796
        %v1055 = vpop.f32.mrf.mxu0
        %v1056 = vadd.f32 %v393, %v1055
        %v1057 = vpop.f32.mrf.mxu0
        %v1058 = vadd.f32 %v393, %v1057
        %1059 = vmatmul.bf16.gmra.mxu0 %v799
        %v1060 = vpop.f32.mrf.mxu0
        %v1061 = vadd.f32 %v393, %v1060
        %v1062 = vpop.f32.mrf.mxu0
        %v1063 = vadd.f32 %v393, %v1062
        %1064 = vmatmul.bf16.gmra.mxu0 %v802
        %v1065 = vpop.f32.mrf.mxu0
        %v1066 = vadd.f32 %v393, %v1065
        %v1067 = vpop.f32.mrf.mxu0
        %v1068 = vadd.f32 %v393, %v1067
        %1069 = vmatmul.bf16.gmra.mxu0 %v805
        %v1070 = vpop.f32.mrf.mxu0
        %v1071 = vadd.f32 %v393, %v1070
        %v1072 = vpop.f32.mrf.mxu0
        %v1073 = vadd.f32 %v393, %v1072
        %1074 = vmatmul.bf16.gmra.mxu0 %v808
        %v1075 = vpop.f32.mrf.mxu0
        %v1076 = vadd.f32 %v393, %v1075
        %v1077 = vpop.f32.mrf.mxu0
        %v1078 = vadd.f32 %v393, %v1077
        %1079 = vmatmul.bf16.gmra.mxu0 %v811
        %v1080 = vpop.f32.mrf.mxu0
        %v1081 = vadd.f32 %v393, %v1080
        %v1082 = vpop.f32.mrf.mxu0
        %v1083 = vadd.f32 %v393, %v1082
        %1084 = vmatmul.bf16.gmra.mxu0 %v814
        %v1085 = vpop.f32.mrf.mxu0
        %v1086 = vadd.f32 %v393, %v1085
        %v1087 = vpop.f32.mrf.mxu0
        %v1088 = vadd.f32 %v393, %v1087
        %1089 = vmatmul.bf16.gmra.mxu0 %v817
        %v1090 = vpop.f32.mrf.mxu0
        %v1091 = vadd.f32 %v393, %v1090
        %v1092 = vpop.f32.mrf.mxu0
        %v1093 = vadd.f32 %v393, %v1092
        %1094 = vmatmul.bf16.gmra.mxu0 %v820
        %v1095 = vpop.f32.mrf.mxu0
        %v1096 = vadd.f32 %v393, %v1095
        %v1097 = vpop.f32.mrf.mxu0
        %v1098 = vadd.f32 %v393, %v1097
        %1099 = vmatmul.bf16.gmra.mxu0 %v823
        %v1100 = vpop.f32.mrf.mxu0
        %v1101 = vadd.f32 %v393, %v1100
        %v1102 = vpop.f32.mrf.mxu0
        %v1103 = vadd.f32 %v393, %v1102
        %1104 = vmatmul.bf16.gmra.mxu0 %v826
        %v1105 = vpop.f32.mrf.mxu0
        %v1106 = vadd.f32 %v393, %v1105
        %v1107 = vpop.f32.mrf.mxu0
        %v1108 = vadd.f32 %v393, %v1107
        %1109 = vmatmul.bf16.gmra.mxu0 %v829
        %v1110 = vpop.f32.mrf.mxu0
        %v1111 = vadd.f32 %v393, %v1110
        %v1112 = vpop.f32.mrf.mxu0
        %v1113 = vadd.f32 %v393, %v1112
        %1114 = vmatmul.bf16.gmra.mxu0 %v832
        %v1115 = vpop.f32.mrf.mxu0
        %v1116 = vadd.f32 %v393, %v1115
        %v1117 = vpop.f32.mrf.mxu0
        %v1118 = vadd.f32 %v393, %v1117
        %1119 = vmatmul.bf16.gmra.mxu0 %v835
        %v1120 = vpop.f32.mrf.mxu0
        %v1121 = vadd.f32 %v393, %v1120
        %v1122 = vpop.f32.mrf.mxu0
        %v1123 = vadd.f32 %v393, %v1122
        %1124 = vmatmul.bf16.gmra.mxu0 %v838
        %v1125 = vpop.f32.mrf.mxu0
        %v1126 = vadd.f32 %v393, %v1125
        %v1127 = vpop.f32.mrf.mxu0
        %v1128 = vadd.f32 %v393, %v1127
        %1129 = vmatmul.bf16.gmra.mxu0 %v841
        %v1130 = vpop.f32.mrf.mxu0
        %v1131 = vadd.f32 %v393, %v1130
        %v1132 = vpop.f32.mrf.mxu0
        %v1133 = vadd.f32 %v393, %v1132
        %1134 = vmatmul.bf16.gmra.mxu0 %v844
        %v1135 = vpop.f32.mrf.mxu0
        %v1136 = vadd.f32 %v393, %v1135
        %v1137 = vpop.f32.mrf.mxu0
        %v1138 = vadd.f32 %v393, %v1137
        %1139 = vmatmul.bf16.gmra.mxu0 %v847
        %v1140 = vpop.f32.mrf.mxu0
        %v1141 = vadd.f32 %v393, %v1140
        %v1142 = vpop.f32.mrf.mxu0
        %v1143 = vadd.f32 %v393, %v1142
        %1144 = vdwg.mxu0
        %vm1145 = vcmp.gt.f32.partialorder %v866, 0.0
        %vm1146 = vcmp.gt.f32.partialorder %v868, 0.0
        %vm1147 = vcmp.gt.f32.partialorder %v871, 0.0
        %vm1148 = vcmp.gt.f32.partialorder %v873, 0.0
        %vm1149 = vcmp.gt.f32.partialorder %v876, 0.0
        %vm1150 = vcmp.gt.f32.partialorder %v878, 0.0
        %vm1151 = vcmp.gt.f32.partialorder %v881, 0.0
        %vm1152 = vcmp.gt.f32.partialorder %v883, 0.0
        %vm1153 = vcmp.gt.f32.partialorder %v886, 0.0
        %vm1154 = vcmp.gt.f32.partialorder %v888, 0.0
        %vm1155 = vcmp.gt.f32.partialorder %v891, 0.0
        %vm1156 = vcmp.gt.f32.partialorder %v893, 0.0
        %vm1157 = vcmp.gt.f32.partialorder %v896, 0.0
        %vm1158 = vcmp.gt.f32.partialorder %v898, 0.0
        %vm1159 = vcmp.gt.f32.partialorder %v901, 0.0
        %vm1160 = vcmp.gt.f32.partialorder %v903, 0.0
        %vm1161 = vcmp.gt.f32.partialorder %v906, 0.0
        %vm1162 = vcmp.gt.f32.partialorder %v908, 0.0
        %vm1163 = vcmp.gt.f32.partialorder %v911, 0.0
        %vm1164 = vcmp.gt.f32.partialorder %v913, 0.0
        %vm1165 = vcmp.gt.f32.partialorder %v916, 0.0
        %vm1166 = vcmp.gt.f32.partialorder %v918, 0.0
        %vm1167 = vcmp.gt.f32.partialorder %v921, 0.0
        %vm1168 = vcmp.gt.f32.partialorder %v923, 0.0
        %vm1169 = vcmp.gt.f32.partialorder %v926, 0.0
        %vm1170 = vcmp.gt.f32.partialorder %v928, 0.0
        %vm1171 = vcmp.gt.f32.partialorder %v931, 0.0
        %vm1172 = vcmp.gt.f32.partialorder %v933, 0.0
        %vm1173 = vcmp.gt.f32.partialorder %v936, 0.0
        %vm1174 = vcmp.gt.f32.partialorder %v938, 0.0
        %vm1175 = vcmp.gt.f32.partialorder %v941, 0.0
        %vm1176 = vcmp.gt.f32.partialorder %v943, 0.0
        %vm1177 = vcmp.gt.f32.partialorder %v946, 0.0
        %vm1178 = vcmp.gt.f32.partialorder %v948, 0.0
        %vm1179 = vcmp.gt.f32.partialorder %v951, 0.0
        %vm1180 = vcmp.gt.f32.partialorder %v953, 0.0
        %vm1181 = vcmp.gt.f32.partialorder %v956, 0.0
        %vm1182 = vcmp.gt.f32.partialorder %v958, 0.0
        %vm1183 = vcmp.gt.f32.partialorder %v961, 0.0
        %vm1184 = vcmp.gt.f32.partialorder %v963, 0.0
        %vm1185 = vcmp.gt.f32.partialorder %v966, 0.0
        %vm1186 = vcmp.gt.f32.partialorder %v968, 0.0
        %vm1187 = vcmp.gt.f32.partialorder %v971, 0.0
        %vm1188 = vcmp.gt.f32.partialorder %v973, 0.0
        %vm1189 = vcmp.gt.f32.partialorder %v976, 0.0
        %vm1190 = vcmp.gt.f32.partialorder %v978, 0.0
        %vm1191 = vcmp.gt.f32.partialorder %v981, 0.0
        %vm1192 = vcmp.gt.f32.partialorder %v983, 0.0
        %vm1193 = vcmp.gt.f32.partialorder %v986, 0.0
        %vm1194 = vcmp.gt.f32.partialorder %v988, 0.0
        %vm1195 = vcmp.gt.f32.partialorder %v991, 0.0
        %vm1196 = vcmp.gt.f32.partialorder %v993, 0.0
        %vm1197 = vcmp.gt.f32.partialorder %v996, 0.0
        %vm1198 = vcmp.gt.f32.partialorder %v998, 0.0
        %vm1199 = vcmp.gt.f32.partialorder %v1001, 0.0
        %vm1200 = vcmp.gt.f32.partialorder %v1003, 0.0
        %vm1201 = vcmp.gt.f32.partialorder %v1006, 0.0
        %vm1202 = vcmp.gt.f32.partialorder %v1008, 0.0
        %vm1203 = vcmp.gt.f32.partialorder %v1011, 0.0
        %vm1204 = vcmp.gt.f32.partialorder %v1013, 0.0
        %vm1205 = vcmp.gt.f32.partialorder %v1016, 0.0
        %vm1206 = vcmp.gt.f32.partialorder %v1018, 0.0
        %vm1207 = vcmp.gt.f32.partialorder %v1021, 0.0
        %vm1208 = vcmp.gt.f32.partialorder %v1023, 0.0
        %vm1209 = vcmp.gt.f32.partialorder %v1026, 0.0
        %vm1210 = vcmp.gt.f32.partialorder %v1028, 0.0
        %vm1211 = vcmp.gt.f32.partialorder %v1031, 0.0
        %vm1212 = vcmp.gt.f32.partialorder %v1033, 0.0
        %vm1213 = vcmp.gt.f32.partialorder %v1036, 0.0
        %vm1214 = vcmp.gt.f32.partialorder %v1038, 0.0
        %vm1215 = vcmp.gt.f32.partialorder %v1041, 0.0
        %vm1216 = vcmp.gt.f32.partialorder %v1043, 0.0
        %vm1217 = vcmp.gt.f32.partialorder %v1046, 0.0
        %vm1218 = vcmp.gt.f32.partialorder %v1048, 0.0
        %vm1219 = vcmp.gt.f32.partialorder %v1051, 0.0
        %vm1220 = vcmp.gt.f32.partialorder %v1053, 0.0
        %vm1221 = vcmp.gt.f32.partialorder %v1056, 0.0
        %vm1222 = vcmp.gt.f32.partialorder %v1058, 0.0
        %vm1223 = vcmp.gt.f32.partialorder %v1061, 0.0
        %vm1224 = vcmp.gt.f32.partialorder %v1063, 0.0
        %vm1225 = vcmp.gt.f32.partialorder %v1066, 0.0
        %vm1226 = vcmp.gt.f32.partialorder %v1068, 0.0
        %vm1227 = vcmp.gt.f32.partialorder %v1071, 0.0
        %vm1228 = vcmp.gt.f32.partialorder %v1073, 0.0
        %vm1229 = vcmp.gt.f32.partialorder %v1076, 0.0
        %vm1230 = vcmp.gt.f32.partialorder %v1078, 0.0
        %vm1231 = vcmp.gt.f32.partialorder %v1081, 0.0
        %vm1232 = vcmp.gt.f32.partialorder %v1083, 0.0
        %vm1233 = vcmp.gt.f32.partialorder %v1086, 0.0
        %vm1234 = vcmp.gt.f32.partialorder %v1088, 0.0
        %vm1235 = vcmp.gt.f32.partialorder %v1091, 0.0
        %vm1236 = vcmp.gt.f32.partialorder %v1093, 0.0
        %vm1237 = vcmp.gt.f32.partialorder %v1096, 0.0
        %vm1238 = vcmp.gt.f32.partialorder %v1098, 0.0
        %vm1239 = vcmp.gt.f32.partialorder %v1101, 0.0
        %vm1240 = vcmp.gt.f32.partialorder %v1103, 0.0
        %vm1241 = vcmp.gt.f32.partialorder %v1106, 0.0
        %vm1242 = vcmp.gt.f32.partialorder %v1108, 0.0
        %vm1243 = vcmp.gt.f32.partialorder %v1111, 0.0
        %vm1244 = vcmp.gt.f32.partialorder %v1113, 0.0
        %vm1245 = vcmp.gt.f32.partialorder %v1116, 0.0
        %vm1246 = vcmp.gt.f32.partialorder %v1118, 0.0
        %vm1247 = vcmp.gt.f32.partialorder %v1121, 0.0
        %vm1248 = vcmp.gt.f32.partialorder %v1123, 0.0
        %vm1249 = vcmp.gt.f32.partialorder %v1126, 0.0
        %vm1250 = vcmp.gt.f32.partialorder %v1128, 0.0
        %vm1251 = vcmp.gt.f32.partialorder %v1131, 0.0
        %vm1252 = vcmp.gt.f32.partialorder %v1133, 0.0
        %vm1253 = vcmp.gt.f32.partialorder %v1136, 0.0
        %vm1254 = vcmp.gt.f32.partialorder %v1138, 0.0
        %vm1255 = vcmp.gt.f32.partialorder %v1141, 0.0
        %vm1256 = vcmp.gt.f32.partialorder %v1143, 0.0
        %v1257 = vmul.f32 %v866, 0.01
        %v1258 = vmul.f32 %v868, 0.01
        %v1259 = vmul.f32 %v871, 0.01
        %v1260 = vmul.f32 %v873, 0.01
        %v1261 = vmul.f32 %v876, 0.01
        %v1262 = vmul.f32 %v878, 0.01
        %v1263 = vmul.f32 %v881, 0.01
        %v1264 = vmul.f32 %v883, 0.01
        %v1265 = vmul.f32 %v886, 0.01
        %v1266 = vmul.f32 %v888, 0.01
        %v1267 = vmul.f32 %v891, 0.01
        %v1268 = vmul.f32 %v893, 0.01
        %v1269 = vmul.f32 %v896, 0.01
        %v1270 = vmul.f32 %v898, 0.01
        %v1271 = vmul.f32 %v901, 0.01
        %v1272 = vmul.f32 %v903, 0.01
        %v1273 = vmul.f32 %v906, 0.01
        %v1274 = vmul.f32 %v908, 0.01
        %v1275 = vmul.f32 %v911, 0.01
        %v1276 = vmul.f32 %v913, 0.01
        %v1277 = vmul.f32 %v916, 0.01
        %v1278 = vmul.f32 %v918, 0.01
        %v1279 = vmul.f32 %v921, 0.01
        %v1280 = vmul.f32 %v923, 0.01
        %v1281 = vmul.f32 %v926, 0.01
        %v1282 = vmul.f32 %v928, 0.01
        %v1283 = vmul.f32 %v931, 0.01
        %v1284 = vmul.f32 %v933, 0.01
        %v1285 = vmul.f32 %v936, 0.01
        %v1286 = vmul.f32 %v938, 0.01
        %v1287 = vmul.f32 %v941, 0.01
        %v1288 = vmul.f32 %v943, 0.01
        %v1289 = vmul.f32 %v946, 0.01
        %v1290 = vmul.f32 %v948, 0.01
        %v1291 = vmul.f32 %v951, 0.01
        %v1292 = vmul.f32 %v953, 0.01
        %v1293 = vmul.f32 %v956, 0.01
        %v1294 = vmul.f32 %v958, 0.01
        %v1295 = vmul.f32 %v961, 0.01
        %v1296 = vmul.f32 %v963, 0.01
        %v1297 = vmul.f32 %v966, 0.01
        %v1298 = vmul.f32 %v968, 0.01
        %v1299 = vmul.f32 %v971, 0.01
        %v1300 = vmul.f32 %v973, 0.01
        %v1301 = vmul.f32 %v976, 0.01
        %v1302 = vmul.f32 %v978, 0.01
        %v1303 = vmul.f32 %v981, 0.01
        %v1304 = vmul.f32 %v983, 0.01
        %v1305 = vmul.f32 %v986, 0.01
        %v1306 = vmul.f32 %v988, 0.01
        %v1307 = vmul.f32 %v991, 0.01
        %v1308 = vmul.f32 %v993, 0.01
        %v1309 = vmul.f32 %v996, 0.01
        %v1310 = vmul.f32 %v998, 0.01
        %v1311 = vmul.f32 %v1001, 0.01
        %v1312 = vmul.f32 %v1003, 0.01
        %v1313 = vmul.f32 %v1006, 0.01
        %v1314 = vmul.f32 %v1008, 0.01
        %v1315 = vmul.f32 %v1011, 0.01
        %v1316 = vmul.f32 %v1013, 0.01
        %v1317 = vmul.f32 %v1016, 0.01
        %v1318 = vmul.f32 %v1018, 0.01
        %v1319 = vmul.f32 %v1021, 0.01
        %v1320 = vmul.f32 %v1023, 0.01
        %v1321 = vmul.f32 %v1026, 0.01
        %v1322 = vmul.f32 %v1028, 0.01
        %v1323 = vmul.f32 %v1031, 0.01
        %v1324 = vmul.f32 %v1033, 0.01
        %v1325 = vmul.f32 %v1036, 0.01
        %v1326 = vmul.f32 %v1038, 0.01
        %v1327 = vmul.f32 %v1041, 0.01
        %v1328 = vmul.f32 %v1043, 0.01
        %v1329 = vmul.f32 %v1046, 0.01
        %v1330 = vmul.f32 %v1048, 0.01
        %v1331 = vmul.f32 %v1051, 0.01
        %v1332 = vmul.f32 %v1053, 0.01
        %v1333 = vmul.f32 %v1056, 0.01
        %v1334 = vmul.f32 %v1058, 0.01
        %v1335 = vmul.f32 %v1061, 0.01
        %v1336 = vmul.f32 %v1063, 0.01
        %v1337 = vmul.f32 %v1066, 0.01
        %v1338 = vmul.f32 %v1068, 0.01
        %v1339 = vmul.f32 %v1071, 0.01
        %v1340 = vmul.f32 %v1073, 0.01
        %v1341 = vmul.f32 %v1076, 0.01
        %v1342 = vmul.f32 %v1078, 0.01
        %v1343 = vmul.f32 %v1081, 0.01
        %v1344 = vmul.f32 %v1083, 0.01
        %v1345 = vmul.f32 %v1086, 0.01
        %v1346 = vmul.f32 %v1088, 0.01
        %v1347 = vmul.f32 %v1091, 0.01
        %v1348 = vmul.f32 %v1093, 0.01
        %v1349 = vmul.f32 %v1096, 0.01
        %v1350 = vmul.f32 %v1098, 0.01
        %v1351 = vmul.f32 %v1101, 0.01
        %v1352 = vmul.f32 %v1103, 0.01
        %v1353 = vmul.f32 %v1106, 0.01
        %v1354 = vmul.f32 %v1108, 0.01
        %v1355 = vmul.f32 %v1111, 0.01
        %v1356 = vmul.f32 %v1113, 0.01
        %v1357 = vmul.f32 %v1116, 0.01
        %v1358 = vmul.f32 %v1118, 0.01
        %v1359 = vmul.f32 %v1121, 0.01
        %v1360 = vmul.f32 %v1123, 0.01
        %v1361 = vmul.f32 %v1126, 0.01
        %v1362 = vmul.f32 %v1128, 0.01
        %v1363 = vmul.f32 %v1131, 0.01
        %v1364 = vmul.f32 %v1133, 0.01
        %v1365 = vmul.f32 %v1136, 0.01
        %v1366 = vmul.f32 %v1138, 0.01
        %v1367 = vmul.f32 %v1141, 0.01
        %v1368 = vmul.f32 %v1143, 0.01
        %v1369 = vsel %vm1145, %v866, %v1257
        %v1370 = vsel %vm1146, %v868, %v1258
        %v1371 = vsel %vm1147, %v871, %v1259
        %v1372 = vsel %vm1148, %v873, %v1260
        %v1373 = vsel %vm1149, %v876, %v1261
        %v1374 = vsel %vm1150, %v878, %v1262
        %v1375 = vsel %vm1151, %v881, %v1263
        %v1376 = vsel %vm1152, %v883, %v1264
        %v1377 = vsel %vm1153, %v886, %v1265
        %v1378 = vsel %vm1154, %v888, %v1266
        %v1379 = vsel %vm1155, %v891, %v1267
        %v1380 = vsel %vm1156, %v893, %v1268
        %v1381 = vsel %vm1157, %v896, %v1269
        %v1382 = vsel %vm1158, %v898, %v1270
        %v1383 = vsel %vm1159, %v901, %v1271
        %v1384 = vsel %vm1160, %v903, %v1272
        %v1385 = vsel %vm1161, %v906, %v1273
        %v1386 = vsel %vm1162, %v908, %v1274
        %v1387 = vsel %vm1163, %v911, %v1275
        %v1388 = vsel %vm1164, %v913, %v1276
        %v1389 = vsel %vm1165, %v916, %v1277
        %v1390 = vsel %vm1166, %v918, %v1278
        %v1391 = vsel %vm1167, %v921, %v1279
        %v1392 = vsel %vm1168, %v923, %v1280
        %v1393 = vsel %vm1169, %v926, %v1281
        %v1394 = vsel %vm1170, %v928, %v1282
        %v1395 = vsel %vm1171, %v931, %v1283
        %v1396 = vsel %vm1172, %v933, %v1284
        %v1397 = vsel %vm1173, %v936, %v1285
        %v1398 = vsel %vm1174, %v938, %v1286
        %v1399 = vsel %vm1175, %v941, %v1287
        %v1400 = vsel %vm1176, %v943, %v1288
        %v1401 = vsel %vm1177, %v946, %v1289
        %v1402 = vsel %vm1178, %v948, %v1290
        %v1403 = vsel %vm1179, %v951, %v1291
        %v1404 = vsel %vm1180, %v953, %v1292
        %v1405 = vsel %vm1181, %v956, %v1293
        %v1406 = vsel %vm1182, %v958, %v1294
        %v1407 = vsel %vm1183, %v961, %v1295
        %v1408 = vsel %vm1184, %v963, %v1296
        %v1409 = vsel %vm1185, %v966, %v1297
        %v1410 = vsel %vm1186, %v968, %v1298
        %v1411 = vsel %vm1187, %v971, %v1299
        %v1412 = vsel %vm1188, %v973, %v1300
        %v1413 = vsel %vm1189, %v976, %v1301
        %v1414 = vsel %vm1190, %v978, %v1302
        %v1415 = vsel %vm1191, %v981, %v1303
        %v1416 = vsel %vm1192, %v983, %v1304
        %v1417 = vsel %vm1193, %v986, %v1305
        %v1418 = vsel %vm1194, %v988, %v1306
        %v1419 = vsel %vm1195, %v991, %v1307
        %v1420 = vsel %vm1196, %v993, %v1308
        %v1421 = vsel %vm1197, %v996, %v1309
        %v1422 = vsel %vm1198, %v998, %v1310
        %v1423 = vsel %vm1199, %v1001, %v1311
        %v1424 = vsel %vm1200, %v1003, %v1312
        %v1425 = vsel %vm1201, %v1006, %v1313
        %v1426 = vsel %vm1202, %v1008, %v1314
        %v1427 = vsel %vm1203, %v1011, %v1315
        %v1428 = vsel %vm1204, %v1013, %v1316
        %v1429 = vsel %vm1205, %v1016, %v1317
        %v1430 = vsel %vm1206, %v1018, %v1318
        %v1431 = vsel %vm1207, %v1021, %v1319
        %v1432 = vsel %vm1208, %v1023, %v1320
        %v1433 = vsel %vm1209, %v1026, %v1321
        %v1434 = vsel %vm1210, %v1028, %v1322
        %v1435 = vsel %vm1211, %v1031, %v1323
        %v1436 = vsel %vm1212, %v1033, %v1324
        %v1437 = vsel %vm1213, %v1036, %v1325
        %v1438 = vsel %vm1214, %v1038, %v1326
        %v1439 = vsel %vm1215, %v1041, %v1327
        %v1440 = vsel %vm1216, %v1043, %v1328
        %v1441 = vsel %vm1217, %v1046, %v1329
        %v1442 = vsel %vm1218, %v1048, %v1330
        %v1443 = vsel %vm1219, %v1051, %v1331
        %v1444 = vsel %vm1220, %v1053, %v1332
        %v1445 = vsel %vm1221, %v1056, %v1333
        %v1446 = vsel %vm1222, %v1058, %v1334
        %v1447 = vsel %vm1223, %v1061, %v1335
        %v1448 = vsel %vm1224, %v1063, %v1336
        %v1449 = vsel %vm1225, %v1066, %v1337
        %v1450 = vsel %vm1226, %v1068, %v1338
        %v1451 = vsel %vm1227, %v1071, %v1339
        %v1452 = vsel %vm1228, %v1073, %v1340
        %v1453 = vsel %vm1229, %v1076, %v1341
        %v1454 = vsel %vm1230, %v1078, %v1342
        %v1455 = vsel %vm1231, %v1081, %v1343
        %v1456 = vsel %vm1232, %v1083, %v1344
        %v1457 = vsel %vm1233, %v1086, %v1345
        %v1458 = vsel %vm1234, %v1088, %v1346
        %v1459 = vsel %vm1235, %v1091, %v1347
        %v1460 = vsel %vm1236, %v1093, %v1348
        %v1461 = vsel %vm1237, %v1096, %v1349
        %v1462 = vsel %vm1238, %v1098, %v1350
        %v1463 = vsel %vm1239, %v1101, %v1351
        %v1464 = vsel %vm1240, %v1103, %v1352
        %v1465 = vsel %vm1241, %v1106, %v1353
        %v1466 = vsel %vm1242, %v1108, %v1354
        %v1467 = vsel %vm1243, %v1111, %v1355
        %v1468 = vsel %vm1244, %v1113, %v1356
        %v1469 = vsel %vm1245, %v1116, %v1357
        %v1470 = vsel %vm1246, %v1118, %v1358
        %v1471 = vsel %vm1247, %v1121, %v1359
        %v1472 = vsel %vm1248, %v1123, %v1360
        %v1473 = vsel %vm1249, %v1126, %v1361
        %v1474 = vsel %vm1250, %v1128, %v1362
        %v1475 = vsel %vm1251, %v1131, %v1363
        %v1476 = vsel %vm1252, %v1133, %v1364
        %v1477 = vsel %vm1253, %v1136, %v1365
        %v1478 = vsel %vm1254, %v1138, %v1366
        %v1479 = vsel %vm1255, %v1141, %v1367
        %v1480 = vsel %vm1256, %v1143, %v1368
        %v1481 = vmax.f32 %v1369, %v1373
        %v1482 = vmax.f32 %v1370, %v1374
        %v1483 = vmax.f32 %v1371, %v1375
        %v1484 = vmax.f32 %v1372, %v1376
        %v1485 = vmax.f32 %v1377, %v1381
        %v1486 = vmax.f32 %v1378, %v1382
        %v1487 = vmax.f32 %v1379, %v1383
        %v1488 = vmax.f32 %v1380, %v1384
        %v1489 = vmax.f32 %v1385, %v1389
        %v1490 = vmax.f32 %v1386, %v1390
        %v1491 = vmax.f32 %v1387, %v1391
        %v1492 = vmax.f32 %v1388, %v1392
        %v1493 = vmax.f32 %v1393, %v1397
        %v1494 = vmax.f32 %v1394, %v1398
        %v1495 = vmax.f32 %v1395, %v1399
        %v1496 = vmax.f32 %v1396, %v1400
        %v1497 = vmax.f32 %v1401, %v1405
        %v1498 = vmax.f32 %v1402, %v1406
        %v1499 = vmax.f32 %v1403, %v1407
        %v1500 = vmax.f32 %v1404, %v1408
        %v1501 = vmax.f32 %v1409, %v1413
        %v1502 = vmax.f32 %v1410, %v1414
        %v1503 = vmax.f32 %v1411, %v1415
        %v1504 = vmax.f32 %v1412, %v1416
        %v1505 = vmax.f32 %v1417, %v1421
        %v1506 = vmax.f32 %v1418, %v1422
        %v1507 = vmax.f32 %v1419, %v1423
        %v1508 = vmax.f32 %v1420, %v1424
        %v1509 = vmax.f32 %v1425, %v1429
        %v1510 = vmax.f32 %v1426, %v1430
        %v1511 = vmax.f32 %v1427, %v1431
        %v1512 = vmax.f32 %v1428, %v1432
        %v1513 = vmax.f32 %v1433, %v1437
        %v1514 = vmax.f32 %v1434, %v1438
        %v1515 = vmax.f32 %v1435, %v1439
        %v1516 = vmax.f32 %v1436, %v1440
        %v1517 = vmax.f32 %v1441, %v1445
        %v1518 = vmax.f32 %v1442, %v1446
        %v1519 = vmax.f32 %v1443, %v1447
        %v1520 = vmax.f32 %v1444, %v1448
        %v1521 = vmax.f32 %v1449, %v1453
        %v1522 = vmax.f32 %v1450, %v1454
        %v1523 = vmax.f32 %v1451, %v1455
        %v1524 = vmax.f32 %v1452, %v1456
        %v1525 = vmax.f32 %v1457, %v1461
        %v1526 = vmax.f32 %v1458, %v1462
        %v1527 = vmax.f32 %v1459, %v1463
        %v1528 = vmax.f32 %v1460, %v1464
        %v1529 = vmax.f32 %v1465, %v1469
        %v1530 = vmax.f32 %v1466, %v1470
        %v1531 = vmax.f32 %v1467, %v1471
        %v1532 = vmax.f32 %v1468, %v1472
        %v1533 = vmax.f32 %v1473, %v1477
        %v1534 = vmax.f32 %v1474, %v1478
        %v1535 = vmax.f32 %v1475, %v1479
        %v1536 = vmax.f32 %v1476, %v1480
        %vm1537 = vcmask 261120
        %1538 = vst.msk [vmem:[#allocation2] sm:$0xff] %vm1537, %v1481
        %1539 = vst.msk [vmem:[#allocation2 + $0x8] sm:$0xff] %vm1537, %v1482
        %1540 = vst.msk [vmem:[#allocation2 + $0x10] sm:$0xff] %vm1537, %v1483
        %1541 = vst.msk [vmem:[#allocation2 + $0x18] sm:$0xff] %vm1537, %v1484
        %1542 = vst.msk [vmem:[#allocation2 + $0x20] sm:$0xff] %vm1537, %v1485
        %1543 = vst.msk [vmem:[#allocation2 + $0x28] sm:$0xff] %vm1537, %v1486
        %1544 = vst.msk [vmem:[#allocation2 + $0x30] sm:$0xff] %vm1537, %v1487
        %1545 = vst.msk [vmem:[#allocation2 + $0x38] sm:$0xff] %vm1537, %v1488
        %1546 = vst.msk [vmem:[#allocation2 + $0x40] sm:$0xff] %vm1537, %v1489
        %1547 = vst.msk [vmem:[#allocation2 + $0x48] sm:$0xff] %vm1537, %v1490
        %1548 = vst.msk [vmem:[#allocation2 + $0x50] sm:$0xff] %vm1537, %v1491
        %1549 = vst.msk [vmem:[#allocation2 + $0x58] sm:$0xff] %vm1537, %v1492
        %1550 = vst.msk [vmem:[#allocation2 + $0x60] sm:$0xff] %vm1537, %v1493
        %1551 = vst.msk [vmem:[#allocation2 + $0x68] sm:$0xff] %vm1537, %v1494
        %1552 = vst.msk [vmem:[#allocation2 + $0x70] sm:$0xff] %vm1537, %v1495
        %1553 = vst.msk [vmem:[#allocation2 + $0x78] sm:$0xff] %vm1537, %v1496
        %1554 = vst.msk [vmem:[#allocation2 + $0x80] sm:$0xff] %vm1537, %v1497
        %1555 = vst.msk [vmem:[#allocation2 + $0x88] sm:$0xff] %vm1537, %v1498
        %1556 = vst.msk [vmem:[#allocation2 + $0x90] sm:$0xff] %vm1537, %v1499
        %1557 = vst.msk [vmem:[#allocation2 + $0x98] sm:$0xff] %vm1537, %v1500
        %1558 = vst.msk [vmem:[#allocation2 + $0xa0] sm:$0xff] %vm1537, %v1501
        %1559 = vst.msk [vmem:[#allocation2 + $0xa8] sm:$0xff] %vm1537, %v1502
        %1560 = vst.msk [vmem:[#allocation2 + $0xb0] sm:$0xff] %vm1537, %v1503
        %1561 = vst.msk [vmem:[#allocation2 + $0xb8] sm:$0xff] %vm1537, %v1504
        %1562 = vst.msk [vmem:[#allocation2 + $0xc0] sm:$0xff] %vm1537, %v1505
        %1563 = vst.msk [vmem:[#allocation2 + $0xc8] sm:$0xff] %vm1537, %v1506
        %1564 = vst.msk [vmem:[#allocation2 + $0xd0] sm:$0xff] %vm1537, %v1507
        %1565 = vst.msk [vmem:[#allocation2 + $0xd8] sm:$0xff] %vm1537, %v1508
        %1566 = vst.msk [vmem:[#allocation2 + $0xe0] sm:$0xff] %vm1537, %v1509
        %1567 = vst.msk [vmem:[#allocation2 + $0xe8] sm:$0xff] %vm1537, %v1510
        %1568 = vst.msk [vmem:[#allocation2 + $0xf0] sm:$0xff] %vm1537, %v1511
        %1569 = vst.msk [vmem:[#allocation2 + $0xf8] sm:$0xff] %vm1537, %v1512
        %1570 = vst.msk [vmem:[#allocation2 + $0x100] sm:$0xff] %vm1537, %v1513
        %1571 = vst.msk [vmem:[#allocation2 + $0x108] sm:$0xff] %vm1537, %v1514
        %1572 = vst.msk [vmem:[#allocation2 + $0x110] sm:$0xff] %vm1537, %v1515
        %1573 = vst.msk [vmem:[#allocation2 + $0x118] sm:$0xff] %vm1537, %v1516
        %1574 = vst.msk [vmem:[#allocation2 + $0x120] sm:$0xff] %vm1537, %v1517
        %1575 = vst.msk [vmem:[#allocation2 + $0x128] sm:$0xff] %vm1537, %v1518
        %1576 = vst.msk [vmem:[#allocation2 + $0x130] sm:$0xff] %vm1537, %v1519
        %1577 = vst.msk [vmem:[#allocation2 + $0x138] sm:$0xff] %vm1537, %v1520
        %1578 = vst.msk [vmem:[#allocation2 + $0x140] sm:$0xff] %vm1537, %v1521
        %1579 = vst.msk [vmem:[#allocation2 + $0x148] sm:$0xff] %vm1537, %v1522
        %1580 = vst.msk [vmem:[#allocation2 + $0x150] sm:$0xff] %vm1537, %v1523
        %1581 = vst.msk [vmem:[#allocation2 + $0x158] sm:$0xff] %vm1537, %v1524
        %1582 = vst.msk [vmem:[#allocation2 + $0x160] sm:$0xff] %vm1537, %v1525
        %1583 = vst.msk [vmem:[#allocation2 + $0x168] sm:$0xff] %vm1537, %v1526
        %1584 = vst.msk [vmem:[#allocation2 + $0x170] sm:$0xff] %vm1537, %v1527
        %1585 = vst.msk [vmem:[#allocation2 + $0x178] sm:$0xff] %vm1537, %v1528
        %1586 = vst.msk [vmem:[#allocation2 + $0x180] sm:$0xff] %vm1537, %v1529
        %1587 = vst.msk [vmem:[#allocation2 + $0x188] sm:$0xff] %vm1537, %v1530
        %1588 = vst.msk [vmem:[#allocation2 + $0x190] sm:$0xff] %vm1537, %v1531
        %1589 = vst.msk [vmem:[#allocation2 + $0x198] sm:$0xff] %vm1537, %v1532
        %1590 = vst.msk [vmem:[#allocation2 + $0x1a0] sm:$0xff] %vm1537, %v1533
        %1591 = vst.msk [vmem:[#allocation2 + $0x1a8] sm:$0xff] %vm1537, %v1534
        %1592 = vst.msk [vmem:[#allocation2 + $0x1b0] sm:$0xff] %vm1537, %v1535
        %1593 = vst.msk [vmem:[#allocation2 + $0x1b8] sm:$0xff] %vm1537, %v1536
        %v1594 = vld [vmem:[#allocation2] ss:$2 sm:$0xff]
        %s1595 = scalar_lea.vmem [#allocation2], 16
        %v1596 = vld [vmem:[%s1595] ss:$2 sm:$0xff]
        %s1597 = scalar_lea.vmem [#allocation2], 32
        %v1598 = vld [vmem:[%s1597] ss:$2 sm:$0xff]
        %s1599 = scalar_lea.vmem [#allocation2], 48
        %v1600 = vld [vmem:[%s1599] ss:$2 sm:$0xff]
        %s1601 = scalar_lea.vmem [#allocation2], 64
        %v1602 = vld [vmem:[%s1601] ss:$2 sm:$0xff]
        %s1603 = scalar_lea.vmem [#allocation2], 80
        %v1604 = vld [vmem:[%s1603] ss:$2 sm:$0xff]
        %s1605 = scalar_lea.vmem [#allocation2], 96
        %v1606 = vld [vmem:[%s1605] ss:$2 sm:$0xff]
        %s1607 = scalar_lea.vmem [#allocation2], 112
        %v1608 = vld [vmem:[%s1607] ss:$2 sm:$0xff]
        %s1609 = scalar_lea.vmem [#allocation2], 128
        %v1610 = vld [vmem:[%s1609] ss:$2 sm:$0xff]
        %s1611 = scalar_lea.vmem [#allocation2], 144
        %v1612 = vld [vmem:[%s1611] ss:$2 sm:$0xff]
        %s1613 = scalar_lea.vmem [#allocation2], 160
        %v1614 = vld [vmem:[%s1613] ss:$2 sm:$0xff]
        %s1615 = scalar_lea.vmem [#allocation2], 176
        %v1616 = vld [vmem:[%s1615] ss:$2 sm:$0xff]
        %s1617 = scalar_lea.vmem [#allocation2], 192
        %v1618 = vld [vmem:[%s1617] ss:$2 sm:$0xff]
        %s1619 = scalar_lea.vmem [#allocation2], 208
        %v1620 = vld [vmem:[%s1619] ss:$2 sm:$0xff]
        %s1621 = scalar_lea.vmem [#allocation2], 224
        %v1622 = vld [vmem:[%s1621] ss:$2 sm:$0xff]
        %s1623 = scalar_lea.vmem [#allocation2], 240
        %v1624 = vld [vmem:[%s1623] ss:$2 sm:$0xff]
        %s1625 = scalar_lea.vmem [#allocation2], 256
        %v1626 = vld [vmem:[%s1625] ss:$2 sm:$0xff]
        %s1627 = scalar_lea.vmem [#allocation2], 272
        %v1628 = vld [vmem:[%s1627] ss:$2 sm:$0xff]
        %s1629 = scalar_lea.vmem [#allocation2], 288
        %v1630 = vld [vmem:[%s1629] ss:$2 sm:$0xff]
        %s1631 = scalar_lea.vmem [#allocation2], 304
        %v1632 = vld [vmem:[%s1631] ss:$2 sm:$0xff]
        %s1633 = scalar_lea.vmem [#allocation2], 320
        %v1634 = vld [vmem:[%s1633] ss:$2 sm:$0xff]
        %s1635 = scalar_lea.vmem [#allocation2], 336
        %v1636 = vld [vmem:[%s1635] ss:$2 sm:$0xff]
        %s1637 = scalar_lea.vmem [#allocation2], 352
        %v1638 = vld [vmem:[%s1637] ss:$2 sm:$0xff]
        %s1639 = scalar_lea.vmem [#allocation2], 368
        %v1640 = vld [vmem:[%s1639] ss:$2 sm:$0xff]
        %s1641 = scalar_lea.vmem [#allocation2], 384
        %v1642 = vld [vmem:[%s1641] ss:$2 sm:$0xff]
        %s1643 = scalar_lea.vmem [#allocation2], 400
        %v1644 = vld [vmem:[%s1643] ss:$2 sm:$0xff]
        %s1645 = scalar_lea.vmem [#allocation2], 416
        %v1646 = vld [vmem:[%s1645] ss:$2 sm:$0xff]
        %s1647 = scalar_lea.vmem [#allocation2], 432
        %v1648 = vld [vmem:[%s1647] ss:$2 sm:$0xff]
        %s1649 = scalar_lea.vmem [#allocation2], 1
        %v1650 = vld [vmem:[%s1649] ss:$2 sm:$0xff]
        %s1651 = scalar_lea.vmem [#allocation2], 17
        %v1652 = vld [vmem:[%s1651] ss:$2 sm:$0xff]
        %s1653 = scalar_lea.vmem [#allocation2], 33
        %v1654 = vld [vmem:[%s1653] ss:$2 sm:$0xff]
        %s1655 = scalar_lea.vmem [#allocation2], 49
        %v1656 = vld [vmem:[%s1655] ss:$2 sm:$0xff]
        %s1657 = scalar_lea.vmem [#allocation2], 65
        %v1658 = vld [vmem:[%s1657] ss:$2 sm:$0xff]
        %s1659 = scalar_lea.vmem [#allocation2], 81
        %v1660 = vld [vmem:[%s1659] ss:$2 sm:$0xff]
        %s1661 = scalar_lea.vmem [#allocation2], 97
        %v1662 = vld [vmem:[%s1661] ss:$2 sm:$0xff]
        %s1663 = scalar_lea.vmem [#allocation2], 113
        %v1664 = vld [vmem:[%s1663] ss:$2 sm:$0xff]
        %s1665 = scalar_lea.vmem [#allocation2], 129
        %v1666 = vld [vmem:[%s1665] ss:$2 sm:$0xff]
        %s1667 = scalar_lea.vmem [#allocation2], 145
        %v1668 = vld [vmem:[%s1667] ss:$2 sm:$0xff]
        %s1669 = scalar_lea.vmem [#allocation2], 161
        %v1670 = vld [vmem:[%s1669] ss:$2 sm:$0xff]
        %s1671 = scalar_lea.vmem [#allocation2], 177
        %v1672 = vld [vmem:[%s1671] ss:$2 sm:$0xff]
        %s1673 = scalar_lea.vmem [#allocation2], 193
        %v1674 = vld [vmem:[%s1673] ss:$2 sm:$0xff]
        %s1675 = scalar_lea.vmem [#allocation2], 209
        %v1676 = vld [vmem:[%s1675] ss:$2 sm:$0xff]
        %s1677 = scalar_lea.vmem [#allocation2], 225
        %v1678 = vld [vmem:[%s1677] ss:$2 sm:$0xff]
        %s1679 = scalar_lea.vmem [#allocation2], 241
        %v1680 = vld [vmem:[%s1679] ss:$2 sm:$0xff]
        %s1681 = scalar_lea.vmem [#allocation2], 257
        %v1682 = vld [vmem:[%s1681] ss:$2 sm:$0xff]
        %s1683 = scalar_lea.vmem [#allocation2], 273
        %v1684 = vld [vmem:[%s1683] ss:$2 sm:$0xff]
        %s1685 = scalar_lea.vmem [#allocation2], 289
        %v1686 = vld [vmem:[%s1685] ss:$2 sm:$0xff]
        %s1687 = scalar_lea.vmem [#allocation2], 305
        %v1688 = vld [vmem:[%s1687] ss:$2 sm:$0xff]
        %s1689 = scalar_lea.vmem [#allocation2], 321
        %v1690 = vld [vmem:[%s1689] ss:$2 sm:$0xff]
        %s1691 = scalar_lea.vmem [#allocation2], 337
        %v1692 = vld [vmem:[%s1691] ss:$2 sm:$0xff]
        %s1693 = scalar_lea.vmem [#allocation2], 353
        %v1694 = vld [vmem:[%s1693] ss:$2 sm:$0xff]
        %s1695 = scalar_lea.vmem [#allocation2], 369
        %v1696 = vld [vmem:[%s1695] ss:$2 sm:$0xff]
        %s1697 = scalar_lea.vmem [#allocation2], 385
        %v1698 = vld [vmem:[%s1697] ss:$2 sm:$0xff]
        %s1699 = scalar_lea.vmem [#allocation2], 401
        %v1700 = vld [vmem:[%s1699] ss:$2 sm:$0xff]
        %s1701 = scalar_lea.vmem [#allocation2], 417
        %v1702 = vld [vmem:[%s1701] ss:$2 sm:$0xff]
        %s1703 = scalar_lea.vmem [#allocation2], 433
        %v1704 = vld [vmem:[%s1703] ss:$2 sm:$0xff]
        %v1705 = vmax.f32 %v1594, %v1650
        %v1706 = vmax.f32 %v1596, %v1652
        %v1707 = vmax.f32 %v1598, %v1654
        %v1708 = vmax.f32 %v1600, %v1656
        %v1709 = vmax.f32 %v1602, %v1658
        %v1710 = vmax.f32 %v1604, %v1660
        %v1711 = vmax.f32 %v1606, %v1662
        %v1712 = vmax.f32 %v1608, %v1664
        %v1713 = vmax.f32 %v1610, %v1666
        %v1714 = vmax.f32 %v1612, %v1668
        %v1715 = vmax.f32 %v1614, %v1670
        %v1716 = vmax.f32 %v1616, %v1672
        %v1717 = vmax.f32 %v1618, %v1674
        %v1718 = vmax.f32 %v1620, %v1676
        %v1719 = vmax.f32 %v1622, %v1678
        %v1720 = vmax.f32 %v1624, %v1680
        %v1721 = vmax.f32 %v1626, %v1682
        %v1722 = vmax.f32 %v1628, %v1684
        %v1723 = vmax.f32 %v1630, %v1686
        %v1724 = vmax.f32 %v1632, %v1688
        %v1725 = vmax.f32 %v1634, %v1690
        %v1726 = vmax.f32 %v1636, %v1692
        %v1727 = vmax.f32 %v1638, %v1694
        %v1728 = vmax.f32 %v1640, %v1696
        %v1729 = vmax.f32 %v1642, %v1698
        %v1730 = vmax.f32 %v1644, %v1700
        %v1731 = vmax.f32 %v1646, %v1702
        %v1732 = vmax.f32 %v1648, %v1704
        %1733 = vst.msk [vmem:[#allocation3] sm:$0xff] %vm1537, 0.0
        %1734 = vst.msk [vmem:[#allocation3 + $0x8] sm:$0xff] %vm1537, 0.0
        %1735 = vst.msk [vmem:[#allocation3 + $0x10] sm:$0xff] %vm1537, 0.0
        %1736 = vst.msk [vmem:[#allocation3 + $0x18] sm:$0xff] %vm1537, 0.0
        %1737 = vst.msk [vmem:[#allocation3 + $0x20] sm:$0xff] %vm1537, 0.0
        %1738 = vst.msk [vmem:[#allocation3 + $0x28] sm:$0xff] %vm1537, 0.0
        %1739 = vst.msk [vmem:[#allocation3 + $0x30] sm:$0xff] %vm1537, 0.0
        %1740 = vst.msk [vmem:[#allocation3 + $0x38] sm:$0xff] %vm1537, 0.0
        %1741 = vst.msk [vmem:[#allocation3 + $0x40] sm:$0xff] %vm1537, 0.0
        %1742 = vst.msk [vmem:[#allocation3 + $0x48] sm:$0xff] %vm1537, 0.0
        %1743 = vst.msk [vmem:[#allocation3 + $0x50] sm:$0xff] %vm1537, 0.0
        %1744 = vst.msk [vmem:[#allocation3 + $0x58] sm:$0xff] %vm1537, 0.0
        %1745 = vst.msk [vmem:[#allocation3 + $0x60] sm:$0xff] %vm1537, 0.0
        %1746 = vst.msk [vmem:[#allocation3 + $0x68] sm:$0xff] %vm1537, 0.0
        %1747 = vst.msk [vmem:[#allocation3 + $0x70] sm:$0xff] %vm1537, 0.0
        %1748 = vst.msk [vmem:[#allocation3 + $0x78] sm:$0xff] %vm1537, 0.0
        %1749 = vst.msk [vmem:[#allocation3 + $0x80] sm:$0xff] %vm1537, 0.0
        %1750 = vst.msk [vmem:[#allocation3 + $0x88] sm:$0xff] %vm1537, 0.0
        %1751 = vst.msk [vmem:[#allocation3 + $0x90] sm:$0xff] %vm1537, 0.0
        %1752 = vst.msk [vmem:[#allocation3 + $0x98] sm:$0xff] %vm1537, 0.0
        %1753 = vst.msk [vmem:[#allocation3 + $0xa0] sm:$0xff] %vm1537, 0.0
        %1754 = vst.msk [vmem:[#allocation3 + $0xa8] sm:$0xff] %vm1537, 0.0
        %1755 = vst.msk [vmem:[#allocation3 + $0xb0] sm:$0xff] %vm1537, 0.0
        %1756 = vst.msk [vmem:[#allocation3 + $0xb8] sm:$0xff] %vm1537, 0.0
        %1757 = vst.msk [vmem:[#allocation3 + $0xc0] sm:$0xff] %vm1537, 0.0
        %1758 = vst.msk [vmem:[#allocation3 + $0xc8] sm:$0xff] %vm1537, 0.0
        %1759 = vst.msk [vmem:[#allocation3 + $0xd0] sm:$0xff] %vm1537, 0.0
        %1760 = vst.msk [vmem:[#allocation3 + $0xd8] sm:$0xff] %vm1537, 0.0
        %1761 = vst.msk [vmem:[#allocation3 + $0xe0] sm:$0xff] %vm1537, 0.0
        %1762 = vst.msk [vmem:[#allocation3 + $0xe8] sm:$0xff] %vm1537, 0.0
        %1763 = vst.msk [vmem:[#allocation3 + $0xf0] sm:$0xff] %vm1537, 0.0
        %1764 = vst.msk [vmem:[#allocation3 + $0xf8] sm:$0xff] %vm1537, 0.0
        %1765 = vst.msk [vmem:[#allocation3 + $0x100] sm:$0xff] %vm1537, 0.0
        %1766 = vst.msk [vmem:[#allocation3 + $0x108] sm:$0xff] %vm1537, 0.0
        %s1767 = scalar_lea.vmem [#allocation3], 16
        %1768 = vst.msk [vmem:[%s1767 + $0x1] sm:$0xff] %vm1537, %v1705
        %vm1769 = vcmask 259072
        %1770 = vst.msk [vmem:[%s1767 + $0x9] sm:$0x3f] %vm1769, %v1706
        %1771 = vst.msk [vmem:[%s1767 + $0x11] sm:$0xff] %vm1537, %v1707
        %1772 = vst.msk [vmem:[%s1767 + $0x19] sm:$0x3f] %vm1769, %v1708
        %1773 = vst.msk [vmem:[%s1767 + $0x21] sm:$0xff] %vm1537, %v1709
        %1774 = vst.msk [vmem:[%s1767 + $0x29] sm:$0x3f] %vm1769, %v1710
        %1775 = vst.msk [vmem:[%s1767 + $0x31] sm:$0xff] %vm1537, %v1711
        %1776 = vst.msk [vmem:[%s1767 + $0x39] sm:$0x3f] %vm1769, %v1712
        %1777 = vst.msk [vmem:[%s1767 + $0x41] sm:$0xff] %vm1537, %v1713
        %1778 = vst.msk [vmem:[%s1767 + $0x49] sm:$0x3f] %vm1769, %v1714
        %1779 = vst.msk [vmem:[%s1767 + $0x51] sm:$0xff] %vm1537, %v1715
        %1780 = vst.msk [vmem:[%s1767 + $0x59] sm:$0x3f] %vm1769, %v1716
        %1781 = vst.msk [vmem:[%s1767 + $0x61] sm:$0xff] %vm1537, %v1717
        %1782 = vst.msk [vmem:[%s1767 + $0x69] sm:$0x3f] %vm1769, %v1718
        %1783 = vst.msk [vmem:[%s1767 + $0x71] sm:$0xff] %vm1537, %v1719
        %1784 = vst.msk [vmem:[%s1767 + $0x79] sm:$0x3f] %vm1769, %v1720
        %1785 = vst.msk [vmem:[%s1767 + $0x81] sm:$0xff] %vm1537, %v1721
        %1786 = vst.msk [vmem:[%s1767 + $0x89] sm:$0x3f] %vm1769, %v1722
        %1787 = vst.msk [vmem:[%s1767 + $0x91] sm:$0xff] %vm1537, %v1723
        %1788 = vst.msk [vmem:[%s1767 + $0x99] sm:$0x3f] %vm1769, %v1724
        %1789 = vst.msk [vmem:[%s1767 + $0xa1] sm:$0xff] %vm1537, %v1725
        %1790 = vst.msk [vmem:[%s1767 + $0xa9] sm:$0x3f] %vm1769, %v1726
        %1791 = vst.msk [vmem:[%s1767 + $0xb1] sm:$0xff] %vm1537, %v1727
        %1792 = vst.msk [vmem:[%s1767 + $0xb9] sm:$0x3f] %vm1769, %v1728
        %1793 = vst.msk [vmem:[%s1767 + $0xc1] sm:$0xff] %vm1537, %v1729
        %1794 = vst.msk [vmem:[%s1767 + $0xc9] sm:$0x3f] %vm1769, %v1730
        %1795 = vst.msk [vmem:[%s1767 + $0xd1] sm:$0xff] %vm1537, %v1731
        %1796 = vst.msk [vmem:[%s1767 + $0xd9] sm:$0x3f] %vm1769, %v1732
        %v1797 = vld [vmem:[#allocation3] sm:$0xff]
        %v1798 = vld [vmem:[#allocation3 + $0x8] sm:$0xff]
        %v1799 = vld [vmem:[#allocation3 + $0x10] sm:$0xff]
        %v1800 = vld [vmem:[#allocation3 + $0x18] sm:$0xff]
        %v1801 = vld [vmem:[#allocation3 + $0x20] sm:$0xff]
        %v1802 = vld [vmem:[#allocation3 + $0x28] sm:$0xff]
        %v1803 = vld [vmem:[#allocation3 + $0x30] sm:$0xff]
        %v1804 = vld [vmem:[#allocation3 + $0x38] sm:$0xff]
        %v1805 = vld [vmem:[#allocation3 + $0x40] sm:$0xff]
        %v1806 = vld [vmem:[#allocation3 + $0x48] sm:$0xff]
        %v1807 = vld [vmem:[#allocation3 + $0x50] sm:$0xff]
        %v1808 = vld [vmem:[#allocation3 + $0x58] sm:$0xff]
        %v1809 = vld [vmem:[#allocation3 + $0x60] sm:$0xff]
        %v1810 = vld [vmem:[#allocation3 + $0x68] sm:$0xff]
        %v1811 = vld [vmem:[#allocation3 + $0x70] sm:$0xff]
        %v1812 = vld [vmem:[#allocation3 + $0x78] sm:$0xff]
        %v1813 = vld [vmem:[#allocation3 + $0x80] sm:$0xff]
        %v1814 = vld [vmem:[#allocation3 + $0x88] sm:$0xff]
        %v1815 = vld [vmem:[#allocation3 + $0x90] sm:$0xff]
        %v1816 = vld [vmem:[#allocation3 + $0x98] sm:$0xff]
        %v1817 = vld [vmem:[#allocation3 + $0xa0] sm:$0xff]
        %v1818 = vld [vmem:[#allocation3 + $0xa8] sm:$0xff]
        %v1819 = vld [vmem:[#allocation3 + $0xb0] sm:$0xff]
        %v1820 = vld [vmem:[#allocation3 + $0xb8] sm:$0xff]
        %v1821 = vld [vmem:[#allocation3 + $0xc0] sm:$0xff]
        %v1822 = vld [vmem:[#allocation3 + $0xc8] sm:$0xff]
        %v1823 = vld [vmem:[#allocation3 + $0xd0] sm:$0xff]
        %v1824 = vld [vmem:[#allocation3 + $0xd8] sm:$0xff]
        %v1825 = vld [vmem:[#allocation3 + $0xe0] sm:$0xff]
        %v1826 = vld [vmem:[#allocation3 + $0xe8] sm:$0xff]
        %v1827 = vld [vmem:[#allocation3 + $0xf0] sm:$0xff]
        %v1828 = vld [vmem:[#allocation3 + $0xf8] sm:$0xff]
        %v1829 = vld [vmem:[#allocation3 + $0x100] sm:$0xff]
        %v1830 = vpack.c.bf16 %v1798, %v1797
        %v1831 = vpack.c.bf16 %v1800, %v1799
        %v1832 = vpack.c.bf16 %v1802, %v1801
        %v1833 = vpack.c.bf16 %v1804, %v1803
        %v1834 = vpack.c.bf16 %v1806, %v1805
        %v1835 = vpack.c.bf16 %v1808, %v1807
        %v1836 = vpack.c.bf16 %v1810, %v1809
        %v1837 = vpack.c.bf16 %v1812, %v1811
        %v1838 = vpack.c.bf16 %v1814, %v1813
        %v1839 = vpack.c.bf16 %v1816, %v1815
        %v1840 = vpack.c.bf16 %v1818, %v1817
        %v1841 = vpack.c.bf16 %v1820, %v1819
        %v1842 = vpack.c.bf16 %v1822, %v1821
        %v1843 = vpack.c.bf16 %v1824, %v1823
        %v1844 = vld [vmem:[%s3] sm:$0xf]
        %v1845 = vld [vmem:[%s3 + $0x4] sm:$0xf]
        %v1846 = vld [vmem:[%s3 + $0x8] sm:$0xf]
        %v1847 = vld [vmem:[%s3 + $0xc] sm:$0xf]
        %v1848 = vpack.c.bf16 %v1825, %v1825
        %s1849 = scalar_lea.vmem %s3, 16
        %v1850 = vld [vmem:[%s1849] sm:$0xf]
        %v1851 = vld [vmem:[%s1849 + $0x4] sm:$0xf]
        %v1852 = vld [vmem:[%s1849 + $0x8] sm:$0xf]
        %v1853 = vld [vmem:[%s1849 + $0xc] sm:$0xf]
        %vm1854 = vsmask.f32 7424
        %v1856 = vshrl.u32 %v1830, 16
        %v1858 = vshll.u32 %v1830, 16
        %v1860 = vrot.slane %v1858, 1
        %v1861 = vor.u32 %v1856, %v1860
        %v1863 = vshll.u32 %v1831, 16
        %v1865 = vrot.slane %v1863, 1
        %v1866 = vsel %vm1854, %v1861, %v1865
        %v1867 = vshrl.u32 %v1831, 16
        %v1869 = vor.u32 %v1867, %v1865
        %v1871 = vshll.u32 %v1832, 16
        %v1873 = vrot.slane %v1871, 1
        %v1874 = vsel %vm1854, %v1869, %v1873
        %v1875 = vshrl.u32 %v1832, 16
        %v1877 = vor.u32 %v1875, %v1873
        %v1879 = vshll.u32 %v1833, 16
        %v1881 = vrot.slane %v1879, 1
        %v1882 = vsel %vm1854, %v1877, %v1881
        %v1883 = vshrl.u32 %v1833, 16
        %v1885 = vor.u32 %v1883, %v1881
        %v1887 = vshll.u32 %v1834, 16
        %v1889 = vrot.slane %v1887, 1
        %v1890 = vsel %vm1854, %v1885, %v1889
        %v1891 = vshrl.u32 %v1834, 16
        %v1893 = vor.u32 %v1891, %v1889
        %v1895 = vshll.u32 %v1835, 16
        %v1897 = vrot.slane %v1895, 1
        %v1898 = vsel %vm1854, %v1893, %v1897
        %v1899 = vshrl.u32 %v1835, 16
        %v1901 = vor.u32 %v1899, %v1897
        %v1903 = vshll.u32 %v1836, 16
        %v1905 = vrot.slane %v1903, 1
        %v1906 = vsel %vm1854, %v1901, %v1905
        %v1907 = vshrl.u32 %v1836, 16
        %v1909 = vor.u32 %v1907, %v1905
        %v1911 = vshll.u32 %v1837, 16
        %v1913 = vrot.slane %v1911, 1
        %v1914 = vsel %vm1854, %v1909, %v1913
        %v1915 = vshrl.u32 %v1837, 16
        %v1917 = vor.u32 %v1915, %v1913
        %v1919 = vshll.u32 %v1838, 16
        %v1921 = vrot.slane %v1919, 1
        %v1922 = vsel %vm1854, %v1917, %v1921
        %v1923 = vshrl.u32 %v1838, 16
        %v1925 = vor.u32 %v1923, %v1921
        %v1927 = vshll.u32 %v1839, 16
        %v1929 = vrot.slane %v1927, 1
        %v1930 = vsel %vm1854, %v1925, %v1929
        %v1931 = vshrl.u32 %v1839, 16
        %v1933 = vor.u32 %v1931, %v1929
        %v1935 = vshll.u32 %v1840, 16
        %v1937 = vrot.slane %v1935, 1
        %v1938 = vsel %vm1854, %v1933, %v1937
        %v1939 = vshrl.u32 %v1840, 16
        %v1941 = vor.u32 %v1939, %v1937
        %v1943 = vshll.u32 %v1841, 16
        %v1945 = vrot.slane %v1943, 1
        %v1946 = vsel %vm1854, %v1941, %v1945
        %v1947 = vshrl.u32 %v1841, 16
        %v1949 = vor.u32 %v1947, %v1945
        %v1951 = vshll.u32 %v1842, 16
        %v1953 = vrot.slane %v1951, 1
        %v1954 = vsel %vm1854, %v1949, %v1953
        %v1955 = vshrl.u32 %v1842, 16
        %v1957 = vor.u32 %v1955, %v1953
        %v1959 = vshll.u32 %v1843, 16
        %v1961 = vrot.slane %v1959, 1
        %v1962 = vsel %vm1854, %v1957, %v1961
        %v1963 = vshrl.u32 %v1843, 16
        %v1965 = vor.u32 %v1963, %v1961
        %v1967 = vshll.u32 %v1848, 16
        %v1969 = vrot.slane %v1967, 1
        %v1970 = vsel %vm1854, %v1965, %v1969
        %v1975 = vunpack.c.l.b16 %v1850
        %v1976 = vunpack.c.l.b16 %v1851
        %v1977 = vunpack.c.l.b16 %v1852
        %v1978 = vunpack.c.l.b16 %v1853
        %v1979 = vpack.c.b16 %v1976, %v1975
        %v1980 = vpack.c.b16 %v1978, %v1977
        %v1984 = vsel %vm1537, %v1866, 0
        %v1987 = vsel %vm1537, %v1874, 0
        %v1990 = vsel %vm1537, %v1882, 0
        %v1993 = vsel %vm1537, %v1890, 0
        %v1996 = vsel %vm1537, %v1898, 0
        %v1999 = vsel %vm1537, %v1906, 0
        %v2002 = vsel %vm1537, %v1914, 0
        %v2005 = vsel %vm1537, %v1922, 0
        %v2008 = vsel %vm1537, %v1930, 0
        %v2011 = vsel %vm1537, %v1938, 0
        %v2014 = vsel %vm1537, %v1946, 0
        %v2017 = vsel %vm1537, %v1954, 0
        %v2020 = vsel %vm1537, %v1962, 0
        %v2023 = vsel %vm1537, %v1970, 0
        %2025 = vmatpush.bf16.msra.mxu0 0
        %2026 = vmatpush.bf16.msra.mxu0 0
        %2027 = vmatpush.bf16.msra.mxu0 0
        %2028 = vmatpush.bf16.msra.mxu0 0
        %2029 = vmatpush.bf16.msra.mxu0 0
        %2030 = vmatpush.bf16.msra.mxu0 0
        %2031 = vmatpush.bf16.msra.mxu0 %v1980
        %2032 = vmatpush.bf16.msra.mxu0 %v1979
        %2033 = vmatmul.bf16.gmra.mxu0 %v1984
        %v2034 = vpop.f32.mrf.mxu0
        %v2035 = vadd.f32 0.0, %v2034
        %v2036 = vpop.f32.mrf.mxu0
        %v2037 = vadd.f32 0.0, %v2036
        %2038 = vmatmul.bf16.gmra.mxu0 %v1987
        %v2039 = vpop.f32.mrf.mxu0
        %v2040 = vadd.f32 0.0, %v2039
        %v2041 = vpop.f32.mrf.mxu0
        %v2042 = vadd.f32 0.0, %v2041
        %2043 = vmatmul.bf16.gmra.mxu0 %v1990
        %v2044 = vpop.f32.mrf.mxu0
        %v2045 = vadd.f32 0.0, %v2044
        %v2046 = vpop.f32.mrf.mxu0
        %v2047 = vadd.f32 0.0, %v2046
        %2048 = vmatmul.bf16.gmra.mxu0 %v1993
        %v2049 = vpop.f32.mrf.mxu0
        %v2050 = vadd.f32 0.0, %v2049
        %v2051 = vpop.f32.mrf.mxu0
        %v2052 = vadd.f32 0.0, %v2051
        %2053 = vmatmul.bf16.gmra.mxu0 %v1996
        %v2054 = vpop.f32.mrf.mxu0
        %v2055 = vadd.f32 0.0, %v2054
        %v2056 = vpop.f32.mrf.mxu0
        %v2057 = vadd.f32 0.0, %v2056
        %2058 = vmatmul.bf16.gmra.mxu0 %v1999
        %v2059 = vpop.f32.mrf.mxu0
        %v2060 = vadd.f32 0.0, %v2059
        %v2061 = vpop.f32.mrf.mxu0
        %v2062 = vadd.f32 0.0, %v2061
        %2063 = vmatmul.bf16.gmra.mxu0 %v2002
        %v2064 = vpop.f32.mrf.mxu0
        %v2065 = vadd.f32 0.0, %v2064
        %v2066 = vpop.f32.mrf.mxu0
        %v2067 = vadd.f32 0.0, %v2066
        %2068 = vmatmul.bf16.gmra.mxu0 %v2005
        %v2069 = vpop.f32.mrf.mxu0
        %v2070 = vadd.f32 0.0, %v2069
        %v2071 = vpop.f32.mrf.mxu0
        %v2072 = vadd.f32 0.0, %v2071
        %2073 = vmatmul.bf16.gmra.mxu0 %v2008
        %v2074 = vpop.f32.mrf.mxu0
        %v2075 = vadd.f32 0.0, %v2074
        %v2076 = vpop.f32.mrf.mxu0
        %v2077 = vadd.f32 0.0, %v2076
        %2078 = vmatmul.bf16.gmra.mxu0 %v2011
        %v2079 = vpop.f32.mrf.mxu0
        %v2080 = vadd.f32 0.0, %v2079
        %v2081 = vpop.f32.mrf.mxu0
        %v2082 = vadd.f32 0.0, %v2081
        %2083 = vmatmul.bf16.gmra.mxu0 %v2014
        %v2084 = vpop.f32.mrf.mxu0
        %v2085 = vadd.f32 0.0, %v2084
        %v2086 = vpop.f32.mrf.mxu0
        %v2087 = vadd.f32 0.0, %v2086
        %2088 = vmatmul.bf16.gmra.mxu0 %v2017
        %v2089 = vpop.f32.mrf.mxu0
        %v2090 = vadd.f32 0.0, %v2089
        %v2091 = vpop.f32.mrf.mxu0
        %v2092 = vadd.f32 0.0, %v2091
        %2093 = vmatmul.bf16.gmra.mxu0 %v2020
        %v2094 = vpop.f32.mrf.mxu0
        %v2095 = vadd.f32 0.0, %v2094
        %v2096 = vpop.f32.mrf.mxu0
        %v2097 = vadd.f32 0.0, %v2096
        %2098 = vmatmul.bf16.gmra.mxu0 %v2023
        %v2099 = vpop.f32.mrf.mxu0
        %v2100 = vadd.f32 0.0, %v2099
        %v2101 = vpop.f32.mrf.mxu0
        %v2102 = vadd.f32 0.0, %v2101
        %2103 = vdwg.mxu0
        %v2108 = vunpack.c.l.b16 %v1844
        %v2109 = vunpack.c.l.b16 %v1845
        %v2110 = vunpack.c.l.b16 %v1846
        %v2111 = vunpack.c.l.b16 %v1847
        %v2112 = vpack.c.b16 %v2109, %v2108
        %v2113 = vpack.c.b16 %v2111, %v2110
        %v2116 = vsel %vm1537, %v1830, 0
        %v2118 = vsel %vm1537, %v1831, 0
        %v2120 = vsel %vm1537, %v1832, 0
        %v2122 = vsel %vm1537, %v1833, 0
        %v2124 = vsel %vm1537, %v1834, 0
        %v2126 = vsel %vm1537, %v1835, 0
        %v2128 = vsel %vm1537, %v1836, 0
        %v2130 = vsel %vm1537, %v1837, 0
        %v2132 = vsel %vm1537, %v1838, 0
        %v2134 = vsel %vm1537, %v1839, 0
        %v2136 = vsel %vm1537, %v1840, 0
        %v2138 = vsel %vm1537, %v1841, 0
        %v2140 = vsel %vm1537, %v1842, 0
        %v2142 = vsel %vm1537, %v1843, 0
        %2144 = vmatpush.bf16.msra.mxu0 0
        %2145 = vmatpush.bf16.msra.mxu0 0
        %2146 = vmatpush.bf16.msra.mxu0 0
        %2147 = vmatpush.bf16.msra.mxu0 0
        %2148 = vmatpush.bf16.msra.mxu0 0
        %2149 = vmatpush.bf16.msra.mxu0 0
        %2150 = vmatpush.bf16.msra.mxu0 %v2113
        %2151 = vmatpush.bf16.msra.mxu0 %v2112
        %2152 = vmatmul.bf16.gmra.mxu0 %v2116
        %v2153 = vpop.f32.mrf.mxu0
        %v2154 = vadd.f32 %v2035, %v2153
        %v2155 = vpop.f32.mrf.mxu0
        %v2156 = vadd.f32 %v2037, %v2155
        %2157 = vmatmul.bf16.gmra.mxu0 %v2118
        %v2158 = vpop.f32.mrf.mxu0
        %v2159 = vadd.f32 %v2040, %v2158
        %v2160 = vpop.f32.mrf.mxu0
        %v2161 = vadd.f32 %v2042, %v2160
        %2162 = vmatmul.bf16.gmra.mxu0 %v2120
        %v2163 = vpop.f32.mrf.mxu0
        %v2164 = vadd.f32 %v2045, %v2163
        %v2165 = vpop.f32.mrf.mxu0
        %v2166 = vadd.f32 %v2047, %v2165
        %2167 = vmatmul.bf16.gmra.mxu0 %v2122
        %v2168 = vpop.f32.mrf.mxu0
        %v2169 = vadd.f32 %v2050, %v2168
        %v2170 = vpop.f32.mrf.mxu0
        %v2171 = vadd.f32 %v2052, %v2170
        %2172 = vmatmul.bf16.gmra.mxu0 %v2124
        %v2173 = vpop.f32.mrf.mxu0
        %v2174 = vadd.f32 %v2055, %v2173
        %v2175 = vpop.f32.mrf.mxu0
        %v2176 = vadd.f32 %v2057, %v2175
        %2177 = vmatmul.bf16.gmra.mxu0 %v2126
        %v2178 = vpop.f32.mrf.mxu0
        %v2179 = vadd.f32 %v2060, %v2178
        %v2180 = vpop.f32.mrf.mxu0
        %v2181 = vadd.f32 %v2062, %v2180
        %2182 = vmatmul.bf16.gmra.mxu0 %v2128
        %v2183 = vpop.f32.mrf.mxu0
        %v2184 = vadd.f32 %v2065, %v2183
        %v2185 = vpop.f32.mrf.mxu0
        %v2186 = vadd.f32 %v2067, %v2185
        %2187 = vmatmul.bf16.gmra.mxu0 %v2130
        %v2188 = vpop.f32.mrf.mxu0
        %v2189 = vadd.f32 %v2070, %v2188
        %v2190 = vpop.f32.mrf.mxu0
        %v2191 = vadd.f32 %v2072, %v2190
        %2192 = vmatmul.bf16.gmra.mxu0 %v2132
        %v2193 = vpop.f32.mrf.mxu0
        %v2194 = vadd.f32 %v2075, %v2193
        %v2195 = vpop.f32.mrf.mxu0
        %v2196 = vadd.f32 %v2077, %v2195
        %2197 = vmatmul.bf16.gmra.mxu0 %v2134
        %v2198 = vpop.f32.mrf.mxu0
        %v2199 = vadd.f32 %v2080, %v2198
        %v2200 = vpop.f32.mrf.mxu0
        %v2201 = vadd.f32 %v2082, %v2200
        %2202 = vmatmul.bf16.gmra.mxu0 %v2136
        %v2203 = vpop.f32.mrf.mxu0
        %v2204 = vadd.f32 %v2085, %v2203
        %v2205 = vpop.f32.mrf.mxu0
        %v2206 = vadd.f32 %v2087, %v2205
        %2207 = vmatmul.bf16.gmra.mxu0 %v2138
        %v2208 = vpop.f32.mrf.mxu0
        %v2209 = vadd.f32 %v2090, %v2208
        %v2210 = vpop.f32.mrf.mxu0
        %v2211 = vadd.f32 %v2092, %v2210
        %2212 = vmatmul.bf16.gmra.mxu0 %v2140
        %v2213 = vpop.f32.mrf.mxu0
        %v2214 = vadd.f32 %v2095, %v2213
        %v2215 = vpop.f32.mrf.mxu0
        %v2216 = vadd.f32 %v2097, %v2215
        %2217 = vmatmul.bf16.gmra.mxu0 %v2142
        %v2218 = vpop.f32.mrf.mxu0
        %v2219 = vadd.f32 %v2100, %v2218
        %v2220 = vpop.f32.mrf.mxu0
        %v2221 = vadd.f32 %v2102, %v2220
        %2222 = vdwg.mxu0
        %s2223 = scalar_lea.vmem %s3, 32
        %v2224 = vld [vmem:[%s2223] sm:$0xf]
        %v2225 = vld [vmem:[%s2223 + $0x4] sm:$0xf]
        %v2226 = vld [vmem:[%s2223 + $0x8] sm:$0xf]
        %v2227 = vld [vmem:[%s2223 + $0xc] sm:$0xf]
        %vm2243 = vcmask 1046528
        %v2244 = vrot.slane %v1830, 1
        %v2245 = vrot.slane %v1831, 1
        %v2246 = vsel %vm2243, %v2244, %v2245
        %v2247 = vrot.slane %v1832, 1
        %v2248 = vsel %vm2243, %v2245, %v2247
        %v2249 = vrot.slane %v1833, 1
        %v2250 = vsel %vm2243, %v2247, %v2249
        %v2251 = vrot.slane %v1834, 1
        %v2252 = vsel %vm2243, %v2249, %v2251
        %v2253 = vrot.slane %v1835, 1
        %v2254 = vsel %vm2243, %v2251, %v2253
        %v2255 = vrot.slane %v1836, 1
        %v2256 = vsel %vm2243, %v2253, %v2255
        %v2257 = vrot.slane %v1837, 1
        %v2258 = vsel %vm2243, %v2255, %v2257
        %v2259 = vrot.slane %v1838, 1
        %v2260 = vsel %vm2243, %v2257, %v2259
        %v2261 = vrot.slane %v1839, 1
        %v2262 = vsel %vm2243, %v2259, %v2261
        %v2263 = vrot.slane %v1840, 1
        %v2264 = vsel %vm2243, %v2261, %v2263
        %v2265 = vrot.slane %v1841, 1
        %v2266 = vsel %vm2243, %v2263, %v2265
        %v2267 = vrot.slane %v1842, 1
        %v2268 = vsel %vm2243, %v2265, %v2267
        %v2269 = vrot.slane %v1843, 1
        %v2270 = vsel %vm2243, %v2267, %v2269
        %v2271 = vrot.slane %v1848, 1
        %v2272 = vsel %vm2243, %v2269, %v2271
        %v2277 = vunpack.c.l.b16 %v2224
        %v2278 = vunpack.c.l.b16 %v2225
        %v2279 = vunpack.c.l.b16 %v2226
        %v2280 = vunpack.c.l.b16 %v2227
        %v2281 = vpack.c.b16 %v2278, %v2277
        %v2282 = vpack.c.b16 %v2280, %v2279
        %v2286 = vsel %vm1537, %v2246, 0
        %v2289 = vsel %vm1537, %v2248, 0
        %v2292 = vsel %vm1537, %v2250, 0
        %v2295 = vsel %vm1537, %v2252, 0
        %v2298 = vsel %vm1537, %v2254, 0
        %v2301 = vsel %vm1537, %v2256, 0
        %v2304 = vsel %vm1537, %v2258, 0
        %v2307 = vsel %vm1537, %v2260, 0
        %v2310 = vsel %vm1537, %v2262, 0
        %v2313 = vsel %vm1537, %v2264, 0
        %v2316 = vsel %vm1537, %v2266, 0
        %v2319 = vsel %vm1537, %v2268, 0
        %v2322 = vsel %vm1537, %v2270, 0
        %v2325 = vsel %vm1537, %v2272, 0
        %2327 = vmatpush.bf16.msra.mxu0 0
        %2328 = vmatpush.bf16.msra.mxu0 0
        %2329 = vmatpush.bf16.msra.mxu0 0
        %2330 = vmatpush.bf16.msra.mxu0 0
        %2331 = vmatpush.bf16.msra.mxu0 0
        %2332 = vmatpush.bf16.msra.mxu0 0
        %2333 = vmatpush.bf16.msra.mxu0 %v2282
        %2334 = vmatpush.bf16.msra.mxu0 %v2281
        %2335 = vmatmul.bf16.gmra.mxu0 %v2286
        %v2336 = vpop.f32.mrf.mxu0
        %v2337 = vadd.f32 0.0, %v2336
        %v2338 = vpop.f32.mrf.mxu0
        %v2339 = vadd.f32 0.0, %v2338
        %2340 = vmatmul.bf16.gmra.mxu0 %v2289
        %v2341 = vpop.f32.mrf.mxu0
        %v2342 = vadd.f32 0.0, %v2341
        %v2343 = vpop.f32.mrf.mxu0
        %v2344 = vadd.f32 0.0, %v2343
        %2345 = vmatmul.bf16.gmra.mxu0 %v2292
        %v2346 = vpop.f32.mrf.mxu0
        %v2347 = vadd.f32 0.0, %v2346
        %v2348 = vpop.f32.mrf.mxu0
        %v2349 = vadd.f32 0.0, %v2348
        %2350 = vmatmul.bf16.gmra.mxu0 %v2295
        %v2351 = vpop.f32.mrf.mxu0
        %v2352 = vadd.f32 0.0, %v2351
        %v2353 = vpop.f32.mrf.mxu0
        %v2354 = vadd.f32 0.0, %v2353
        %2355 = vmatmul.bf16.gmra.mxu0 %v2298
        %v2356 = vpop.f32.mrf.mxu0
        %v2357 = vadd.f32 0.0, %v2356
        %v2358 = vpop.f32.mrf.mxu0
        %v2359 = vadd.f32 0.0, %v2358
        %2360 = vmatmul.bf16.gmra.mxu0 %v2301
        %v2361 = vpop.f32.mrf.mxu0
        %v2362 = vadd.f32 0.0, %v2361
        %v2363 = vpop.f32.mrf.mxu0
        %v2364 = vadd.f32 0.0, %v2363
        %2365 = vmatmul.bf16.gmra.mxu0 %v2304
        %v2366 = vpop.f32.mrf.mxu0
        %v2367 = vadd.f32 0.0, %v2366
        %v2368 = vpop.f32.mrf.mxu0
        %v2369 = vadd.f32 0.0, %v2368
        %2370 = vmatmul.bf16.gmra.mxu0 %v2307
        %v2371 = vpop.f32.mrf.mxu0
        %v2372 = vadd.f32 0.0, %v2371
        %v2373 = vpop.f32.mrf.mxu0
        %v2374 = vadd.f32 0.0, %v2373
        %2375 = vmatmul.bf16.gmra.mxu0 %v2310
        %v2376 = vpop.f32.mrf.mxu0
        %v2377 = vadd.f32 0.0, %v2376
        %v2378 = vpop.f32.mrf.mxu0
        %v2379 = vadd.f32 0.0, %v2378
        %2380 = vmatmul.bf16.gmra.mxu0 %v2313
        %v2381 = vpop.f32.mrf.mxu0
        %v2382 = vadd.f32 0.0, %v2381
        %v2383 = vpop.f32.mrf.mxu0
        %v2384 = vadd.f32 0.0, %v2383
        %2385 = vmatmul.bf16.gmra.mxu0 %v2316
        %v2386 = vpop.f32.mrf.mxu0
        %v2387 = vadd.f32 0.0, %v2386
        %v2388 = vpop.f32.mrf.mxu0
        %v2389 = vadd.f32 0.0, %v2388
        %2390 = vmatmul.bf16.gmra.mxu0 %v2319
        %v2391 = vpop.f32.mrf.mxu0
        %v2392 = vadd.f32 0.0, %v2391
        %v2393 = vpop.f32.mrf.mxu0
        %v2394 = vadd.f32 0.0, %v2393
        %2395 = vmatmul.bf16.gmra.mxu0 %v2322
        %v2396 = vpop.f32.mrf.mxu0
        %v2397 = vadd.f32 0.0, %v2396
        %v2398 = vpop.f32.mrf.mxu0
        %v2399 = vadd.f32 0.0, %v2398
        %2400 = vmatmul.bf16.gmra.mxu0 %v2325
        %v2401 = vpop.f32.mrf.mxu0
        %v2402 = vadd.f32 0.0, %v2401
        %v2403 = vpop.f32.mrf.mxu0
        %v2404 = vadd.f32 0.0, %v2403
        %2405 = vdwg.mxu0
        %v2406 = vadd.f32 %v2154, %v2337
        %v2407 = vadd.f32 %v2156, %v2339
        %v2408 = vadd.f32 %v2159, %v2342
        %v2409 = vadd.f32 %v2161, %v2344
        %v2410 = vadd.f32 %v2164, %v2347
        %v2411 = vadd.f32 %v2166, %v2349
        %v2412 = vadd.f32 %v2169, %v2352
        %v2413 = vadd.f32 %v2171, %v2354
        %v2414 = vadd.f32 %v2174, %v2357
        %v2415 = vadd.f32 %v2176, %v2359
        %v2416 = vadd.f32 %v2179, %v2362
        %v2417 = vadd.f32 %v2181, %v2364
        %v2418 = vadd.f32 %v2184, %v2367
        %v2419 = vadd.f32 %v2186, %v2369
        %v2420 = vadd.f32 %v2189, %v2372
        %v2421 = vadd.f32 %v2191, %v2374
        %v2422 = vadd.f32 %v2194, %v2377
        %v2423 = vadd.f32 %v2196, %v2379
        %v2424 = vadd.f32 %v2199, %v2382
        %v2425 = vadd.f32 %v2201, %v2384
        %v2426 = vadd.f32 %v2204, %v2387
        %v2427 = vadd.f32 %v2206, %v2389
        %v2428 = vadd.f32 %v2209, %v2392
        %v2429 = vadd.f32 %v2211, %v2394
        %v2430 = vadd.f32 %v2214, %v2397
        %v2431 = vadd.f32 %v2216, %v2399
        %v2432 = vadd.f32 %v2219, %v2402
        %v2433 = vadd.f32 %v2221, %v2404
        %v2434 = vpack.c.bf16 %v1826, %v1825
        %s2435 = scalar_lea.vmem %s3, 48
        %v2436 = vld [vmem:[%s2435] sm:$0xf]
        %v2437 = vld [vmem:[%s2435 + $0x4] sm:$0xf]
        %v2438 = vld [vmem:[%s2435 + $0x8] sm:$0xf]
        %v2439 = vld [vmem:[%s2435 + $0xc] sm:$0xf]
        %v2444 = vunpack.c.l.b16 %v2436
        %v2445 = vunpack.c.l.b16 %v2437
        %v2446 = vunpack.c.l.b16 %v2438
        %v2447 = vunpack.c.l.b16 %v2439
        %v2448 = vpack.c.b16 %v2445, %v2444
        %v2449 = vpack.c.b16 %v2447, %v2446
        %v2453 = vsel %vm1537, %v2434, 0
        %2455 = vmatpush.bf16.msra.mxu0 0
        %2456 = vmatpush.bf16.msra.mxu0 0
        %2457 = vmatpush.bf16.msra.mxu0 0
        %2458 = vmatpush.bf16.msra.mxu0 0
        %2459 = vmatpush.bf16.msra.mxu0 0
        %2460 = vmatpush.bf16.msra.mxu0 0
        %2461 = vmatpush.bf16.msra.mxu0 %v2449
        %2462 = vmatpush.bf16.msra.mxu0 %v2448
        %2463 = vmatmul.bf16.gmra.mxu0 %v2118
        %v2464 = vpop.f32.mrf.mxu0
        %v2465 = vadd.f32 0.0, %v2464
        %v2466 = vpop.f32.mrf.mxu0
        %v2467 = vadd.f32 0.0, %v2466
        %2468 = vmatmul.bf16.gmra.mxu0 %v2120
        %v2469 = vpop.f32.mrf.mxu0
        %v2470 = vadd.f32 0.0, %v2469
        %v2471 = vpop.f32.mrf.mxu0
        %v2472 = vadd.f32 0.0, %v2471
        %2473 = vmatmul.bf16.gmra.mxu0 %v2122
        %v2474 = vpop.f32.mrf.mxu0
        %v2475 = vadd.f32 0.0, %v2474
        %v2476 = vpop.f32.mrf.mxu0
        %v2477 = vadd.f32 0.0, %v2476
        %2478 = vmatmul.bf16.gmra.mxu0 %v2124
        %v2479 = vpop.f32.mrf.mxu0
        %v2480 = vadd.f32 0.0, %v2479
        %v2481 = vpop.f32.mrf.mxu0
        %v2482 = vadd.f32 0.0, %v2481
        %2483 = vmatmul.bf16.gmra.mxu0 %v2126
        %v2484 = vpop.f32.mrf.mxu0
        %v2485 = vadd.f32 0.0, %v2484
        %v2486 = vpop.f32.mrf.mxu0
        %v2487 = vadd.f32 0.0, %v2486
        %2488 = vmatmul.bf16.gmra.mxu0 %v2128
        %v2489 = vpop.f32.mrf.mxu0
        %v2490 = vadd.f32 0.0, %v2489
        %v2491 = vpop.f32.mrf.mxu0
        %v2492 = vadd.f32 0.0, %v2491
        %2493 = vmatmul.bf16.gmra.mxu0 %v2130
        %v2494 = vpop.f32.mrf.mxu0
        %v2495 = vadd.f32 0.0, %v2494
        %v2496 = vpop.f32.mrf.mxu0
        %v2497 = vadd.f32 0.0, %v2496
        %2498 = vmatmul.bf16.gmra.mxu0 %v2132
        %v2499 = vpop.f32.mrf.mxu0
        %v2500 = vadd.f32 0.0, %v2499
        %v2501 = vpop.f32.mrf.mxu0
        %v2502 = vadd.f32 0.0, %v2501
        %2503 = vmatmul.bf16.gmra.mxu0 %v2134
        %v2504 = vpop.f32.mrf.mxu0
        %v2505 = vadd.f32 0.0, %v2504
        %v2506 = vpop.f32.mrf.mxu0
        %v2507 = vadd.f32 0.0, %v2506
        %2508 = vmatmul.bf16.gmra.mxu0 %v2136
        %v2509 = vpop.f32.mrf.mxu0
        %v2510 = vadd.f32 0.0, %v2509
        %v2511 = vpop.f32.mrf.mxu0
        %v2512 = vadd.f32 0.0, %v2511
        %2513 = vmatmul.bf16.gmra.mxu0 %v2138
        %v2514 = vpop.f32.mrf.mxu0
        %v2515 = vadd.f32 0.0, %v2514
        %v2516 = vpop.f32.mrf.mxu0
        %v2517 = vadd.f32 0.0, %v2516
        %2518 = vmatmul.bf16.gmra.mxu0 %v2140
        %v2519 = vpop.f32.mrf.mxu0
        %v2520 = vadd.f32 0.0, %v2519
        %v2521 = vpop.f32.mrf.mxu0
        %v2522 = vadd.f32 0.0, %v2521
        %2523 = vmatmul.bf16.gmra.mxu0 %v2142
        %v2524 = vpop.f32.mrf.mxu0
        %v2525 = vadd.f32 0.0, %v2524
        %v2526 = vpop.f32.mrf.mxu0
        %v2527 = vadd.f32 0.0, %v2526
        %2528 = vmatmul.bf16.gmra.mxu0 %v2453
        %v2529 = vpop.f32.mrf.mxu0
        %v2530 = vadd.f32 0.0, %v2529
        %v2531 = vpop.f32.mrf.mxu0
        %v2532 = vadd.f32 0.0, %v2531
        %2533 = vdwg.mxu0
        %v2534 = vadd.f32 %v2406, %v2465
        %v2535 = vadd.f32 %v2407, %v2467
        %v2536 = vadd.f32 %v2408, %v2470
        %v2537 = vadd.f32 %v2409, %v2472
        %v2538 = vadd.f32 %v2410, %v2475
        %v2539 = vadd.f32 %v2411, %v2477
        %v2540 = vadd.f32 %v2412, %v2480
        %v2541 = vadd.f32 %v2413, %v2482
        %v2542 = vadd.f32 %v2414, %v2485
        %v2543 = vadd.f32 %v2415, %v2487
        %v2544 = vadd.f32 %v2416, %v2490
        %v2545 = vadd.f32 %v2417, %v2492
        %v2546 = vadd.f32 %v2418, %v2495
        %v2547 = vadd.f32 %v2419, %v2497
        %v2548 = vadd.f32 %v2420, %v2500
        %v2549 = vadd.f32 %v2421, %v2502
        %v2550 = vadd.f32 %v2422, %v2505
        %v2551 = vadd.f32 %v2423, %v2507
        %v2552 = vadd.f32 %v2424, %v2510
        %v2553 = vadd.f32 %v2425, %v2512
        %v2554 = vadd.f32 %v2426, %v2515
        %v2555 = vadd.f32 %v2427, %v2517
        %v2556 = vadd.f32 %v2428, %v2520
        %v2557 = vadd.f32 %v2429, %v2522
        %v2558 = vadd.f32 %v2430, %v2525
        %v2559 = vadd.f32 %v2431, %v2527
        %v2560 = vadd.f32 %v2432, %v2530
        %v2561 = vadd.f32 %v2433, %v2532
        %v2562 = vpack.c.bf16 %v1827, %v1827
        %s2563 = scalar_lea.vmem %s3, 64
        %v2564 = vld [vmem:[%s2563] sm:$0xf]
        %v2565 = vld [vmem:[%s2563 + $0x4] sm:$0xf]
        %v2566 = vld [vmem:[%s2563 + $0x8] sm:$0xf]
        %v2567 = vld [vmem:[%s2563 + $0xc] sm:$0xf]
        %v2568 = vshll.u32 %v2434, 16
        %v2570 = vrot.slane %v2568, 1
        %v2571 = vsel %vm1854, %v1965, %v2570
        %v2572 = vshrl.u32 %v2434, 16
        %v2574 = vor.u32 %v2572, %v2570
        %v2576 = vshll.u32 %v2562, 16
        %v2578 = vrot.slane %v2576, 1
        %v2579 = vsel %vm1854, %v2574, %v2578
        %v2584 = vunpack.c.l.b16 %v2564
        %v2585 = vunpack.c.l.b16 %v2565
        %v2586 = vunpack.c.l.b16 %v2566
        %v2587 = vunpack.c.l.b16 %v2567
        %v2588 = vpack.c.b16 %v2585, %v2584
        %v2589 = vpack.c.b16 %v2587, %v2586
        %v2593 = vsel %vm1537, %v2571, 0
        %v2596 = vsel %vm1537, %v2579, 0
        %2598 = vmatpush.bf16.msra.mxu0 0
        %2599 = vmatpush.bf16.msra.mxu0 0
        %2600 = vmatpush.bf16.msra.mxu0 0
        %2601 = vmatpush.bf16.msra.mxu0 0
        %2602 = vmatpush.bf16.msra.mxu0 0
        %2603 = vmatpush.bf16.msra.mxu0 0
        %2604 = vmatpush.bf16.msra.mxu0 %v2589
        %2605 = vmatpush.bf16.msra.mxu0 %v2588
        %2606 = vmatmul.bf16.gmra.mxu0 %v1987
        %v2607 = vpop.f32.mrf.mxu0
        %v2608 = vadd.f32 0.0, %v2607
        %v2609 = vpop.f32.mrf.mxu0
        %v2610 = vadd.f32 0.0, %v2609
        %2611 = vmatmul.bf16.gmra.mxu0 %v1990
        %v2612 = vpop.f32.mrf.mxu0
        %v2613 = vadd.f32 0.0, %v2612
        %v2614 = vpop.f32.mrf.mxu0
        %v2615 = vadd.f32 0.0, %v2614
        %2616 = vmatmul.bf16.gmra.mxu0 %v1993
        %v2617 = vpop.f32.mrf.mxu0
        %v2618 = vadd.f32 0.0, %v2617
        %v2619 = vpop.f32.mrf.mxu0
        %v2620 = vadd.f32 0.0, %v2619
        %2621 = vmatmul.bf16.gmra.mxu0 %v1996
        %v2622 = vpop.f32.mrf.mxu0
        %v2623 = vadd.f32 0.0, %v2622
        %v2624 = vpop.f32.mrf.mxu0
        %v2625 = vadd.f32 0.0, %v2624
        %2626 = vmatmul.bf16.gmra.mxu0 %v1999
        %v2627 = vpop.f32.mrf.mxu0
        %v2628 = vadd.f32 0.0, %v2627
        %v2629 = vpop.f32.mrf.mxu0
        %v2630 = vadd.f32 0.0, %v2629
        %2631 = vmatmul.bf16.gmra.mxu0 %v2002
        %v2632 = vpop.f32.mrf.mxu0
        %v2633 = vadd.f32 0.0, %v2632
        %v2634 = vpop.f32.mrf.mxu0
        %v2635 = vadd.f32 0.0, %v2634
        %2636 = vmatmul.bf16.gmra.mxu0 %v2005
        %v2637 = vpop.f32.mrf.mxu0
        %v2638 = vadd.f32 0.0, %v2637
        %v2639 = vpop.f32.mrf.mxu0
        %v2640 = vadd.f32 0.0, %v2639
        %2641 = vmatmul.bf16.gmra.mxu0 %v2008
        %v2642 = vpop.f32.mrf.mxu0
        %v2643 = vadd.f32 0.0, %v2642
        %v2644 = vpop.f32.mrf.mxu0
        %v2645 = vadd.f32 0.0, %v2644
        %2646 = vmatmul.bf16.gmra.mxu0 %v2011
        %v2647 = vpop.f32.mrf.mxu0
        %v2648 = vadd.f32 0.0, %v2647
        %v2649 = vpop.f32.mrf.mxu0
        %v2650 = vadd.f32 0.0, %v2649
        %2651 = vmatmul.bf16.gmra.mxu0 %v2014
        %v2652 = vpop.f32.mrf.mxu0
        %v2653 = vadd.f32 0.0, %v2652
        %v2654 = vpop.f32.mrf.mxu0
        %v2655 = vadd.f32 0.0, %v2654
        %2656 = vmatmul.bf16.gmra.mxu0 %v2017
        %v2657 = vpop.f32.mrf.mxu0
        %v2658 = vadd.f32 0.0, %v2657
        %v2659 = vpop.f32.mrf.mxu0
        %v2660 = vadd.f32 0.0, %v2659
        %2661 = vmatmul.bf16.gmra.mxu0 %v2020
        %v2662 = vpop.f32.mrf.mxu0
        %v2663 = vadd.f32 0.0, %v2662
        %v2664 = vpop.f32.mrf.mxu0
        %v2665 = vadd.f32 0.0, %v2664
        %2666 = vmatmul.bf16.gmra.mxu0 %v2593
        %v2667 = vpop.f32.mrf.mxu0
        %v2668 = vadd.f32 0.0, %v2667
        %v2669 = vpop.f32.mrf.mxu0
        %v2670 = vadd.f32 0.0, %v2669
        %2671 = vmatmul.bf16.gmra.mxu0 %v2596
        %v2672 = vpop.f32.mrf.mxu0
        %v2673 = vadd.f32 0.0, %v2672
        %v2674 = vpop.f32.mrf.mxu0
        %v2675 = vadd.f32 0.0, %v2674
        %2676 = vdwg.mxu0
        %v2677 = vadd.f32 %v2534, %v2608
        %v2678 = vadd.f32 %v2535, %v2610
        %v2679 = vadd.f32 %v2536, %v2613
        %v2680 = vadd.f32 %v2537, %v2615
        %v2681 = vadd.f32 %v2538, %v2618
        %v2682 = vadd.f32 %v2539, %v2620
        %v2683 = vadd.f32 %v2540, %v2623
        %v2684 = vadd.f32 %v2541, %v2625
        %v2685 = vadd.f32 %v2542, %v2628
        %v2686 = vadd.f32 %v2543, %v2630
        %v2687 = vadd.f32 %v2544, %v2633
        %v2688 = vadd.f32 %v2545, %v2635
        %v2689 = vadd.f32 %v2546, %v2638
        %v2690 = vadd.f32 %v2547, %v2640
        %v2691 = vadd.f32 %v2548, %v2643
        %v2692 = vadd.f32 %v2549, %v2645
        %v2693 = vadd.f32 %v2550, %v2648
        %v2694 = vadd.f32 %v2551, %v2650
        %v2695 = vadd.f32 %v2552, %v2653
        %v2696 = vadd.f32 %v2553, %v2655
        %v2697 = vadd.f32 %v2554, %v2658
        %v2698 = vadd.f32 %v2555, %v2660
        %v2699 = vadd.f32 %v2556, %v2663
        %v2700 = vadd.f32 %v2557, %v2665
        %v2701 = vadd.f32 %v2558, %v2668
        %v2702 = vadd.f32 %v2559, %v2670
        %v2703 = vadd.f32 %v2560, %v2673
        %v2704 = vadd.f32 %v2561, %v2675
        %s2705 = scalar_lea.vmem %s3, 80
        %v2706 = vld [vmem:[%s2705] sm:$0xf]
        %v2707 = vld [vmem:[%s2705 + $0x4] sm:$0xf]
        %v2708 = vld [vmem:[%s2705 + $0x8] sm:$0xf]
        %v2709 = vld [vmem:[%s2705 + $0xc] sm:$0xf]
        %v2712 = vrot.slane %v2434, 1
        %v2713 = vsel %vm2243, %v2269, %v2712
        %v2714 = vrot.slane %v2562, 1
        %v2715 = vsel %vm2243, %v2712, %v2714
        %v2720 = vunpack.c.l.b16 %v2706
        %v2721 = vunpack.c.l.b16 %v2707
        %v2722 = vunpack.c.l.b16 %v2708
        %v2723 = vunpack.c.l.b16 %v2709
        %v2724 = vpack.c.b16 %v2721, %v2720
        %v2725 = vpack.c.b16 %v2723, %v2722
        %v2729 = vsel %vm1537, %v2713, 0
        %v2732 = vsel %vm1537, %v2715, 0
        %2734 = vmatpush.bf16.msra.mxu0 0
        %2735 = vmatpush.bf16.msra.mxu0 0
        %2736 = vmatpush.bf16.msra.mxu0 0
        %2737 = vmatpush.bf16.msra.mxu0 0
        %2738 = vmatpush.bf16.msra.mxu0 0
        %2739 = vmatpush.bf16.msra.mxu0 0
        %2740 = vmatpush.bf16.msra.mxu0 %v2725
        %2741 = vmatpush.bf16.msra.mxu0 %v2724
        %2742 = vmatmul.bf16.gmra.mxu0 %v2289
        %v2743 = vpop.f32.mrf.mxu0
        %v2744 = vadd.f32 0.0, %v2743
        %v2745 = vpop.f32.mrf.mxu0
        %v2746 = vadd.f32 0.0, %v2745
        %2747 = vmatmul.bf16.gmra.mxu0 %v2292
        %v2748 = vpop.f32.mrf.mxu0
        %v2749 = vadd.f32 0.0, %v2748
        %v2750 = vpop.f32.mrf.mxu0
        %v2751 = vadd.f32 0.0, %v2750
        %2752 = vmatmul.bf16.gmra.mxu0 %v2295
        %v2753 = vpop.f32.mrf.mxu0
        %v2754 = vadd.f32 0.0, %v2753
        %v2755 = vpop.f32.mrf.mxu0
        %v2756 = vadd.f32 0.0, %v2755
        %2757 = vmatmul.bf16.gmra.mxu0 %v2298
        %v2758 = vpop.f32.mrf.mxu0
        %v2759 = vadd.f32 0.0, %v2758
        %v2760 = vpop.f32.mrf.mxu0
        %v2761 = vadd.f32 0.0, %v2760
        %2762 = vmatmul.bf16.gmra.mxu0 %v2301
        %v2763 = vpop.f32.mrf.mxu0
        %v2764 = vadd.f32 0.0, %v2763
        %v2765 = vpop.f32.mrf.mxu0
        %v2766 = vadd.f32 0.0, %v2765
        %2767 = vmatmul.bf16.gmra.mxu0 %v2304
        %v2768 = vpop.f32.mrf.mxu0
        %v2769 = vadd.f32 0.0, %v2768
        %v2770 = vpop.f32.mrf.mxu0
        %v2771 = vadd.f32 0.0, %v2770
        %2772 = vmatmul.bf16.gmra.mxu0 %v2307
        %v2773 = vpop.f32.mrf.mxu0
        %v2774 = vadd.f32 0.0, %v2773
        %v2775 = vpop.f32.mrf.mxu0
        %v2776 = vadd.f32 0.0, %v2775
        %2777 = vmatmul.bf16.gmra.mxu0 %v2310
        %v2778 = vpop.f32.mrf.mxu0
        %v2779 = vadd.f32 0.0, %v2778
        %v2780 = vpop.f32.mrf.mxu0
        %v2781 = vadd.f32 0.0, %v2780
        %2782 = vmatmul.bf16.gmra.mxu0 %v2313
        %v2783 = vpop.f32.mrf.mxu0
        %v2784 = vadd.f32 0.0, %v2783
        %v2785 = vpop.f32.mrf.mxu0
        %v2786 = vadd.f32 0.0, %v2785
        %2787 = vmatmul.bf16.gmra.mxu0 %v2316
        %v2788 = vpop.f32.mrf.mxu0
        %v2789 = vadd.f32 0.0, %v2788
        %v2790 = vpop.f32.mrf.mxu0
        %v2791 = vadd.f32 0.0, %v2790
        %2792 = vmatmul.bf16.gmra.mxu0 %v2319
        %v2793 = vpop.f32.mrf.mxu0
        %v2794 = vadd.f32 0.0, %v2793
        %v2795 = vpop.f32.mrf.mxu0
        %v2796 = vadd.f32 0.0, %v2795
        %2797 = vmatmul.bf16.gmra.mxu0 %v2322
        %v2798 = vpop.f32.mrf.mxu0
        %v2799 = vadd.f32 0.0, %v2798
        %v2800 = vpop.f32.mrf.mxu0
        %v2801 = vadd.f32 0.0, %v2800
        %2802 = vmatmul.bf16.gmra.mxu0 %v2729
        %v2803 = vpop.f32.mrf.mxu0
        %v2804 = vadd.f32 0.0, %v2803
        %v2805 = vpop.f32.mrf.mxu0
        %v2806 = vadd.f32 0.0, %v2805
        %2807 = vmatmul.bf16.gmra.mxu0 %v2732
        %v2808 = vpop.f32.mrf.mxu0
        %v2809 = vadd.f32 0.0, %v2808
        %v2810 = vpop.f32.mrf.mxu0
        %v2811 = vadd.f32 0.0, %v2810
        %2812 = vdwg.mxu0
        %v2813 = vadd.f32 %v2677, %v2744
        %v2814 = vadd.f32 %v2678, %v2746
        %v2815 = vadd.f32 %v2679, %v2749
        %v2816 = vadd.f32 %v2680, %v2751
        %v2817 = vadd.f32 %v2681, %v2754
        %v2818 = vadd.f32 %v2682, %v2756
        %v2819 = vadd.f32 %v2683, %v2759
        %v2820 = vadd.f32 %v2684, %v2761
        %v2821 = vadd.f32 %v2685, %v2764
        %v2822 = vadd.f32 %v2686, %v2766
        %v2823 = vadd.f32 %v2687, %v2769
        %v2824 = vadd.f32 %v2688, %v2771
        %v2825 = vadd.f32 %v2689, %v2774
        %v2826 = vadd.f32 %v2690, %v2776
        %v2827 = vadd.f32 %v2691, %v2779
        %v2828 = vadd.f32 %v2692, %v2781
        %v2829 = vadd.f32 %v2693, %v2784
        %v2830 = vadd.f32 %v2694, %v2786
        %v2831 = vadd.f32 %v2695, %v2789
        %v2832 = vadd.f32 %v2696, %v2791
        %v2833 = vadd.f32 %v2697, %v2794
        %v2834 = vadd.f32 %v2698, %v2796
        %v2835 = vadd.f32 %v2699, %v2799
        %v2836 = vadd.f32 %v2700, %v2801
        %v2837 = vadd.f32 %v2701, %v2804
        %v2838 = vadd.f32 %v2702, %v2806
        %v2839 = vadd.f32 %v2703, %v2809
        %v2840 = vadd.f32 %v2704, %v2811
        %v2841 = vpack.c.bf16 %v1828, %v1827
        %s2842 = scalar_lea.vmem %s3, 96
        %v2843 = vld [vmem:[%s2842] sm:$0xf]
        %v2844 = vld [vmem:[%s2842 + $0x4] sm:$0xf]
        %v2845 = vld [vmem:[%s2842 + $0x8] sm:$0xf]
        %v2846 = vld [vmem:[%s2842 + $0xc] sm:$0xf]
        %v2851 = vunpack.c.l.b16 %v2843
        %v2852 = vunpack.c.l.b16 %v2844
        %v2853 = vunpack.c.l.b16 %v2845
        %v2854 = vunpack.c.l.b16 %v2846
        %v2855 = vpack.c.b16 %v2852, %v2851
        %v2856 = vpack.c.b16 %v2854, %v2853
        %v2860 = vsel %vm1537, %v2841, 0
        %2862 = vmatpush.bf16.msra.mxu0 0
        %2863 = vmatpush.bf16.msra.mxu0 0
        %2864 = vmatpush.bf16.msra.mxu0 0
        %2865 = vmatpush.bf16.msra.mxu0 0
        %2866 = vmatpush.bf16.msra.mxu0 0
        %2867 = vmatpush.bf16.msra.mxu0 0
        %2868 = vmatpush.bf16.msra.mxu0 %v2856
        %2869 = vmatpush.bf16.msra.mxu0 %v2855
        %2870 = vmatmul.bf16.gmra.mxu0 %v2120
        %v2871 = vpop.f32.mrf.mxu0
        %v2872 = vadd.f32 0.0, %v2871
        %v2873 = vpop.f32.mrf.mxu0
        %v2874 = vadd.f32 0.0, %v2873
        %2875 = vmatmul.bf16.gmra.mxu0 %v2122
        %v2876 = vpop.f32.mrf.mxu0
        %v2877 = vadd.f32 0.0, %v2876
        %v2878 = vpop.f32.mrf.mxu0
        %v2879 = vadd.f32 0.0, %v2878
        %2880 = vmatmul.bf16.gmra.mxu0 %v2124
        %v2881 = vpop.f32.mrf.mxu0
        %v2882 = vadd.f32 0.0, %v2881
        %v2883 = vpop.f32.mrf.mxu0
        %v2884 = vadd.f32 0.0, %v2883
        %2885 = vmatmul.bf16.gmra.mxu0 %v2126
        %v2886 = vpop.f32.mrf.mxu0
        %v2887 = vadd.f32 0.0, %v2886
        %v2888 = vpop.f32.mrf.mxu0
        %v2889 = vadd.f32 0.0, %v2888
        %2890 = vmatmul.bf16.gmra.mxu0 %v2128
        %v2891 = vpop.f32.mrf.mxu0
        %v2892 = vadd.f32 0.0, %v2891
        %v2893 = vpop.f32.mrf.mxu0
        %v2894 = vadd.f32 0.0, %v2893
        %2895 = vmatmul.bf16.gmra.mxu0 %v2130
        %v2896 = vpop.f32.mrf.mxu0
        %v2897 = vadd.f32 0.0, %v2896
        %v2898 = vpop.f32.mrf.mxu0
        %v2899 = vadd.f32 0.0, %v2898
        %2900 = vmatmul.bf16.gmra.mxu0 %v2132
        %v2901 = vpop.f32.mrf.mxu0
        %v2902 = vadd.f32 0.0, %v2901
        %v2903 = vpop.f32.mrf.mxu0
        %v2904 = vadd.f32 0.0, %v2903
        %2905 = vmatmul.bf16.gmra.mxu0 %v2134
        %v2906 = vpop.f32.mrf.mxu0
        %v2907 = vadd.f32 0.0, %v2906
        %v2908 = vpop.f32.mrf.mxu0
        %v2909 = vadd.f32 0.0, %v2908
        %2910 = vmatmul.bf16.gmra.mxu0 %v2136
        %v2911 = vpop.f32.mrf.mxu0
        %v2912 = vadd.f32 0.0, %v2911
        %v2913 = vpop.f32.mrf.mxu0
        %v2914 = vadd.f32 0.0, %v2913
        %2915 = vmatmul.bf16.gmra.mxu0 %v2138
        %v2916 = vpop.f32.mrf.mxu0
        %v2917 = vadd.f32 0.0, %v2916
        %v2918 = vpop.f32.mrf.mxu0
        %v2919 = vadd.f32 0.0, %v2918
        %2920 = vmatmul.bf16.gmra.mxu0 %v2140
        %v2921 = vpop.f32.mrf.mxu0
        %v2922 = vadd.f32 0.0, %v2921
        %v2923 = vpop.f32.mrf.mxu0
        %v2924 = vadd.f32 0.0, %v2923
        %2925 = vmatmul.bf16.gmra.mxu0 %v2142
        %v2926 = vpop.f32.mrf.mxu0
        %v2927 = vadd.f32 0.0, %v2926
        %v2928 = vpop.f32.mrf.mxu0
        %v2929 = vadd.f32 0.0, %v2928
        %2930 = vmatmul.bf16.gmra.mxu0 %v2453
        %v2931 = vpop.f32.mrf.mxu0
        %v2932 = vadd.f32 0.0, %v2931
        %v2933 = vpop.f32.mrf.mxu0
        %v2934 = vadd.f32 0.0, %v2933
        %2935 = vmatmul.bf16.gmra.mxu0 %v2860
        %v2936 = vpop.f32.mrf.mxu0
        %v2937 = vadd.f32 0.0, %v2936
        %v2938 = vpop.f32.mrf.mxu0
        %v2939 = vadd.f32 0.0, %v2938
        %2940 = vdwg.mxu0
        %v2941 = vadd.f32 %v2813, %v2872
        %v2942 = vadd.f32 %v2814, %v2874
        %v2943 = vadd.f32 %v2815, %v2877
        %v2944 = vadd.f32 %v2816, %v2879
        %v2945 = vadd.f32 %v2817, %v2882
        %v2946 = vadd.f32 %v2818, %v2884
        %v2947 = vadd.f32 %v2819, %v2887
        %v2948 = vadd.f32 %v2820, %v2889
        %v2949 = vadd.f32 %v2821, %v2892
        %v2950 = vadd.f32 %v2822, %v2894
        %v2951 = vadd.f32 %v2823, %v2897
        %v2952 = vadd.f32 %v2824, %v2899
        %v2953 = vadd.f32 %v2825, %v2902
        %v2954 = vadd.f32 %v2826, %v2904
        %v2955 = vadd.f32 %v2827, %v2907
        %v2956 = vadd.f32 %v2828, %v2909
        %v2957 = vadd.f32 %v2829, %v2912
        %v2958 = vadd.f32 %v2830, %v2914
        %v2959 = vadd.f32 %v2831, %v2917
        %v2960 = vadd.f32 %v2832, %v2919
        %v2961 = vadd.f32 %v2833, %v2922
        %v2962 = vadd.f32 %v2834, %v2924
        %v2963 = vadd.f32 %v2835, %v2927
        %v2964 = vadd.f32 %v2836, %v2929
        %v2965 = vadd.f32 %v2837, %v2932
        %v2966 = vadd.f32 %v2838, %v2934
        %v2967 = vadd.f32 %v2839, %v2937
        %v2968 = vadd.f32 %v2840, %v2939
        %v2969 = vpack.c.bf16 %v1829, %v1829
        %s2970 = scalar_lea.vmem %s3, 112
        %v2971 = vld [vmem:[%s2970] sm:$0xf]
        %v2972 = vld [vmem:[%s2970 + $0x4] sm:$0xf]
        %v2973 = vld [vmem:[%s2970 + $0x8] sm:$0xf]
        %v2974 = vld [vmem:[%s2970 + $0xc] sm:$0xf]
        %v2975 = vshll.u32 %v2841, 16
        %v2977 = vrot.slane %v2975, 1
        %v2978 = vsel %vm1854, %v2574, %v2977
        %v2979 = vshrl.u32 %v2841, 16
        %v2981 = vor.u32 %v2979, %v2977
        %v2983 = vshll.u32 %v2969, 16
        %v2985 = vrot.slane %v2983, 1
        %v2986 = vsel %vm1854, %v2981, %v2985
        %v2991 = vunpack.c.l.b16 %v2971
        %v2992 = vunpack.c.l.b16 %v2972
        %v2993 = vunpack.c.l.b16 %v2973
        %v2994 = vunpack.c.l.b16 %v2974
        %v2995 = vpack.c.b16 %v2992, %v2991
        %v2996 = vpack.c.b16 %v2994, %v2993
        %v3000 = vsel %vm1537, %v2978, 0
        %v3003 = vsel %vm1537, %v2986, 0
        %3005 = vmatpush.bf16.msra.mxu0 0
        %3006 = vmatpush.bf16.msra.mxu0 0
        %3007 = vmatpush.bf16.msra.mxu0 0
        %3008 = vmatpush.bf16.msra.mxu0 0
        %3009 = vmatpush.bf16.msra.mxu0 0
        %3010 = vmatpush.bf16.msra.mxu0 0
        %3011 = vmatpush.bf16.msra.mxu0 %v2996
        %3012 = vmatpush.bf16.msra.mxu0 %v2995
        %3013 = vmatmul.bf16.gmra.mxu0 %v1990
        %v3014 = vpop.f32.mrf.mxu0
        %v3015 = vadd.f32 0.0, %v3014
        %v3016 = vpop.f32.mrf.mxu0
        %v3017 = vadd.f32 0.0, %v3016
        %3018 = vmatmul.bf16.gmra.mxu0 %v1993
        %v3019 = vpop.f32.mrf.mxu0
        %v3020 = vadd.f32 0.0, %v3019
        %v3021 = vpop.f32.mrf.mxu0
        %v3022 = vadd.f32 0.0, %v3021
        %3023 = vmatmul.bf16.gmra.mxu0 %v1996
        %v3024 = vpop.f32.mrf.mxu0
        %v3025 = vadd.f32 0.0, %v3024
        %v3026 = vpop.f32.mrf.mxu0
        %v3027 = vadd.f32 0.0, %v3026
        %3028 = vmatmul.bf16.gmra.mxu0 %v1999
        %v3029 = vpop.f32.mrf.mxu0
        %v3030 = vadd.f32 0.0, %v3029
        %v3031 = vpop.f32.mrf.mxu0
        %v3032 = vadd.f32 0.0, %v3031
        %3033 = vmatmul.bf16.gmra.mxu0 %v2002
        %v3034 = vpop.f32.mrf.mxu0
        %v3035 = vadd.f32 0.0, %v3034
        %v3036 = vpop.f32.mrf.mxu0
        %v3037 = vadd.f32 0.0, %v3036
        %3038 = vmatmul.bf16.gmra.mxu0 %v2005
        %v3039 = vpop.f32.mrf.mxu0
        %v3040 = vadd.f32 0.0, %v3039
        %v3041 = vpop.f32.mrf.mxu0
        %v3042 = vadd.f32 0.0, %v3041
        %3043 = vmatmul.bf16.gmra.mxu0 %v2008
        %v3044 = vpop.f32.mrf.mxu0
        %v3045 = vadd.f32 0.0, %v3044
        %v3046 = vpop.f32.mrf.mxu0
        %v3047 = vadd.f32 0.0, %v3046
        %3048 = vmatmul.bf16.gmra.mxu0 %v2011
        %v3049 = vpop.f32.mrf.mxu0
        %v3050 = vadd.f32 0.0, %v3049
        %v3051 = vpop.f32.mrf.mxu0
        %v3052 = vadd.f32 0.0, %v3051
        %3053 = vmatmul.bf16.gmra.mxu0 %v2014
        %v3054 = vpop.f32.mrf.mxu0
        %v3055 = vadd.f32 0.0, %v3054
        %v3056 = vpop.f32.mrf.mxu0
        %v3057 = vadd.f32 0.0, %v3056
        %3058 = vmatmul.bf16.gmra.mxu0 %v2017
        %v3059 = vpop.f32.mrf.mxu0
        %v3060 = vadd.f32 0.0, %v3059
        %v3061 = vpop.f32.mrf.mxu0
        %v3062 = vadd.f32 0.0, %v3061
        %3063 = vmatmul.bf16.gmra.mxu0 %v2020
        %v3064 = vpop.f32.mrf.mxu0
        %v3065 = vadd.f32 0.0, %v3064
        %v3066 = vpop.f32.mrf.mxu0
        %v3067 = vadd.f32 0.0, %v3066
        %3068 = vmatmul.bf16.gmra.mxu0 %v2593
        %v3069 = vpop.f32.mrf.mxu0
        %v3070 = vadd.f32 0.0, %v3069
        %v3071 = vpop.f32.mrf.mxu0
        %v3072 = vadd.f32 0.0, %v3071
        %3073 = vmatmul.bf16.gmra.mxu0 %v3000
        %v3074 = vpop.f32.mrf.mxu0
        %v3075 = vadd.f32 0.0, %v3074
        %v3076 = vpop.f32.mrf.mxu0
        %v3077 = vadd.f32 0.0, %v3076
        %3078 = vmatmul.bf16.gmra.mxu0 %v3003
        %v3079 = vpop.f32.mrf.mxu0
        %v3080 = vadd.f32 0.0, %v3079
        %v3081 = vpop.f32.mrf.mxu0
        %v3082 = vadd.f32 0.0, %v3081
        %3083 = vdwg.mxu0
        %v3084 = vadd.f32 %v2941, %v3015
        %v3085 = vadd.f32 %v2942, %v3017
        %v3086 = vadd.f32 %v2943, %v3020
        %v3087 = vadd.f32 %v2944, %v3022
        %v3088 = vadd.f32 %v2945, %v3025
        %v3089 = vadd.f32 %v2946, %v3027
        %v3090 = vadd.f32 %v2947, %v3030
        %v3091 = vadd.f32 %v2948, %v3032
        %v3092 = vadd.f32 %v2949, %v3035
        %v3093 = vadd.f32 %v2950, %v3037
        %v3094 = vadd.f32 %v2951, %v3040
        %v3095 = vadd.f32 %v2952, %v3042
        %v3096 = vadd.f32 %v2953, %v3045
        %v3097 = vadd.f32 %v2954, %v3047
        %v3098 = vadd.f32 %v2955, %v3050
        %v3099 = vadd.f32 %v2956, %v3052
        %v3100 = vadd.f32 %v2957, %v3055
        %v3101 = vadd.f32 %v2958, %v3057
        %v3102 = vadd.f32 %v2959, %v3060
        %v3103 = vadd.f32 %v2960, %v3062
        %v3104 = vadd.f32 %v2961, %v3065
        %v3105 = vadd.f32 %v2962, %v3067
        %v3106 = vadd.f32 %v2963, %v3070
        %v3107 = vadd.f32 %v2964, %v3072
        %v3108 = vadd.f32 %v2965, %v3075
        %v3109 = vadd.f32 %v2966, %v3077
        %v3110 = vadd.f32 %v2967, %v3080
        %v3111 = vadd.f32 %v2968, %v3082
        %s3112 = scalar_lea.vmem %s3, 128
        %v3113 = vld [vmem:[%s3112] sm:$0xf]
        %v3114 = vld [vmem:[%s3112 + $0x4] sm:$0xf]
        %v3115 = vld [vmem:[%s3112 + $0x8] sm:$0xf]
        %v3116 = vld [vmem:[%s3112 + $0xc] sm:$0xf]
        %v3119 = vrot.slane %v2841, 1
        %v3120 = vsel %vm2243, %v2712, %v3119
        %v3121 = vrot.slane %v2969, 1
        %v3122 = vsel %vm2243, %v3119, %v3121
        %v3127 = vunpack.c.l.b16 %v3113
        %v3128 = vunpack.c.l.b16 %v3114
        %v3129 = vunpack.c.l.b16 %v3115
        %v3130 = vunpack.c.l.b16 %v3116
        %v3131 = vpack.c.b16 %v3128, %v3127
        %v3132 = vpack.c.b16 %v3130, %v3129
        %v3136 = vsel %vm1537, %v3120, 0
        %v3139 = vsel %vm1537, %v3122, 0
        %3141 = vmatpush.bf16.msra.mxu0 0
        %3142 = vmatpush.bf16.msra.mxu0 0
        %3143 = vmatpush.bf16.msra.mxu0 0
        %3144 = vmatpush.bf16.msra.mxu0 0
        %3145 = vmatpush.bf16.msra.mxu0 0
        %3146 = vmatpush.bf16.msra.mxu0 0
        %3147 = vmatpush.bf16.msra.mxu0 %v3132
        %3148 = vmatpush.bf16.msra.mxu0 %v3131
        %3149 = vmatmul.bf16.gmra.mxu0 %v2292
        %v3150 = vpop.f32.mrf.mxu0
        %v3151 = vadd.f32 0.0, %v3150
        %v3152 = vpop.f32.mrf.mxu0
        %v3153 = vadd.f32 0.0, %v3152
        %3154 = vmatmul.bf16.gmra.mxu0 %v2295
        %v3155 = vpop.f32.mrf.mxu0
        %v3156 = vadd.f32 0.0, %v3155
        %v3157 = vpop.f32.mrf.mxu0
        %v3158 = vadd.f32 0.0, %v3157
        %3159 = vmatmul.bf16.gmra.mxu0 %v2298
        %v3160 = vpop.f32.mrf.mxu0
        %v3161 = vadd.f32 0.0, %v3160
        %v3162 = vpop.f32.mrf.mxu0
        %v3163 = vadd.f32 0.0, %v3162
        %3164 = vmatmul.bf16.gmra.mxu0 %v2301
        %v3165 = vpop.f32.mrf.mxu0
        %v3166 = vadd.f32 0.0, %v3165
        %v3167 = vpop.f32.mrf.mxu0
        %v3168 = vadd.f32 0.0, %v3167
        %3169 = vmatmul.bf16.gmra.mxu0 %v2304
        %v3170 = vpop.f32.mrf.mxu0
        %v3171 = vadd.f32 0.0, %v3170
        %v3172 = vpop.f32.mrf.mxu0
        %v3173 = vadd.f32 0.0, %v3172
        %3174 = vmatmul.bf16.gmra.mxu0 %v2307
        %v3175 = vpop.f32.mrf.mxu0
        %v3176 = vadd.f32 0.0, %v3175
        %v3177 = vpop.f32.mrf.mxu0
        %v3178 = vadd.f32 0.0, %v3177
        %3179 = vmatmul.bf16.gmra.mxu0 %v2310
        %v3180 = vpop.f32.mrf.mxu0
        %v3181 = vadd.f32 0.0, %v3180
        %v3182 = vpop.f32.mrf.mxu0
        %v3183 = vadd.f32 0.0, %v3182
        %3184 = vmatmul.bf16.gmra.mxu0 %v2313
        %v3185 = vpop.f32.mrf.mxu0
        %v3186 = vadd.f32 0.0, %v3185
        %v3187 = vpop.f32.mrf.mxu0
        %v3188 = vadd.f32 0.0, %v3187
        %3189 = vmatmul.bf16.gmra.mxu0 %v2316
        %v3190 = vpop.f32.mrf.mxu0
        %v3191 = vadd.f32 0.0, %v3190
        %v3192 = vpop.f32.mrf.mxu0
        %v3193 = vadd.f32 0.0, %v3192
        %3194 = vmatmul.bf16.gmra.mxu0 %v2319
        %v3195 = vpop.f32.mrf.mxu0
        %v3196 = vadd.f32 0.0, %v3195
        %v3197 = vpop.f32.mrf.mxu0
        %v3198 = vadd.f32 0.0, %v3197
        %3199 = vmatmul.bf16.gmra.mxu0 %v2322
        %v3200 = vpop.f32.mrf.mxu0
        %v3201 = vadd.f32 0.0, %v3200
        %v3202 = vpop.f32.mrf.mxu0
        %v3203 = vadd.f32 0.0, %v3202
        %3204 = vmatmul.bf16.gmra.mxu0 %v2729
        %v3205 = vpop.f32.mrf.mxu0
        %v3206 = vadd.f32 0.0, %v3205
        %v3207 = vpop.f32.mrf.mxu0
        %v3208 = vadd.f32 0.0, %v3207
        %3209 = vmatmul.bf16.gmra.mxu0 %v3136
        %v3210 = vpop.f32.mrf.mxu0
        %v3211 = vadd.f32 0.0, %v3210
        %v3212 = vpop.f32.mrf.mxu0
        %v3213 = vadd.f32 0.0, %v3212
        %3214 = vmatmul.bf16.gmra.mxu0 %v3139
        %v3215 = vpop.f32.mrf.mxu0
        %v3216 = vadd.f32 0.0, %v3215
        %v3217 = vpop.f32.mrf.mxu0
        %v3218 = vadd.f32 0.0, %v3217
        %3219 = vdwg.mxu0
        %v3220 = vadd.f32 %v3084, %v3151
        %v3221 = vadd.f32 %v3085, %v3153
        %v3222 = vadd.f32 %v3086, %v3156
        %v3223 = vadd.f32 %v3087, %v3158
        %v3224 = vadd.f32 %v3088, %v3161
        %v3225 = vadd.f32 %v3089, %v3163
        %v3226 = vadd.f32 %v3090, %v3166
        %v3227 = vadd.f32 %v3091, %v3168
        %v3228 = vadd.f32 %v3092, %v3171
        %v3229 = vadd.f32 %v3093, %v3173
        %v3230 = vadd.f32 %v3094, %v3176
        %v3231 = vadd.f32 %v3095, %v3178
        %v3232 = vadd.f32 %v3096, %v3181
        %v3233 = vadd.f32 %v3097, %v3183
        %v3234 = vadd.f32 %v3098, %v3186
        %v3235 = vadd.f32 %v3099, %v3188
        %v3236 = vadd.f32 %v3100, %v3191
        %v3237 = vadd.f32 %v3101, %v3193
        %v3238 = vadd.f32 %v3102, %v3196
        %v3239 = vadd.f32 %v3103, %v3198
        %v3240 = vadd.f32 %v3104, %v3201
        %v3241 = vadd.f32 %v3105, %v3203
        %v3242 = vadd.f32 %v3106, %v3206
        %v3243 = vadd.f32 %v3107, %v3208
        %v3244 = vadd.f32 %v3108, %v3211
        %v3245 = vadd.f32 %v3109, %v3213
        %v3246 = vadd.f32 %v3110, %v3216
        %v3247 = vadd.f32 %v3111, %v3218
        %v3248 = vld [vmem:[%s4] sm:$0x1]
        %v3250 = vperm.slane %v3248, 0
        %v3252 = vadd.f32 %v3220, %v3250
        %v3253 = vadd.f32 %v3221, %v3250
        %v3254 = vadd.f32 %v3222, %v3250
        %v3255 = vadd.f32 %v3223, %v3250
        %v3256 = vadd.f32 %v3224, %v3250
        %v3257 = vadd.f32 %v3225, %v3250
        %v3258 = vadd.f32 %v3226, %v3250
        %v3259 = vadd.f32 %v3227, %v3250
        %v3260 = vadd.f32 %v3228, %v3250
        %v3261 = vadd.f32 %v3229, %v3250
        %v3262 = vadd.f32 %v3230, %v3250
        %v3263 = vadd.f32 %v3231, %v3250
        %v3264 = vadd.f32 %v3232, %v3250
        %v3265 = vadd.f32 %v3233, %v3250
        %v3266 = vadd.f32 %v3234, %v3250
        %v3267 = vadd.f32 %v3235, %v3250
        %v3268 = vadd.f32 %v3236, %v3250
        %v3269 = vadd.f32 %v3237, %v3250
        %v3270 = vadd.f32 %v3238, %v3250
        %v3271 = vadd.f32 %v3239, %v3250
        %v3272 = vadd.f32 %v3240, %v3250
        %v3273 = vadd.f32 %v3241, %v3250
        %v3274 = vadd.f32 %v3242, %v3250
        %v3275 = vadd.f32 %v3243, %v3250
        %v3276 = vadd.f32 %v3244, %v3250
        %v3277 = vadd.f32 %v3245, %v3250
        %v3278 = vadd.f32 %v3246, %v3250
        %v3279 = vadd.f32 %v3247, %v3250
        %vm3280 = vcmp.gt.f32.partialorder %v3252, 0.0
        %vm3281 = vcmp.gt.f32.partialorder %v3253, 0.0
        %vm3282 = vcmp.gt.f32.partialorder %v3254, 0.0
        %vm3283 = vcmp.gt.f32.partialorder %v3255, 0.0
        %vm3284 = vcmp.gt.f32.partialorder %v3256, 0.0
        %vm3285 = vcmp.gt.f32.partialorder %v3257, 0.0
        %vm3286 = vcmp.gt.f32.partialorder %v3258, 0.0
        %vm3287 = vcmp.gt.f32.partialorder %v3259, 0.0
        %vm3288 = vcmp.gt.f32.partialorder %v3260, 0.0
        %vm3289 = vcmp.gt.f32.partialorder %v3261, 0.0
        %vm3290 = vcmp.gt.f32.partialorder %v3262, 0.0
        %vm3291 = vcmp.gt.f32.partialorder %v3263, 0.0
        %vm3292 = vcmp.gt.f32.partialorder %v3264, 0.0
        %vm3293 = vcmp.gt.f32.partialorder %v3265, 0.0
        %vm3294 = vcmp.gt.f32.partialorder %v3266, 0.0
        %vm3295 = vcmp.gt.f32.partialorder %v3267, 0.0
        %vm3296 = vcmp.gt.f32.partialorder %v3268, 0.0
        %vm3297 = vcmp.gt.f32.partialorder %v3269, 0.0
        %vm3298 = vcmp.gt.f32.partialorder %v3270, 0.0
        %vm3299 = vcmp.gt.f32.partialorder %v3271, 0.0
        %vm3300 = vcmp.gt.f32.partialorder %v3272, 0.0
        %vm3301 = vcmp.gt.f32.partialorder %v3273, 0.0
        %vm3302 = vcmp.gt.f32.partialorder %v3274, 0.0
        %vm3303 = vcmp.gt.f32.partialorder %v3275, 0.0
        %vm3304 = vcmp.gt.f32.partialorder %v3276, 0.0
        %vm3305 = vcmp.gt.f32.partialorder %v3277, 0.0
        %vm3306 = vcmp.gt.f32.partialorder %v3278, 0.0
        %vm3307 = vcmp.gt.f32.partialorder %v3279, 0.0
        %v3308 = vmul.f32 %v3252, 0.01
        %v3309 = vmul.f32 %v3253, 0.01
        %v3310 = vmul.f32 %v3254, 0.01
        %v3311 = vmul.f32 %v3255, 0.01
        %v3312 = vmul.f32 %v3256, 0.01
        %v3313 = vmul.f32 %v3257, 0.01
        %v3314 = vmul.f32 %v3258, 0.01
        %v3315 = vmul.f32 %v3259, 0.01
        %v3316 = vmul.f32 %v3260, 0.01
        %v3317 = vmul.f32 %v3261, 0.01
        %v3318 = vmul.f32 %v3262, 0.01
        %v3319 = vmul.f32 %v3263, 0.01
        %v3320 = vmul.f32 %v3264, 0.01
        %v3321 = vmul.f32 %v3265, 0.01
        %v3322 = vmul.f32 %v3266, 0.01
        %v3323 = vmul.f32 %v3267, 0.01
        %v3324 = vmul.f32 %v3268, 0.01
        %v3325 = vmul.f32 %v3269, 0.01
        %v3326 = vmul.f32 %v3270, 0.01
        %v3327 = vmul.f32 %v3271, 0.01
        %v3328 = vmul.f32 %v3272, 0.01
        %v3329 = vmul.f32 %v3273, 0.01
        %v3330 = vmul.f32 %v3274, 0.01
        %v3331 = vmul.f32 %v3275, 0.01
        %v3332 = vmul.f32 %v3276, 0.01
        %v3333 = vmul.f32 %v3277, 0.01
        %v3334 = vmul.f32 %v3278, 0.01
        %v3335 = vmul.f32 %v3279, 0.01
        %v3336 = vsel %vm3280, %v3252, %v3308
        %v3337 = vsel %vm3281, %v3253, %v3309
        %v3338 = vsel %vm3282, %v3254, %v3310
        %v3339 = vsel %vm3283, %v3255, %v3311
        %v3340 = vsel %vm3284, %v3256, %v3312
        %v3341 = vsel %vm3285, %v3257, %v3313
        %v3342 = vsel %vm3286, %v3258, %v3314
        %v3343 = vsel %vm3287, %v3259, %v3315
        %v3344 = vsel %vm3288, %v3260, %v3316
        %v3345 = vsel %vm3289, %v3261, %v3317
        %v3346 = vsel %vm3290, %v3262, %v3318
        %v3347 = vsel %vm3291, %v3263, %v3319
        %v3348 = vsel %vm3292, %v3264, %v3320
        %v3349 = vsel %vm3293, %v3265, %v3321
        %v3350 = vsel %vm3294, %v3266, %v3322
        %v3351 = vsel %vm3295, %v3267, %v3323
        %v3352 = vsel %vm3296, %v3268, %v3324
        %v3353 = vsel %vm3297, %v3269, %v3325
        %v3354 = vsel %vm3298, %v3270, %v3326
        %v3355 = vsel %vm3299, %v3271, %v3327
        %v3356 = vsel %vm3300, %v3272, %v3328
        %v3357 = vsel %vm3301, %v3273, %v3329
        %v3358 = vsel %vm3302, %v3274, %v3330
        %v3359 = vsel %vm3303, %v3275, %v3331
        %v3360 = vsel %vm3304, %v3276, %v3332
        %v3361 = vsel %vm3305, %v3277, %v3333
        %v3362 = vsel %vm3306, %v3278, %v3334
        %v3363 = vsel %vm3307, %v3279, %v3335
        %v3364 = vmax.f32 %v3336, %v3338
        %v3365 = vmax.f32 %v3337, %v3339
        %v3366 = vmax.f32 %v3340, %v3342
        %v3367 = vmax.f32 %v3341, %v3343
        %v3368 = vmax.f32 %v3344, %v3346
        %v3369 = vmax.f32 %v3345, %v3347
        %v3370 = vmax.f32 %v3348, %v3350
        %v3371 = vmax.f32 %v3349, %v3351
        %v3372 = vmax.f32 %v3352, %v3354
        %v3373 = vmax.f32 %v3353, %v3355
        %v3374 = vmax.f32 %v3356, %v3358
        %v3375 = vmax.f32 %v3357, %v3359
        %v3376 = vmax.f32 %v3360, %v3362
        %v3377 = vmax.f32 %v3361, %v3363
        %vm3378 = vcmask 523264
        %3379 = vst.msk [vmem:[#allocation4] sm:$0xff] %vm3378, %v3364
        %3380 = vst.msk [vmem:[#allocation4 + $0x8] sm:$0xff] %vm3378, %v3365
        %3381 = vst.msk [vmem:[#allocation4 + $0x10] sm:$0xff] %vm3378, %v3366
        %3382 = vst.msk [vmem:[#allocation4 + $0x18] sm:$0xff] %vm3378, %v3367
        %3383 = vst.msk [vmem:[#allocation4 + $0x20] sm:$0xff] %vm3378, %v3368
        %3384 = vst.msk [vmem:[#allocation4 + $0x28] sm:$0xff] %vm3378, %v3369
        %3385 = vst.msk [vmem:[#allocation4 + $0x30] sm:$0xff] %vm3378, %v3370
        %3386 = vst.msk [vmem:[#allocation4 + $0x38] sm:$0xff] %vm3378, %v3371
        %3387 = vst.msk [vmem:[#allocation4 + $0x40] sm:$0xff] %vm3378, %v3372
        %3388 = vst.msk [vmem:[#allocation4 + $0x48] sm:$0xff] %vm3378, %v3373
        %3389 = vst.msk [vmem:[#allocation4 + $0x50] sm:$0xff] %vm3378, %v3374
        %3390 = vst.msk [vmem:[#allocation4 + $0x58] sm:$0xff] %vm3378, %v3375
        %3391 = vst.msk [vmem:[#allocation4 + $0x60] sm:$0xff] %vm3378, %v3376
        %3392 = vst.msk [vmem:[#allocation4 + $0x68] sm:$0xff] %vm3378, %v3377
        %v3393 = vld [vmem:[#allocation4] ss:$16 sm:$0x3]
        %v3394 = vld [vmem:[#allocation4] ss:$16 sm:$0xc]
        %v3395 = vor.u32 %v3393, %v3394
        %v3396 = vld [vmem:[#allocation4] ss:$16 sm:$0x30]
        %v3397 = vor.u32 %v3395, %v3396
        %v3398 = vld [vmem:[#allocation4] ss:$16 sm:$0x40]
        %v3399 = vor.u32 %v3397, %v3398
        %s3400 = scalar_lea.vmem [#allocation4], 1
        %v3401 = vld [vmem:[%s3400] ss:$16 sm:$0x3]
        %v3402 = vld [vmem:[%s3400] ss:$16 sm:$0xc]
        %v3403 = vor.u32 %v3401, %v3402
        %v3404 = vld [vmem:[%s3400] ss:$16 sm:$0x30]
        %v3405 = vor.u32 %v3403, %v3404
        %v3406 = vld [vmem:[%s3400] ss:$16 sm:$0x40]
        %v3407 = vor.u32 %v3405, %v3406
        %v3408 = vmax.f32 %v3399, %v3407
        %v3409 = vpack.c.bf16 %v3408, %v3408
        %vm3410 = vcmask 519168
        %vm3411 = vsmask.f32 3328
        %vm3412 = vmand %vm3410, %vm3411
        %v3413 = vld [vmem:[#allocation5] sm:$0xf]
        %v3414 = vsel %vm3412, %v3409, %v3413
        %3415 = vst [vmem:[#allocation5] sm:$0xf] %v3414
        %s3416 = scalar_lea.vmem [#allocation4], 2
        %v3417 = vld [vmem:[%s3416] ss:$16 sm:$0x3]
        %v3418 = vld [vmem:[%s3416] ss:$16 sm:$0xc]
        %v3419 = vor.u32 %v3417, %v3418
        %v3420 = vld [vmem:[%s3416] ss:$16 sm:$0x30]
        %v3421 = vor.u32 %v3419, %v3420
        %v3422 = vld [vmem:[%s3416] ss:$16 sm:$0x40]
        %v3423 = vor.u32 %v3421, %v3422
        %s3424 = scalar_lea.vmem [#allocation4], 3
        %v3425 = vld [vmem:[%s3424] ss:$16 sm:$0x3]
        %v3426 = vld [vmem:[%s3424] ss:$16 sm:$0xc]
        %v3427 = vor.u32 %v3425, %v3426
        %v3428 = vld [vmem:[%s3424] ss:$16 sm:$0x30]
        %v3429 = vor.u32 %v3427, %v3428
        %v3430 = vld [vmem:[%s3424] ss:$16 sm:$0x40]
        %v3431 = vor.u32 %v3429, %v3430
        %v3432 = vmax.f32 %v3423, %v3431
        %v3433 = vpack.c.bf16 %v3432, %v3432
        %3435 = vrot.lane.b32.xlu0 %v3433, 64
        %v3436 = vpop.permute.xlu0 %3435
        %vm3438 = vcmask 1043968
        %vm3439 = vmand %vm3438, %vm3411
        %v3440 = vld [vmem:[#allocation5] sm:$0xf]
        %v3441 = vsel %vm3439, %v3436, %v3440
        %3442 = vst [vmem:[#allocation5] sm:$0xf] %v3441
        %s3443 = scalar_lea.vmem [#allocation4], 4
        %v3444 = vld [vmem:[%s3443] ss:$16 sm:$0x3]
        %v3445 = vld [vmem:[%s3443] ss:$16 sm:$0xc]
        %v3446 = vor.u32 %v3444, %v3445
        %v3447 = vld [vmem:[%s3443] ss:$16 sm:$0x30]
        %v3448 = vor.u32 %v3446, %v3447
        %v3449 = vld [vmem:[%s3443] ss:$16 sm:$0x40]
        %v3450 = vor.u32 %v3448, %v3449
        %s3451 = scalar_lea.vmem [#allocation4], 5
        %v3452 = vld [vmem:[%s3451] ss:$16 sm:$0x3]
        %v3453 = vld [vmem:[%s3451] ss:$16 sm:$0xc]
        %v3454 = vor.u32 %v3452, %v3453
        %v3455 = vld [vmem:[%s3451] ss:$16 sm:$0x30]
        %v3456 = vor.u32 %v3454, %v3455
        %v3457 = vld [vmem:[%s3451] ss:$16 sm:$0x40]
        %v3458 = vor.u32 %v3456, %v3457
        %v3459 = vmax.f32 %v3450, %v3458
        %v3460 = vpack.c.bf16 %v3459, %v3459
        %v3461 = vld [vmem:[#allocation5 + $0x4] sm:$0xf]
        %v3462 = vsel %vm3412, %v3460, %v3461
        %3463 = vst [vmem:[#allocation5 + $0x4] sm:$0xf] %v3462
        %s3464 = scalar_lea.vmem [#allocation4], 6
        %v3465 = vld [vmem:[%s3464] ss:$16 sm:$0x3]
        %v3466 = vld [vmem:[%s3464] ss:$16 sm:$0xc]
        %v3467 = vor.u32 %v3465, %v3466
        %v3468 = vld [vmem:[%s3464] ss:$16 sm:$0x30]
        %v3469 = vor.u32 %v3467, %v3468
        %v3470 = vld [vmem:[%s3464] ss:$16 sm:$0x40]
        %v3471 = vor.u32 %v3469, %v3470
        %s3472 = scalar_lea.vmem [#allocation4], 7
        %v3473 = vld [vmem:[%s3472] ss:$16 sm:$0x3]
        %v3474 = vld [vmem:[%s3472] ss:$16 sm:$0xc]
        %v3475 = vor.u32 %v3473, %v3474
        %v3476 = vld [vmem:[%s3472] ss:$16 sm:$0x30]
        %v3477 = vor.u32 %v3475, %v3476
        %v3478 = vld [vmem:[%s3472] ss:$16 sm:$0x40]
        %v3479 = vor.u32 %v3477, %v3478
        %v3480 = vmax.f32 %v3471, %v3479
        %v3481 = vpack.c.bf16 %v3480, %v3480
        %3483 = vrot.lane.b32.xlu0 %v3481, 64
        %v3484 = vpop.permute.xlu0 %3483
        %v3486 = vld [vmem:[#allocation5 + $0x4] sm:$0xf]
        %v3487 = vsel %vm3439, %v3484, %v3486
        %3488 = vst [vmem:[#allocation5 + $0x4] sm:$0xf] %v3487
        %s3489 = scalar_lea.vmem [#allocation4], 8
        %v3490 = vld [vmem:[%s3489] ss:$16 sm:$0x3]
        %v3491 = vld [vmem:[%s3489] ss:$16 sm:$0xc]
        %v3492 = vor.u32 %v3490, %v3491
        %v3493 = vld [vmem:[%s3489] ss:$16 sm:$0x30]
        %v3494 = vor.u32 %v3492, %v3493
        %v3495 = vld [vmem:[%s3489] ss:$16 sm:$0x40]
        %v3496 = vor.u32 %v3494, %v3495
        %s3497 = scalar_lea.vmem [#allocation4], 9
        %v3498 = vld [vmem:[%s3497] ss:$16 sm:$0x3]
        %v3499 = vld [vmem:[%s3497] ss:$16 sm:$0xc]
        %v3500 = vor.u32 %v3498, %v3499
        %v3501 = vld [vmem:[%s3497] ss:$16 sm:$0x30]
        %v3502 = vor.u32 %v3500, %v3501
        %v3503 = vld [vmem:[%s3497] ss:$16 sm:$0x40]
        %v3504 = vor.u32 %v3502, %v3503
        %v3505 = vmax.f32 %v3496, %v3504
        %v3506 = vpack.c.bf16 %v3505, %v3505
        %v3507 = vld [vmem:[#allocation5 + $0x8] sm:$0xf]
        %v3508 = vsel %vm3412, %v3506, %v3507
        %3509 = vst [vmem:[#allocation5 + $0x8] sm:$0xf] %v3508
        %s3510 = scalar_lea.vmem [#allocation4], 10
        %v3511 = vld [vmem:[%s3510] ss:$16 sm:$0x3]
        %v3512 = vld [vmem:[%s3510] ss:$16 sm:$0xc]
        %v3513 = vor.u32 %v3511, %v3512
        %v3514 = vld [vmem:[%s3510] ss:$16 sm:$0x30]
        %v3515 = vor.u32 %v3513, %v3514
        %v3516 = vld [vmem:[%s3510] ss:$16 sm:$0x40]
        %v3517 = vor.u32 %v3515, %v3516
        %s3518 = scalar_lea.vmem [#allocation4], 11
        %v3519 = vld [vmem:[%s3518] ss:$16 sm:$0x3]
        %v3520 = vld [vmem:[%s3518] ss:$16 sm:$0xc]
        %v3521 = vor.u32 %v3519, %v3520
        %v3522 = vld [vmem:[%s3518] ss:$16 sm:$0x30]
        %v3523 = vor.u32 %v3521, %v3522
        %v3524 = vld [vmem:[%s3518] ss:$16 sm:$0x40]
        %v3525 = vor.u32 %v3523, %v3524
        %v3526 = vmax.f32 %v3517, %v3525
        %v3527 = vpack.c.bf16 %v3526, %v3526
        %3529 = vrot.lane.b32.xlu0 %v3527, 64
        %v3530 = vpop.permute.xlu0 %3529
        %v3532 = vld [vmem:[#allocation5 + $0x8] sm:$0xf]
        %v3533 = vsel %vm3439, %v3530, %v3532
        %3534 = vst [vmem:[#allocation5 + $0x8] sm:$0xf] %v3533
        %s3535 = scalar_lea.vmem [#allocation4], 12
        %v3536 = vld [vmem:[%s3535] ss:$16 sm:$0x3]
        %v3537 = vld [vmem:[%s3535] ss:$16 sm:$0xc]
        %v3538 = vor.u32 %v3536, %v3537
        %v3539 = vld [vmem:[%s3535] ss:$16 sm:$0x30]
        %v3540 = vor.u32 %v3538, %v3539
        %v3541 = vld [vmem:[%s3535] ss:$16 sm:$0x40]
        %v3542 = vor.u32 %v3540, %v3541
        %s3543 = scalar_lea.vmem [#allocation4], 13
        %v3544 = vld [vmem:[%s3543] ss:$16 sm:$0x3]
        %v3545 = vld [vmem:[%s3543] ss:$16 sm:$0xc]
        %v3546 = vor.u32 %v3544, %v3545
        %v3547 = vld [vmem:[%s3543] ss:$16 sm:$0x30]
        %v3548 = vor.u32 %v3546, %v3547
        %v3549 = vld [vmem:[%s3543] ss:$16 sm:$0x40]
        %v3550 = vor.u32 %v3548, %v3549
        %v3551 = vmax.f32 %v3542, %v3550
        %v3552 = vpack.c.bf16 %v3551, %v3551
        %v3553 = vld [vmem:[#allocation5 + $0xc] sm:$0xf]
        %v3554 = vsel %vm3412, %v3552, %v3553
        %3555 = vst [vmem:[#allocation5 + $0xc] sm:$0xf] %v3554
        %v3556 = vld [vmem:[#allocation5] sm:$0x11]
        %v3557 = vld [vmem:[#allocation5 + $0x8] sm:$0x11]
        %v3558 = vld [vmem:[%s5] sm:$0xf]
        %v3559 = vld [vmem:[%s5 + $0x4] sm:$0xf]
        %v3560 = vld [vmem:[%s5 + $0x8] sm:$0xf]
        %v3561 = vld [vmem:[%s5 + $0xc] sm:$0xf]
        %v3562 = vld [vmem:[%s5 + $0x10] sm:$0xf]
        %v3563 = vld [vmem:[%s5 + $0x14] sm:$0xf]
        %v3564 = vld [vmem:[%s5 + $0x18] sm:$0xf]
        %v3565 = vld [vmem:[%s5 + $0x1c] sm:$0xf]
        %v3566 = vld [vmem:[%s5 + $0x20] sm:$0xf]
        %v3567 = vld [vmem:[%s5 + $0x24] sm:$0xf]
        %v3568 = vld [vmem:[%s5 + $0x28] sm:$0xf]
        %v3569 = vld [vmem:[%s5 + $0x2c] sm:$0xf]
        %v3570 = vld [vmem:[%s5 + $0x30] sm:$0xf]
        %v3571 = vld [vmem:[%s5 + $0x34] sm:$0xf]
        %v3572 = vld [vmem:[%s5 + $0x38] sm:$0xf]
        %v3573 = vld [vmem:[%s5 + $0x3c] sm:$0xf]
        %v3574 = vld [vmem:[%s5 + $0x40] sm:$0xf]
        %v3575 = vld [vmem:[%s5 + $0x44] sm:$0xf]
        %v3576 = vld [vmem:[%s5 + $0x48] sm:$0xf]
        %v3577 = vld [vmem:[%s5 + $0x4c] sm:$0xf]
        %v3578 = vld [vmem:[%s5 + $0x50] sm:$0xf]
        %v3579 = vld [vmem:[%s5 + $0x54] sm:$0xf]
        %v3580 = vld [vmem:[%s5 + $0x58] sm:$0xf]
        %v3581 = vld [vmem:[%s5 + $0x5c] sm:$0xf]
        %v3582 = vld [vmem:[%s5 + $0x60] sm:$0xf]
        %v3583 = vld [vmem:[%s5 + $0x64] sm:$0xf]
        %v3584 = vld [vmem:[%s5 + $0x68] sm:$0xf]
        %v3585 = vld [vmem:[%s5 + $0x6c] sm:$0xf]
        %v3586 = vld [vmem:[%s5 + $0x70] sm:$0xf]
        %v3587 = vld [vmem:[%s5 + $0x74] sm:$0xf]
        %v3588 = vld [vmem:[%s5 + $0x78] sm:$0xf]
        %v3589 = vld [vmem:[%s5 + $0x7c] sm:$0xf]
        %v3590 = vld [vmem:[%s5 + $0x80] sm:$0xf]
        %v3591 = vld [vmem:[%s5 + $0x84] sm:$0xf]
        %v3592 = vld [vmem:[%s5 + $0x88] sm:$0xf]
        %v3593 = vld [vmem:[%s5 + $0x8c] sm:$0xf]
        %v3594 = vld [vmem:[%s5 + $0x90] sm:$0xf]
        %v3595 = vld [vmem:[%s5 + $0x94] sm:$0xf]
        %v3596 = vld [vmem:[%s5 + $0x98] sm:$0xf]
        %v3597 = vld [vmem:[%s5 + $0x9c] sm:$0xf]
        %v3598 = vld [vmem:[%s5 + $0xa0] sm:$0xf]
        %v3599 = vld [vmem:[%s5 + $0xa4] sm:$0xf]
        %v3600 = vld [vmem:[%s5 + $0xa8] sm:$0xf]
        %v3601 = vld [vmem:[%s5 + $0xac] sm:$0xf]
        %v3602 = vld [vmem:[%s5 + $0xb0] sm:$0xf]
        %v3603 = vld [vmem:[%s5 + $0xb4] sm:$0xf]
        %v3604 = vld [vmem:[%s5 + $0xb8] sm:$0xf]
        %v3605 = vld [vmem:[%s5 + $0xbc] sm:$0xf]
        %v3606 = vld [vmem:[%s5 + $0xc0] sm:$0xf]
        %v3607 = vld [vmem:[%s5 + $0xc4] sm:$0xf]
        %v3608 = vld [vmem:[%s5 + $0xc8] sm:$0xf]
        %v3609 = vld [vmem:[%s5 + $0xcc] sm:$0xf]
        %v3610 = vld [vmem:[%s5 + $0xd0] sm:$0xf]
        %v3611 = vld [vmem:[%s5 + $0xd4] sm:$0xf]
        %v3612 = vld [vmem:[%s5 + $0xd8] sm:$0xf]
        %v3613 = vld [vmem:[%s5 + $0xdc] sm:$0xf]
        %s3614 = scalar_lea.vmem %s5, 224
        %v3615 = vld [vmem:[%s3614] sm:$0xf]
        %v3616 = vld [vmem:[%s3614 + $0x4] sm:$0xf]
        %v3617 = vld [vmem:[%s3614 + $0x8] sm:$0xf]
        %v3618 = vld [vmem:[%s3614 + $0xc] sm:$0xf]
        %v3619 = vld [vmem:[%s3614 + $0x10] sm:$0xf]
        %v3620 = vld [vmem:[%s3614 + $0x14] sm:$0xf]
        %v3621 = vld [vmem:[%s3614 + $0x18] sm:$0xf]
        %v3622 = vld [vmem:[%s3614 + $0x1c] sm:$0xf]
        %v3623 = vld [vmem:[%s3614 + $0x20] sm:$0xf]
        %v3624 = vld [vmem:[%s3614 + $0x24] sm:$0xf]
        %v3625 = vld [vmem:[%s3614 + $0x28] sm:$0xf]
        %v3626 = vld [vmem:[%s3614 + $0x2c] sm:$0xf]
        %v3627 = vld [vmem:[%s3614 + $0x30] sm:$0xf]
        %v3628 = vld [vmem:[%s3614 + $0x34] sm:$0xf]
        %v3629 = vld [vmem:[%s3614 + $0x38] sm:$0xf]
        %v3630 = vld [vmem:[%s3614 + $0x3c] sm:$0xf]
        %v3631 = vld [vmem:[%s3614 + $0x40] sm:$0xf]
        %v3632 = vld [vmem:[%s3614 + $0x44] sm:$0xf]
        %v3633 = vld [vmem:[%s3614 + $0x48] sm:$0xf]
        %v3634 = vld [vmem:[%s3614 + $0x4c] sm:$0xf]
        %v3635 = vld [vmem:[%s3614 + $0x50] sm:$0xf]
        %v3636 = vld [vmem:[%s3614 + $0x54] sm:$0xf]
        %v3637 = vld [vmem:[%s3614 + $0x58] sm:$0xf]
        %v3638 = vld [vmem:[%s3614 + $0x5c] sm:$0xf]
        %v3639 = vld [vmem:[%s3614 + $0x60] sm:$0xf]
        %v3640 = vld [vmem:[%s3614 + $0x64] sm:$0xf]
        %v3641 = vld [vmem:[%s3614 + $0x68] sm:$0xf]
        %v3642 = vld [vmem:[%s3614 + $0x6c] sm:$0xf]
        %v3643 = vld [vmem:[%s3614 + $0x70] sm:$0xf]
        %v3644 = vld [vmem:[%s3614 + $0x74] sm:$0xf]
        %v3645 = vld [vmem:[%s3614 + $0x78] sm:$0xf]
        %v3646 = vld [vmem:[%s3614 + $0x7c] sm:$0xf]
        %v3647 = vld [vmem:[%s3614 + $0x80] sm:$0xf]
        %v3648 = vld [vmem:[%s3614 + $0x84] sm:$0xf]
        %v3649 = vld [vmem:[%s3614 + $0x88] sm:$0xf]
        %v3650 = vld [vmem:[%s3614 + $0x8c] sm:$0xf]
        %v3651 = vld [vmem:[%s3614 + $0x90] sm:$0xf]
        %v3652 = vld [vmem:[%s3614 + $0x94] sm:$0xf]
        %v3653 = vld [vmem:[%s3614 + $0x98] sm:$0xf]
        %v3654 = vld [vmem:[%s3614 + $0x9c] sm:$0xf]
        %v3655 = vld [vmem:[%s3614 + $0xa0] sm:$0xf]
        %v3656 = vld [vmem:[%s3614 + $0xa4] sm:$0xf]
        %v3657 = vld [vmem:[%s3614 + $0xa8] sm:$0xf]
        %v3658 = vld [vmem:[%s3614 + $0xac] sm:$0xf]
        %v3659 = vld [vmem:[%s3614 + $0xb0] sm:$0xf]
        %v3660 = vld [vmem:[%s3614 + $0xb4] sm:$0xf]
        %v3661 = vld [vmem:[%s3614 + $0xb8] sm:$0xf]
        %v3662 = vld [vmem:[%s3614 + $0xbc] sm:$0xf]
        %v3663 = vld [vmem:[%s3614 + $0xc0] sm:$0xf]
        %v3664 = vld [vmem:[%s3614 + $0xc4] sm:$0xf]
        %v3665 = vld [vmem:[%s3614 + $0xc8] sm:$0xf]
        %v3666 = vld [vmem:[%s3614 + $0xcc] sm:$0xf]
        %v3667 = vld [vmem:[%s3614 + $0xd0] sm:$0xf]
        %v3668 = vld [vmem:[%s3614 + $0xd4] sm:$0xf]
        %v3669 = vld [vmem:[%s3614 + $0xd8] sm:$0xf]
        %v3670 = vld [vmem:[%s3614 + $0xdc] sm:$0xf]
        %v3673 = vunpack.c.l.b16 %v3556
        %v3674 = vunpack.c.h.b16 %v3556
        %v3675 = vunpack.c.l.b16 %v3557
        %v3676 = vunpack.c.h.b16 %v3557
        %v3677 = vpack.c.b16 %v3673, %v3673
        %v3678 = vpack.c.b16 %v3674, %v3674
        %v3679 = vpack.c.b16 %v3675, %v3675
        %v3680 = vpack.c.b16 %v3676, %v3676
        %v3682 = vshrl.u32 %v3677, 16
        %v3685 = vshrl.u32 %v3678, 16
        %v3688 = vshrl.u32 %v3679, 16
        %v3691 = vshrl.u32 %v3680, 16
        %v3752 = vunpack.c.l.b16 %v3615
        %v3753 = vunpack.c.l.b16 %v3616
        %v3754 = vunpack.c.l.b16 %v3617
        %v3755 = vunpack.c.l.b16 %v3618
        %v3756 = vunpack.c.l.b16 %v3619
        %v3757 = vunpack.c.l.b16 %v3620
        %v3758 = vunpack.c.l.b16 %v3621
        %v3759 = vunpack.c.l.b16 %v3622
        %v3760 = vunpack.c.l.b16 %v3623
        %v3761 = vunpack.c.l.b16 %v3624
        %v3762 = vunpack.c.l.b16 %v3625
        %v3763 = vunpack.c.l.b16 %v3626
        %v3764 = vunpack.c.l.b16 %v3627
        %v3765 = vunpack.c.l.b16 %v3628
        %v3766 = vunpack.c.l.b16 %v3629
        %v3767 = vunpack.c.l.b16 %v3630
        %v3768 = vunpack.c.l.b16 %v3631
        %v3769 = vunpack.c.l.b16 %v3632
        %v3770 = vunpack.c.l.b16 %v3633
        %v3771 = vunpack.c.l.b16 %v3634
        %v3772 = vunpack.c.l.b16 %v3635
        %v3773 = vunpack.c.l.b16 %v3636
        %v3774 = vunpack.c.l.b16 %v3637
        %v3775 = vunpack.c.l.b16 %v3638
        %v3776 = vunpack.c.l.b16 %v3639
        %v3777 = vunpack.c.l.b16 %v3640
        %v3778 = vunpack.c.l.b16 %v3641
        %v3779 = vunpack.c.l.b16 %v3642
        %v3780 = vunpack.c.l.b16 %v3643
        %v3781 = vunpack.c.l.b16 %v3644
        %v3782 = vunpack.c.l.b16 %v3645
        %v3783 = vunpack.c.l.b16 %v3646
        %v3784 = vunpack.c.l.b16 %v3647
        %v3785 = vunpack.c.l.b16 %v3648
        %v3786 = vunpack.c.l.b16 %v3649
        %v3787 = vunpack.c.l.b16 %v3650
        %v3788 = vunpack.c.l.b16 %v3651
        %v3789 = vunpack.c.l.b16 %v3652
        %v3790 = vunpack.c.l.b16 %v3653
        %v3791 = vunpack.c.l.b16 %v3654
        %v3792 = vunpack.c.l.b16 %v3655
        %v3793 = vunpack.c.l.b16 %v3656
        %v3794 = vunpack.c.l.b16 %v3657
        %v3795 = vunpack.c.l.b16 %v3658
        %v3796 = vunpack.c.l.b16 %v3659
        %v3797 = vunpack.c.l.b16 %v3660
        %v3798 = vunpack.c.l.b16 %v3661
        %v3799 = vunpack.c.l.b16 %v3662
        %v3800 = vunpack.c.l.b16 %v3663
        %v3801 = vunpack.c.l.b16 %v3664
        %v3802 = vunpack.c.l.b16 %v3665
        %v3803 = vunpack.c.l.b16 %v3666
        %v3804 = vunpack.c.l.b16 %v3667
        %v3805 = vunpack.c.l.b16 %v3668
        %v3806 = vunpack.c.l.b16 %v3669
        %v3807 = vunpack.c.l.b16 %v3670
        %v3808 = vpack.c.b16 %v3753, %v3752
        %v3809 = vpack.c.b16 %v3755, %v3754
        %v3810 = vpack.c.b16 %v3757, %v3756
        %v3811 = vpack.c.b16 %v3759, %v3758
        %v3812 = vpack.c.b16 %v3761, %v3760
        %v3813 = vpack.c.b16 %v3763, %v3762
        %v3814 = vpack.c.b16 %v3765, %v3764
        %v3815 = vpack.c.b16 %v3767, %v3766
        %v3816 = vpack.c.b16 %v3769, %v3768
        %v3817 = vpack.c.b16 %v3771, %v3770
        %v3818 = vpack.c.b16 %v3773, %v3772
        %v3819 = vpack.c.b16 %v3775, %v3774
        %v3820 = vpack.c.b16 %v3777, %v3776
        %v3821 = vpack.c.b16 %v3779, %v3778
        %v3822 = vpack.c.b16 %v3781, %v3780
        %v3823 = vpack.c.b16 %v3783, %v3782
        %v3824 = vpack.c.b16 %v3785, %v3784
        %v3825 = vpack.c.b16 %v3787, %v3786
        %v3826 = vpack.c.b16 %v3789, %v3788
        %v3827 = vpack.c.b16 %v3791, %v3790
        %v3828 = vpack.c.b16 %v3793, %v3792
        %v3829 = vpack.c.b16 %v3795, %v3794
        %v3830 = vpack.c.b16 %v3797, %v3796
        %v3831 = vpack.c.b16 %v3799, %v3798
        %v3832 = vpack.c.b16 %v3801, %v3800
        %v3833 = vpack.c.b16 %v3803, %v3802
        %v3834 = vpack.c.b16 %v3805, %v3804
        %v3835 = vpack.c.b16 %v3807, %v3806
        %v3865 = vsel %vm3378, %v3691, 0
        %3867 = vmatpush.bf16.msra.mxu0 %v3815
        %3868 = vmatpush.bf16.msra.mxu0 %v3814
        %3869 = vmatpush.bf16.msra.mxu0 %v3813
        %3870 = vmatpush.bf16.msra.mxu0 %v3812
        %3871 = vmatpush.bf16.msra.mxu0 %v3811
        %3872 = vmatpush.bf16.msra.mxu0 %v3810
        %3873 = vmatpush.bf16.msra.mxu0 %v3809
        %3874 = vmatpush.bf16.msra.mxu0 %v3808
        %3875 = vmatmul.bf16.gmra.mxu0 %v3682
        %v3876 = vpop.f32.mrf.mxu0
        %v3877 = vadd.f32 0.0, %v3876
        %v3878 = vpop.f32.mrf.mxu0
        %3879 = vdwg.mxu0
        %3880 = vmatpush.bf16.msra.mxu0 %v3823
        %3881 = vmatpush.bf16.msra.mxu0 %v3822
        %3882 = vmatpush.bf16.msra.mxu0 %v3821
        %3883 = vmatpush.bf16.msra.mxu0 %v3820
        %3884 = vmatpush.bf16.msra.mxu0 %v3819
        %3885 = vmatpush.bf16.msra.mxu0 %v3818
        %3886 = vmatpush.bf16.msra.mxu0 %v3817
        %3887 = vmatpush.bf16.msra.mxu0 %v3816
        %3888 = vmatmul.bf16.gmra.mxu0 %v3685
        %v3889 = vpop.f32.mrf.mxu0
        %v3890 = vadd.f32 %v3877, %v3889
        %v3891 = vpop.f32.mrf.mxu0
        %3892 = vdwg.mxu0
        %3893 = vmatpush.bf16.msra.mxu0 %v3831
        %3894 = vmatpush.bf16.msra.mxu0 %v3830
        %3895 = vmatpush.bf16.msra.mxu0 %v3829
        %3896 = vmatpush.bf16.msra.mxu0 %v3828
        %3897 = vmatpush.bf16.msra.mxu0 %v3827
        %3898 = vmatpush.bf16.msra.mxu0 %v3826
        %3899 = vmatpush.bf16.msra.mxu0 %v3825
        %3900 = vmatpush.bf16.msra.mxu0 %v3824
        %3901 = vmatmul.bf16.gmra.mxu0 %v3688
        %v3902 = vpop.f32.mrf.mxu0
        %v3903 = vadd.f32 %v3890, %v3902
        %v3904 = vpop.f32.mrf.mxu0
        %3905 = vdwg.mxu0
        %3906 = vmatpush.bf16.msra.mxu0 0
        %3907 = vmatpush.bf16.msra.mxu0 0
        %3908 = vmatpush.bf16.msra.mxu0 0
        %3909 = vmatpush.bf16.msra.mxu0 0
        %3910 = vmatpush.bf16.msra.mxu0 %v3835
        %3911 = vmatpush.bf16.msra.mxu0 %v3834
        %3912 = vmatpush.bf16.msra.mxu0 %v3833
        %3913 = vmatpush.bf16.msra.mxu0 %v3832
        %3914 = vmatmul.bf16.gmra.mxu0 %v3865
        %v3915 = vpop.f32.mrf.mxu0
        %v3916 = vadd.f32 %v3903, %v3915
        %v3917 = vpop.f32.mrf.mxu0
        %3918 = vdwg.mxu0
        %v3978 = vunpack.c.l.b16 %v3558
        %v3979 = vunpack.c.l.b16 %v3559
        %v3980 = vunpack.c.l.b16 %v3560
        %v3981 = vunpack.c.l.b16 %v3561
        %v3982 = vunpack.c.l.b16 %v3562
        %v3983 = vunpack.c.l.b16 %v3563
        %v3984 = vunpack.c.l.b16 %v3564
        %v3985 = vunpack.c.l.b16 %v3565
        %v3986 = vunpack.c.l.b16 %v3566
        %v3987 = vunpack.c.l.b16 %v3567
        %v3988 = vunpack.c.l.b16 %v3568
        %v3989 = vunpack.c.l.b16 %v3569
        %v3990 = vunpack.c.l.b16 %v3570
        %v3991 = vunpack.c.l.b16 %v3571
        %v3992 = vunpack.c.l.b16 %v3572
        %v3993 = vunpack.c.l.b16 %v3573
        %v3994 = vunpack.c.l.b16 %v3574
        %v3995 = vunpack.c.l.b16 %v3575
        %v3996 = vunpack.c.l.b16 %v3576
        %v3997 = vunpack.c.l.b16 %v3577
        %v3998 = vunpack.c.l.b16 %v3578
        %v3999 = vunpack.c.l.b16 %v3579
        %v4000 = vunpack.c.l.b16 %v3580
        %v4001 = vunpack.c.l.b16 %v3581
        %v4002 = vunpack.c.l.b16 %v3582
        %v4003 = vunpack.c.l.b16 %v3583
        %v4004 = vunpack.c.l.b16 %v3584
        %v4005 = vunpack.c.l.b16 %v3585
        %v4006 = vunpack.c.l.b16 %v3586
        %v4007 = vunpack.c.l.b16 %v3587
        %v4008 = vunpack.c.l.b16 %v3588
        %v4009 = vunpack.c.l.b16 %v3589
        %v4010 = vunpack.c.l.b16 %v3590
        %v4011 = vunpack.c.l.b16 %v3591
        %v4012 = vunpack.c.l.b16 %v3592
        %v4013 = vunpack.c.l.b16 %v3593
        %v4014 = vunpack.c.l.b16 %v3594
        %v4015 = vunpack.c.l.b16 %v3595
        %v4016 = vunpack.c.l.b16 %v3596
        %v4017 = vunpack.c.l.b16 %v3597
        %v4018 = vunpack.c.l.b16 %v3598
        %v4019 = vunpack.c.l.b16 %v3599
        %v4020 = vunpack.c.l.b16 %v3600
        %v4021 = vunpack.c.l.b16 %v3601
        %v4022 = vunpack.c.l.b16 %v3602
        %v4023 = vunpack.c.l.b16 %v3603
        %v4024 = vunpack.c.l.b16 %v3604
        %v4025 = vunpack.c.l.b16 %v3605
        %v4026 = vunpack.c.l.b16 %v3606
        %v4027 = vunpack.c.l.b16 %v3607
        %v4028 = vunpack.c.l.b16 %v3608
        %v4029 = vunpack.c.l.b16 %v3609
        %v4030 = vunpack.c.l.b16 %v3610
        %v4031 = vunpack.c.l.b16 %v3611
        %v4032 = vunpack.c.l.b16 %v3612
        %v4033 = vunpack.c.l.b16 %v3613
        %v4034 = vpack.c.b16 %v3979, %v3978
        %v4035 = vpack.c.b16 %v3981, %v3980
        %v4036 = vpack.c.b16 %v3983, %v3982
        %v4037 = vpack.c.b16 %v3985, %v3984
        %v4038 = vpack.c.b16 %v3987, %v3986
        %v4039 = vpack.c.b16 %v3989, %v3988
        %v4040 = vpack.c.b16 %v3991, %v3990
        %v4041 = vpack.c.b16 %v3993, %v3992
        %v4042 = vpack.c.b16 %v3995, %v3994
        %v4043 = vpack.c.b16 %v3997, %v3996
        %v4044 = vpack.c.b16 %v3999, %v3998
        %v4045 = vpack.c.b16 %v4001, %v4000
        %v4046 = vpack.c.b16 %v4003, %v4002
        %v4047 = vpack.c.b16 %v4005, %v4004
        %v4048 = vpack.c.b16 %v4007, %v4006
        %v4049 = vpack.c.b16 %v4009, %v4008
        %v4050 = vpack.c.b16 %v4011, %v4010
        %v4051 = vpack.c.b16 %v4013, %v4012
        %v4052 = vpack.c.b16 %v4015, %v4014
        %v4053 = vpack.c.b16 %v4017, %v4016
        %v4054 = vpack.c.b16 %v4019, %v4018
        %v4055 = vpack.c.b16 %v4021, %v4020
        %v4056 = vpack.c.b16 %v4023, %v4022
        %v4057 = vpack.c.b16 %v4025, %v4024
        %v4058 = vpack.c.b16 %v4027, %v4026
        %v4059 = vpack.c.b16 %v4029, %v4028
        %v4060 = vpack.c.b16 %v4031, %v4030
        %v4061 = vpack.c.b16 %v4033, %v4032
        %v4090 = vsel %vm3378, %v3680, 0
        %4092 = vmatpush.bf16.msra.mxu0 %v4041
        %4093 = vmatpush.bf16.msra.mxu0 %v4040
        %4094 = vmatpush.bf16.msra.mxu0 %v4039
        %4095 = vmatpush.bf16.msra.mxu0 %v4038
        %4096 = vmatpush.bf16.msra.mxu0 %v4037
        %4097 = vmatpush.bf16.msra.mxu0 %v4036
        %4098 = vmatpush.bf16.msra.mxu0 %v4035
        %4099 = vmatpush.bf16.msra.mxu0 %v4034
        %4100 = vmatmul.bf16.gmra.mxu0 %v3677
        %v4101 = vpop.f32.mrf.mxu0
        %v4102 = vadd.f32 %v3916, %v4101
        %v4103 = vpop.f32.mrf.mxu0
        %4104 = vdwg.mxu0
        %4105 = vmatpush.bf16.msra.mxu0 %v4049
        %4106 = vmatpush.bf16.msra.mxu0 %v4048
        %4107 = vmatpush.bf16.msra.mxu0 %v4047
        %4108 = vmatpush.bf16.msra.mxu0 %v4046
        %4109 = vmatpush.bf16.msra.mxu0 %v4045
        %4110 = vmatpush.bf16.msra.mxu0 %v4044
        %4111 = vmatpush.bf16.msra.mxu0 %v4043
        %4112 = vmatpush.bf16.msra.mxu0 %v4042
        %4113 = vmatmul.bf16.gmra.mxu0 %v3678
        %v4114 = vpop.f32.mrf.mxu0
        %v4115 = vadd.f32 %v4102, %v4114
        %v4116 = vpop.f32.mrf.mxu0
        %4117 = vdwg.mxu0
        %4118 = vmatpush.bf16.msra.mxu0 %v4057
        %4119 = vmatpush.bf16.msra.mxu0 %v4056
        %4120 = vmatpush.bf16.msra.mxu0 %v4055
        %4121 = vmatpush.bf16.msra.mxu0 %v4054
        %4122 = vmatpush.bf16.msra.mxu0 %v4053
        %4123 = vmatpush.bf16.msra.mxu0 %v4052
        %4124 = vmatpush.bf16.msra.mxu0 %v4051
        %4125 = vmatpush.bf16.msra.mxu0 %v4050
        %4126 = vmatmul.bf16.gmra.mxu0 %v3679
        %v4127 = vpop.f32.mrf.mxu0
        %v4128 = vadd.f32 %v4115, %v4127
        %v4129 = vpop.f32.mrf.mxu0
        %4130 = vdwg.mxu0
        %4131 = vmatpush.bf16.msra.mxu0 0
        %4132 = vmatpush.bf16.msra.mxu0 0
        %4133 = vmatpush.bf16.msra.mxu0 0
        %4134 = vmatpush.bf16.msra.mxu0 0
        %4135 = vmatpush.bf16.msra.mxu0 %v4061
        %4136 = vmatpush.bf16.msra.mxu0 %v4060
        %4137 = vmatpush.bf16.msra.mxu0 %v4059
        %4138 = vmatpush.bf16.msra.mxu0 %v4058
        %4139 = vmatmul.bf16.gmra.mxu0 %v4090
        %v4140 = vpop.f32.mrf.mxu0
        %v4141 = vadd.f32 %v4128, %v4140
        %v4142 = vpop.f32.mrf.mxu0
        %4143 = vdwg.mxu0
        %v4144 = vld [vmem:[#allocation5] sm:$0x22]
        %v4145 = vld [vmem:[#allocation5 + $0x8] sm:$0x22]
        %s4146 = scalar_lea.vmem %s5, 448
        %v4147 = vld [vmem:[%s4146] sm:$0xf]
        %v4148 = vld [vmem:[%s4146 + $0x4] sm:$0xf]
        %v4149 = vld [vmem:[%s4146 + $0x8] sm:$0xf]
        %v4150 = vld [vmem:[%s4146 + $0xc] sm:$0xf]
        %v4151 = vld [vmem:[%s4146 + $0x10] sm:$0xf]
        %v4152 = vld [vmem:[%s4146 + $0x14] sm:$0xf]
        %v4153 = vld [vmem:[%s4146 + $0x18] sm:$0xf]
        %v4154 = vld [vmem:[%s4146 + $0x1c] sm:$0xf]
        %v4155 = vld [vmem:[%s4146 + $0x20] sm:$0xf]
        %v4156 = vld [vmem:[%s4146 + $0x24] sm:$0xf]
        %v4157 = vld [vmem:[%s4146 + $0x28] sm:$0xf]
        %v4158 = vld [vmem:[%s4146 + $0x2c] sm:$0xf]
        %v4159 = vld [vmem:[%s4146 + $0x30] sm:$0xf]
        %v4160 = vld [vmem:[%s4146 + $0x34] sm:$0xf]
        %v4161 = vld [vmem:[%s4146 + $0x38] sm:$0xf]
        %v4162 = vld [vmem:[%s4146 + $0x3c] sm:$0xf]
        %v4163 = vld [vmem:[%s4146 + $0x40] sm:$0xf]
        %v4164 = vld [vmem:[%s4146 + $0x44] sm:$0xf]
        %v4165 = vld [vmem:[%s4146 + $0x48] sm:$0xf]
        %v4166 = vld [vmem:[%s4146 + $0x4c] sm:$0xf]
        %v4167 = vld [vmem:[%s4146 + $0x50] sm:$0xf]
        %v4168 = vld [vmem:[%s4146 + $0x54] sm:$0xf]
        %v4169 = vld [vmem:[%s4146 + $0x58] sm:$0xf]
        %v4170 = vld [vmem:[%s4146 + $0x5c] sm:$0xf]
        %v4171 = vld [vmem:[%s4146 + $0x60] sm:$0xf]
        %v4172 = vld [vmem:[%s4146 + $0x64] sm:$0xf]
        %v4173 = vld [vmem:[%s4146 + $0x68] sm:$0xf]
        %v4174 = vld [vmem:[%s4146 + $0x6c] sm:$0xf]
        %v4175 = vld [vmem:[%s4146 + $0x70] sm:$0xf]
        %v4176 = vld [vmem:[%s4146 + $0x74] sm:$0xf]
        %v4177 = vld [vmem:[%s4146 + $0x78] sm:$0xf]
        %v4178 = vld [vmem:[%s4146 + $0x7c] sm:$0xf]
        %v4179 = vld [vmem:[%s4146 + $0x80] sm:$0xf]
        %v4180 = vld [vmem:[%s4146 + $0x84] sm:$0xf]
        %v4181 = vld [vmem:[%s4146 + $0x88] sm:$0xf]
        %v4182 = vld [vmem:[%s4146 + $0x8c] sm:$0xf]
        %v4183 = vld [vmem:[%s4146 + $0x90] sm:$0xf]
        %v4184 = vld [vmem:[%s4146 + $0x94] sm:$0xf]
        %v4185 = vld [vmem:[%s4146 + $0x98] sm:$0xf]
        %v4186 = vld [vmem:[%s4146 + $0x9c] sm:$0xf]
        %v4187 = vld [vmem:[%s4146 + $0xa0] sm:$0xf]
        %v4188 = vld [vmem:[%s4146 + $0xa4] sm:$0xf]
        %v4189 = vld [vmem:[%s4146 + $0xa8] sm:$0xf]
        %v4190 = vld [vmem:[%s4146 + $0xac] sm:$0xf]
        %v4191 = vld [vmem:[%s4146 + $0xb0] sm:$0xf]
        %v4192 = vld [vmem:[%s4146 + $0xb4] sm:$0xf]
        %v4193 = vld [vmem:[%s4146 + $0xb8] sm:$0xf]
        %v4194 = vld [vmem:[%s4146 + $0xbc] sm:$0xf]
        %v4195 = vld [vmem:[%s4146 + $0xc0] sm:$0xf]
        %v4196 = vld [vmem:[%s4146 + $0xc4] sm:$0xf]
        %v4197 = vld [vmem:[%s4146 + $0xc8] sm:$0xf]
        %v4198 = vld [vmem:[%s4146 + $0xcc] sm:$0xf]
        %v4199 = vld [vmem:[%s4146 + $0xd0] sm:$0xf]
        %v4200 = vld [vmem:[%s4146 + $0xd4] sm:$0xf]
        %v4201 = vld [vmem:[%s4146 + $0xd8] sm:$0xf]
        %v4202 = vld [vmem:[%s4146 + $0xdc] sm:$0xf]
        %v4205 = vunpack.c.l.b16 %v4144
        %v4206 = vunpack.c.h.b16 %v4144
        %v4207 = vunpack.c.l.b16 %v4145
        %v4208 = vunpack.c.h.b16 %v4145
        %v4209 = vpack.c.b16 %v4205, %v4205
        %v4210 = vpack.c.b16 %v4206, %v4206
        %v4211 = vpack.c.b16 %v4207, %v4207
        %v4212 = vpack.c.b16 %v4208, %v4208
        %v4213 = vrot.slane %v4209, 1
        %v4214 = vrot.slane %v4210, 1
        %v4215 = vrot.slane %v4211, 1
        %v4216 = vrot.slane %v4212, 1
        %v4276 = vunpack.c.l.b16 %v4147
        %v4277 = vunpack.c.l.b16 %v4148
        %v4278 = vunpack.c.l.b16 %v4149
        %v4279 = vunpack.c.l.b16 %v4150
        %v4280 = vunpack.c.l.b16 %v4151
        %v4281 = vunpack.c.l.b16 %v4152
        %v4282 = vunpack.c.l.b16 %v4153
        %v4283 = vunpack.c.l.b16 %v4154
        %v4284 = vunpack.c.l.b16 %v4155
        %v4285 = vunpack.c.l.b16 %v4156
        %v4286 = vunpack.c.l.b16 %v4157
        %v4287 = vunpack.c.l.b16 %v4158
        %v4288 = vunpack.c.l.b16 %v4159
        %v4289 = vunpack.c.l.b16 %v4160
        %v4290 = vunpack.c.l.b16 %v4161
        %v4291 = vunpack.c.l.b16 %v4162
        %v4292 = vunpack.c.l.b16 %v4163
        %v4293 = vunpack.c.l.b16 %v4164
        %v4294 = vunpack.c.l.b16 %v4165
        %v4295 = vunpack.c.l.b16 %v4166
        %v4296 = vunpack.c.l.b16 %v4167
        %v4297 = vunpack.c.l.b16 %v4168
        %v4298 = vunpack.c.l.b16 %v4169
        %v4299 = vunpack.c.l.b16 %v4170
        %v4300 = vunpack.c.l.b16 %v4171
        %v4301 = vunpack.c.l.b16 %v4172
        %v4302 = vunpack.c.l.b16 %v4173
        %v4303 = vunpack.c.l.b16 %v4174
        %v4304 = vunpack.c.l.b16 %v4175
        %v4305 = vunpack.c.l.b16 %v4176
        %v4306 = vunpack.c.l.b16 %v4177
        %v4307 = vunpack.c.l.b16 %v4178
        %v4308 = vunpack.c.l.b16 %v4179
        %v4309 = vunpack.c.l.b16 %v4180
        %v4310 = vunpack.c.l.b16 %v4181
        %v4311 = vunpack.c.l.b16 %v4182
        %v4312 = vunpack.c.l.b16 %v4183
        %v4313 = vunpack.c.l.b16 %v4184
        %v4314 = vunpack.c.l.b16 %v4185
        %v4315 = vunpack.c.l.b16 %v4186
        %v4316 = vunpack.c.l.b16 %v4187
        %v4317 = vunpack.c.l.b16 %v4188
        %v4318 = vunpack.c.l.b16 %v4189
        %v4319 = vunpack.c.l.b16 %v4190
        %v4320 = vunpack.c.l.b16 %v4191
        %v4321 = vunpack.c.l.b16 %v4192
        %v4322 = vunpack.c.l.b16 %v4193
        %v4323 = vunpack.c.l.b16 %v4194
        %v4324 = vunpack.c.l.b16 %v4195
        %v4325 = vunpack.c.l.b16 %v4196
        %v4326 = vunpack.c.l.b16 %v4197
        %v4327 = vunpack.c.l.b16 %v4198
        %v4328 = vunpack.c.l.b16 %v4199
        %v4329 = vunpack.c.l.b16 %v4200
        %v4330 = vunpack.c.l.b16 %v4201
        %v4331 = vunpack.c.l.b16 %v4202
        %v4332 = vpack.c.b16 %v4277, %v4276
        %v4333 = vpack.c.b16 %v4279, %v4278
        %v4334 = vpack.c.b16 %v4281, %v4280
        %v4335 = vpack.c.b16 %v4283, %v4282
        %v4336 = vpack.c.b16 %v4285, %v4284
        %v4337 = vpack.c.b16 %v4287, %v4286
        %v4338 = vpack.c.b16 %v4289, %v4288
        %v4339 = vpack.c.b16 %v4291, %v4290
        %v4340 = vpack.c.b16 %v4293, %v4292
        %v4341 = vpack.c.b16 %v4295, %v4294
        %v4342 = vpack.c.b16 %v4297, %v4296
        %v4343 = vpack.c.b16 %v4299, %v4298
        %v4344 = vpack.c.b16 %v4301, %v4300
        %v4345 = vpack.c.b16 %v4303, %v4302
        %v4346 = vpack.c.b16 %v4305, %v4304
        %v4347 = vpack.c.b16 %v4307, %v4306
        %v4348 = vpack.c.b16 %v4309, %v4308
        %v4349 = vpack.c.b16 %v4311, %v4310
        %v4350 = vpack.c.b16 %v4313, %v4312
        %v4351 = vpack.c.b16 %v4315, %v4314
        %v4352 = vpack.c.b16 %v4317, %v4316
        %v4353 = vpack.c.b16 %v4319, %v4318
        %v4354 = vpack.c.b16 %v4321, %v4320
        %v4355 = vpack.c.b16 %v4323, %v4322
        %v4356 = vpack.c.b16 %v4325, %v4324
        %v4357 = vpack.c.b16 %v4327, %v4326
        %v4358 = vpack.c.b16 %v4329, %v4328
        %v4359 = vpack.c.b16 %v4331, %v4330
        %v4389 = vsel %vm3378, %v4216, 0
        %4391 = vmatpush.bf16.msra.mxu0 %v4339
        %4392 = vmatpush.bf16.msra.mxu0 %v4338
        %4393 = vmatpush.bf16.msra.mxu0 %v4337
        %4394 = vmatpush.bf16.msra.mxu0 %v4336
        %4395 = vmatpush.bf16.msra.mxu0 %v4335
        %4396 = vmatpush.bf16.msra.mxu0 %v4334
        %4397 = vmatpush.bf16.msra.mxu0 %v4333
        %4398 = vmatpush.bf16.msra.mxu0 %v4332
        %4399 = vmatmul.bf16.gmra.mxu0 %v4213
        %v4400 = vpop.f32.mrf.mxu0
        %v4401 = vadd.f32 0.0, %v4400
        %v4402 = vpop.f32.mrf.mxu0
        %4403 = vdwg.mxu0
        %4404 = vmatpush.bf16.msra.mxu0 %v4347
        %4405 = vmatpush.bf16.msra.mxu0 %v4346
        %4406 = vmatpush.bf16.msra.mxu0 %v4345
        %4407 = vmatpush.bf16.msra.mxu0 %v4344
        %4408 = vmatpush.bf16.msra.mxu0 %v4343
        %4409 = vmatpush.bf16.msra.mxu0 %v4342
        %4410 = vmatpush.bf16.msra.mxu0 %v4341
        %4411 = vmatpush.bf16.msra.mxu0 %v4340
        %4412 = vmatmul.bf16.gmra.mxu0 %v4214
        %v4413 = vpop.f32.mrf.mxu0
        %v4414 = vadd.f32 %v4401, %v4413
        %v4415 = vpop.f32.mrf.mxu0
        %4416 = vdwg.mxu0
        %4417 = vmatpush.bf16.msra.mxu0 %v4355
        %4418 = vmatpush.bf16.msra.mxu0 %v4354
        %4419 = vmatpush.bf16.msra.mxu0 %v4353
        %4420 = vmatpush.bf16.msra.mxu0 %v4352
        %4421 = vmatpush.bf16.msra.mxu0 %v4351
        %4422 = vmatpush.bf16.msra.mxu0 %v4350
        %4423 = vmatpush.bf16.msra.mxu0 %v4349
        %4424 = vmatpush.bf16.msra.mxu0 %v4348
        %4425 = vmatmul.bf16.gmra.mxu0 %v4215
        %v4426 = vpop.f32.mrf.mxu0
        %v4427 = vadd.f32 %v4414, %v4426
        %v4428 = vpop.f32.mrf.mxu0
        %4429 = vdwg.mxu0
        %4430 = vmatpush.bf16.msra.mxu0 0
        %4431 = vmatpush.bf16.msra.mxu0 0
        %4432 = vmatpush.bf16.msra.mxu0 0
        %4433 = vmatpush.bf16.msra.mxu0 0
        %4434 = vmatpush.bf16.msra.mxu0 %v4359
        %4435 = vmatpush.bf16.msra.mxu0 %v4358
        %4436 = vmatpush.bf16.msra.mxu0 %v4357
        %4437 = vmatpush.bf16.msra.mxu0 %v4356
        %4438 = vmatmul.bf16.gmra.mxu0 %v4389
        %v4439 = vpop.f32.mrf.mxu0
        %v4440 = vadd.f32 %v4427, %v4439
        %v4441 = vpop.f32.mrf.mxu0
        %4442 = vdwg.mxu0
        %v4443 = vadd.f32 %v4141, %v4440
        %s4444 = scalar_lea.vmem %s5, 672
        %v4445 = vld [vmem:[%s4444] sm:$0xf]
        %v4446 = vld [vmem:[%s4444 + $0x4] sm:$0xf]
        %v4447 = vld [vmem:[%s4444 + $0x8] sm:$0xf]
        %v4448 = vld [vmem:[%s4444 + $0xc] sm:$0xf]
        %v4449 = vld [vmem:[%s4444 + $0x10] sm:$0xf]
        %v4450 = vld [vmem:[%s4444 + $0x14] sm:$0xf]
        %v4451 = vld [vmem:[%s4444 + $0x18] sm:$0xf]
        %v4452 = vld [vmem:[%s4444 + $0x1c] sm:$0xf]
        %v4453 = vld [vmem:[%s4444 + $0x20] sm:$0xf]
        %v4454 = vld [vmem:[%s4444 + $0x24] sm:$0xf]
        %v4455 = vld [vmem:[%s4444 + $0x28] sm:$0xf]
        %v4456 = vld [vmem:[%s4444 + $0x2c] sm:$0xf]
        %v4457 = vld [vmem:[%s4444 + $0x30] sm:$0xf]
        %v4458 = vld [vmem:[%s4444 + $0x34] sm:$0xf]
        %v4459 = vld [vmem:[%s4444 + $0x38] sm:$0xf]
        %v4460 = vld [vmem:[%s4444 + $0x3c] sm:$0xf]
        %v4461 = vld [vmem:[%s4444 + $0x40] sm:$0xf]
        %v4462 = vld [vmem:[%s4444 + $0x44] sm:$0xf]
        %v4463 = vld [vmem:[%s4444 + $0x48] sm:$0xf]
        %v4464 = vld [vmem:[%s4444 + $0x4c] sm:$0xf]
        %v4465 = vld [vmem:[%s4444 + $0x50] sm:$0xf]
        %v4466 = vld [vmem:[%s4444 + $0x54] sm:$0xf]
        %v4467 = vld [vmem:[%s4444 + $0x58] sm:$0xf]
        %v4468 = vld [vmem:[%s4444 + $0x5c] sm:$0xf]
        %v4469 = vld [vmem:[%s4444 + $0x60] sm:$0xf]
        %v4470 = vld [vmem:[%s4444 + $0x64] sm:$0xf]
        %v4471 = vld [vmem:[%s4444 + $0x68] sm:$0xf]
        %v4472 = vld [vmem:[%s4444 + $0x6c] sm:$0xf]
        %v4473 = vld [vmem:[%s4444 + $0x70] sm:$0xf]
        %v4474 = vld [vmem:[%s4444 + $0x74] sm:$0xf]
        %v4475 = vld [vmem:[%s4444 + $0x78] sm:$0xf]
        %v4476 = vld [vmem:[%s4444 + $0x7c] sm:$0xf]
        %v4477 = vld [vmem:[%s4444 + $0x80] sm:$0xf]
        %v4478 = vld [vmem:[%s4444 + $0x84] sm:$0xf]
        %v4479 = vld [vmem:[%s4444 + $0x88] sm:$0xf]
        %v4480 = vld [vmem:[%s4444 + $0x8c] sm:$0xf]
        %v4481 = vld [vmem:[%s4444 + $0x90] sm:$0xf]
        %v4482 = vld [vmem:[%s4444 + $0x94] sm:$0xf]
        %v4483 = vld [vmem:[%s4444 + $0x98] sm:$0xf]
        %v4484 = vld [vmem:[%s4444 + $0x9c] sm:$0xf]
        %v4485 = vld [vmem:[%s4444 + $0xa0] sm:$0xf]
        %v4486 = vld [vmem:[%s4444 + $0xa4] sm:$0xf]
        %v4487 = vld [vmem:[%s4444 + $0xa8] sm:$0xf]
        %v4488 = vld [vmem:[%s4444 + $0xac] sm:$0xf]
        %v4489 = vld [vmem:[%s4444 + $0xb0] sm:$0xf]
        %v4490 = vld [vmem:[%s4444 + $0xb4] sm:$0xf]
        %v4491 = vld [vmem:[%s4444 + $0xb8] sm:$0xf]
        %v4492 = vld [vmem:[%s4444 + $0xbc] sm:$0xf]
        %v4493 = vld [vmem:[%s4444 + $0xc0] sm:$0xf]
        %v4494 = vld [vmem:[%s4444 + $0xc4] sm:$0xf]
        %v4495 = vld [vmem:[%s4444 + $0xc8] sm:$0xf]
        %v4496 = vld [vmem:[%s4444 + $0xcc] sm:$0xf]
        %v4497 = vld [vmem:[%s4444 + $0xd0] sm:$0xf]
        %v4498 = vld [vmem:[%s4444 + $0xd4] sm:$0xf]
        %v4499 = vld [vmem:[%s4444 + $0xd8] sm:$0xf]
        %v4500 = vld [vmem:[%s4444 + $0xdc] sm:$0xf]
        %v4502 = vshrl.u32 %v4209, 16
        %v4504 = vrot.slane %v4502, 1
        %v4506 = vshrl.u32 %v4210, 16
        %v4508 = vrot.slane %v4506, 1
        %v4510 = vshrl.u32 %v4211, 16
        %v4512 = vrot.slane %v4510, 1
        %v4514 = vshrl.u32 %v4212, 16
        %v4516 = vrot.slane %v4514, 1
        %v4576 = vunpack.c.l.b16 %v4445
        %v4577 = vunpack.c.l.b16 %v4446
        %v4578 = vunpack.c.l.b16 %v4447
        %v4579 = vunpack.c.l.b16 %v4448
        %v4580 = vunpack.c.l.b16 %v4449
        %v4581 = vunpack.c.l.b16 %v4450
        %v4582 = vunpack.c.l.b16 %v4451
        %v4583 = vunpack.c.l.b16 %v4452
        %v4584 = vunpack.c.l.b16 %v4453
        %v4585 = vunpack.c.l.b16 %v4454
        %v4586 = vunpack.c.l.b16 %v4455
        %v4587 = vunpack.c.l.b16 %v4456
        %v4588 = vunpack.c.l.b16 %v4457
        %v4589 = vunpack.c.l.b16 %v4458
        %v4590 = vunpack.c.l.b16 %v4459
        %v4591 = vunpack.c.l.b16 %v4460
        %v4592 = vunpack.c.l.b16 %v4461
        %v4593 = vunpack.c.l.b16 %v4462
        %v4594 = vunpack.c.l.b16 %v4463
        %v4595 = vunpack.c.l.b16 %v4464
        %v4596 = vunpack.c.l.b16 %v4465
        %v4597 = vunpack.c.l.b16 %v4466
        %v4598 = vunpack.c.l.b16 %v4467
        %v4599 = vunpack.c.l.b16 %v4468
        %v4600 = vunpack.c.l.b16 %v4469
        %v4601 = vunpack.c.l.b16 %v4470
        %v4602 = vunpack.c.l.b16 %v4471
        %v4603 = vunpack.c.l.b16 %v4472
        %v4604 = vunpack.c.l.b16 %v4473
        %v4605 = vunpack.c.l.b16 %v4474
        %v4606 = vunpack.c.l.b16 %v4475
        %v4607 = vunpack.c.l.b16 %v4476
        %v4608 = vunpack.c.l.b16 %v4477
        %v4609 = vunpack.c.l.b16 %v4478
        %v4610 = vunpack.c.l.b16 %v4479
        %v4611 = vunpack.c.l.b16 %v4480
        %v4612 = vunpack.c.l.b16 %v4481
        %v4613 = vunpack.c.l.b16 %v4482
        %v4614 = vunpack.c.l.b16 %v4483
        %v4615 = vunpack.c.l.b16 %v4484
        %v4616 = vunpack.c.l.b16 %v4485
        %v4617 = vunpack.c.l.b16 %v4486
        %v4618 = vunpack.c.l.b16 %v4487
        %v4619 = vunpack.c.l.b16 %v4488
        %v4620 = vunpack.c.l.b16 %v4489
        %v4621 = vunpack.c.l.b16 %v4490
        %v4622 = vunpack.c.l.b16 %v4491
        %v4623 = vunpack.c.l.b16 %v4492
        %v4624 = vunpack.c.l.b16 %v4493
        %v4625 = vunpack.c.l.b16 %v4494
        %v4626 = vunpack.c.l.b16 %v4495
        %v4627 = vunpack.c.l.b16 %v4496
        %v4628 = vunpack.c.l.b16 %v4497
        %v4629 = vunpack.c.l.b16 %v4498
        %v4630 = vunpack.c.l.b16 %v4499
        %v4631 = vunpack.c.l.b16 %v4500
        %v4632 = vpack.c.b16 %v4577, %v4576
        %v4633 = vpack.c.b16 %v4579, %v4578
        %v4634 = vpack.c.b16 %v4581, %v4580
        %v4635 = vpack.c.b16 %v4583, %v4582
        %v4636 = vpack.c.b16 %v4585, %v4584
        %v4637 = vpack.c.b16 %v4587, %v4586
        %v4638 = vpack.c.b16 %v4589, %v4588
        %v4639 = vpack.c.b16 %v4591, %v4590
        %v4640 = vpack.c.b16 %v4593, %v4592
        %v4641 = vpack.c.b16 %v4595, %v4594
        %v4642 = vpack.c.b16 %v4597, %v4596
        %v4643 = vpack.c.b16 %v4599, %v4598
        %v4644 = vpack.c.b16 %v4601, %v4600
        %v4645 = vpack.c.b16 %v4603, %v4602
        %v4646 = vpack.c.b16 %v4605, %v4604
        %v4647 = vpack.c.b16 %v4607, %v4606
        %v4648 = vpack.c.b16 %v4609, %v4608
        %v4649 = vpack.c.b16 %v4611, %v4610
        %v4650 = vpack.c.b16 %v4613, %v4612
        %v4651 = vpack.c.b16 %v4615, %v4614
        %v4652 = vpack.c.b16 %v4617, %v4616
        %v4653 = vpack.c.b16 %v4619, %v4618
        %v4654 = vpack.c.b16 %v4621, %v4620
        %v4655 = vpack.c.b16 %v4623, %v4622
        %v4656 = vpack.c.b16 %v4625, %v4624
        %v4657 = vpack.c.b16 %v4627, %v4626
        %v4658 = vpack.c.b16 %v4629, %v4628
        %v4659 = vpack.c.b16 %v4631, %v4630
        %v4689 = vsel %vm3378, %v4516, 0
        %4691 = vmatpush.bf16.msra.mxu0 %v4639
        %4692 = vmatpush.bf16.msra.mxu0 %v4638
        %4693 = vmatpush.bf16.msra.mxu0 %v4637
        %4694 = vmatpush.bf16.msra.mxu0 %v4636
        %4695 = vmatpush.bf16.msra.mxu0 %v4635
        %4696 = vmatpush.bf16.msra.mxu0 %v4634
        %4697 = vmatpush.bf16.msra.mxu0 %v4633
        %4698 = vmatpush.bf16.msra.mxu0 %v4632
        %4699 = vmatmul.bf16.gmra.mxu0 %v4504
        %v4700 = vpop.f32.mrf.mxu0
        %v4701 = vadd.f32 0.0, %v4700
        %v4702 = vpop.f32.mrf.mxu0
        %4703 = vdwg.mxu0
        %4704 = vmatpush.bf16.msra.mxu0 %v4647
        %4705 = vmatpush.bf16.msra.mxu0 %v4646
        %4706 = vmatpush.bf16.msra.mxu0 %v4645
        %4707 = vmatpush.bf16.msra.mxu0 %v4644
        %4708 = vmatpush.bf16.msra.mxu0 %v4643
        %4709 = vmatpush.bf16.msra.mxu0 %v4642
        %4710 = vmatpush.bf16.msra.mxu0 %v4641
        %4711 = vmatpush.bf16.msra.mxu0 %v4640
        %4712 = vmatmul.bf16.gmra.mxu0 %v4508
        %v4713 = vpop.f32.mrf.mxu0
        %v4714 = vadd.f32 %v4701, %v4713
        %v4715 = vpop.f32.mrf.mxu0
        %4716 = vdwg.mxu0
        %4717 = vmatpush.bf16.msra.mxu0 %v4655
        %4718 = vmatpush.bf16.msra.mxu0 %v4654
        %4719 = vmatpush.bf16.msra.mxu0 %v4653
        %4720 = vmatpush.bf16.msra.mxu0 %v4652
        %4721 = vmatpush.bf16.msra.mxu0 %v4651
        %4722 = vmatpush.bf16.msra.mxu0 %v4650
        %4723 = vmatpush.bf16.msra.mxu0 %v4649
        %4724 = vmatpush.bf16.msra.mxu0 %v4648
        %4725 = vmatmul.bf16.gmra.mxu0 %v4512
        %v4726 = vpop.f32.mrf.mxu0
        %v4727 = vadd.f32 %v4714, %v4726
        %v4728 = vpop.f32.mrf.mxu0
        %4729 = vdwg.mxu0
        %4730 = vmatpush.bf16.msra.mxu0 0
        %4731 = vmatpush.bf16.msra.mxu0 0
        %4732 = vmatpush.bf16.msra.mxu0 0
        %4733 = vmatpush.bf16.msra.mxu0 0
        %4734 = vmatpush.bf16.msra.mxu0 %v4659
        %4735 = vmatpush.bf16.msra.mxu0 %v4658
        %4736 = vmatpush.bf16.msra.mxu0 %v4657
        %4737 = vmatpush.bf16.msra.mxu0 %v4656
        %4738 = vmatmul.bf16.gmra.mxu0 %v4689
        %v4739 = vpop.f32.mrf.mxu0
        %v4740 = vadd.f32 %v4727, %v4739
        %v4741 = vpop.f32.mrf.mxu0
        %4742 = vdwg.mxu0
        %v4743 = vadd.f32 %v4443, %v4740
        %v4744 = vld [vmem:[#allocation5] sm:$0x44]
        %v4745 = vld [vmem:[#allocation5 + $0x8] sm:$0x44]
        %s4746 = scalar_lea.vmem %s5, 896
        %v4747 = vld [vmem:[%s4746] sm:$0xf]
        %v4748 = vld [vmem:[%s4746 + $0x4] sm:$0xf]
        %v4749 = vld [vmem:[%s4746 + $0x8] sm:$0xf]
        %v4750 = vld [vmem:[%s4746 + $0xc] sm:$0xf]
        %v4751 = vld [vmem:[%s4746 + $0x10] sm:$0xf]
        %v4752 = vld [vmem:[%s4746 + $0x14] sm:$0xf]
        %v4753 = vld [vmem:[%s4746 + $0x18] sm:$0xf]
        %v4754 = vld [vmem:[%s4746 + $0x1c] sm:$0xf]
        %v4755 = vld [vmem:[%s4746 + $0x20] sm:$0xf]
        %v4756 = vld [vmem:[%s4746 + $0x24] sm:$0xf]
        %v4757 = vld [vmem:[%s4746 + $0x28] sm:$0xf]
        %v4758 = vld [vmem:[%s4746 + $0x2c] sm:$0xf]
        %v4759 = vld [vmem:[%s4746 + $0x30] sm:$0xf]
        %v4760 = vld [vmem:[%s4746 + $0x34] sm:$0xf]
        %v4761 = vld [vmem:[%s4746 + $0x38] sm:$0xf]
        %v4762 = vld [vmem:[%s4746 + $0x3c] sm:$0xf]
        %v4763 = vld [vmem:[%s4746 + $0x40] sm:$0xf]
        %v4764 = vld [vmem:[%s4746 + $0x44] sm:$0xf]
        %v4765 = vld [vmem:[%s4746 + $0x48] sm:$0xf]
        %v4766 = vld [vmem:[%s4746 + $0x4c] sm:$0xf]
        %v4767 = vld [vmem:[%s4746 + $0x50] sm:$0xf]
        %v4768 = vld [vmem:[%s4746 + $0x54] sm:$0xf]
        %v4769 = vld [vmem:[%s4746 + $0x58] sm:$0xf]
        %v4770 = vld [vmem:[%s4746 + $0x5c] sm:$0xf]
        %v4771 = vld [vmem:[%s4746 + $0x60] sm:$0xf]
        %v4772 = vld [vmem:[%s4746 + $0x64] sm:$0xf]
        %v4773 = vld [vmem:[%s4746 + $0x68] sm:$0xf]
        %v4774 = vld [vmem:[%s4746 + $0x6c] sm:$0xf]
        %v4775 = vld [vmem:[%s4746 + $0x70] sm:$0xf]
        %v4776 = vld [vmem:[%s4746 + $0x74] sm:$0xf]
        %v4777 = vld [vmem:[%s4746 + $0x78] sm:$0xf]
        %v4778 = vld [vmem:[%s4746 + $0x7c] sm:$0xf]
        %v4779 = vld [vmem:[%s4746 + $0x80] sm:$0xf]
        %v4780 = vld [vmem:[%s4746 + $0x84] sm:$0xf]
        %v4781 = vld [vmem:[%s4746 + $0x88] sm:$0xf]
        %v4782 = vld [vmem:[%s4746 + $0x8c] sm:$0xf]
        %v4783 = vld [vmem:[%s4746 + $0x90] sm:$0xf]
        %v4784 = vld [vmem:[%s4746 + $0x94] sm:$0xf]
        %v4785 = vld [vmem:[%s4746 + $0x98] sm:$0xf]
        %v4786 = vld [vmem:[%s4746 + $0x9c] sm:$0xf]
        %v4787 = vld [vmem:[%s4746 + $0xa0] sm:$0xf]
        %v4788 = vld [vmem:[%s4746 + $0xa4] sm:$0xf]
        %v4789 = vld [vmem:[%s4746 + $0xa8] sm:$0xf]
        %v4790 = vld [vmem:[%s4746 + $0xac] sm:$0xf]
        %v4791 = vld [vmem:[%s4746 + $0xb0] sm:$0xf]
        %v4792 = vld [vmem:[%s4746 + $0xb4] sm:$0xf]
        %v4793 = vld [vmem:[%s4746 + $0xb8] sm:$0xf]
        %v4794 = vld [vmem:[%s4746 + $0xbc] sm:$0xf]
        %v4795 = vld [vmem:[%s4746 + $0xc0] sm:$0xf]
        %v4796 = vld [vmem:[%s4746 + $0xc4] sm:$0xf]
        %v4797 = vld [vmem:[%s4746 + $0xc8] sm:$0xf]
        %v4798 = vld [vmem:[%s4746 + $0xcc] sm:$0xf]
        %v4799 = vld [vmem:[%s4746 + $0xd0] sm:$0xf]
        %v4800 = vld [vmem:[%s4746 + $0xd4] sm:$0xf]
        %v4801 = vld [vmem:[%s4746 + $0xd8] sm:$0xf]
        %v4802 = vld [vmem:[%s4746 + $0xdc] sm:$0xf]
        %v4805 = vunpack.c.l.b16 %v4744
        %v4806 = vunpack.c.h.b16 %v4744
        %v4807 = vunpack.c.l.b16 %v4745
        %v4808 = vunpack.c.h.b16 %v4745
        %v4809 = vpack.c.b16 %v4805, %v4805
        %v4810 = vpack.c.b16 %v4806, %v4806
        %v4811 = vpack.c.b16 %v4807, %v4807
        %v4812 = vpack.c.b16 %v4808, %v4808
        %v4813 = vrot.slane %v4809, 2
        %v4814 = vrot.slane %v4810, 2
        %v4815 = vrot.slane %v4811, 2
        %v4816 = vrot.slane %v4812, 2
        %v4876 = vunpack.c.l.b16 %v4747
        %v4877 = vunpack.c.l.b16 %v4748
        %v4878 = vunpack.c.l.b16 %v4749
        %v4879 = vunpack.c.l.b16 %v4750
        %v4880 = vunpack.c.l.b16 %v4751
        %v4881 = vunpack.c.l.b16 %v4752
        %v4882 = vunpack.c.l.b16 %v4753
        %v4883 = vunpack.c.l.b16 %v4754
        %v4884 = vunpack.c.l.b16 %v4755
        %v4885 = vunpack.c.l.b16 %v4756
        %v4886 = vunpack.c.l.b16 %v4757
        %v4887 = vunpack.c.l.b16 %v4758
        %v4888 = vunpack.c.l.b16 %v4759
        %v4889 = vunpack.c.l.b16 %v4760
        %v4890 = vunpack.c.l.b16 %v4761
        %v4891 = vunpack.c.l.b16 %v4762
        %v4892 = vunpack.c.l.b16 %v4763
        %v4893 = vunpack.c.l.b16 %v4764
        %v4894 = vunpack.c.l.b16 %v4765
        %v4895 = vunpack.c.l.b16 %v4766
        %v4896 = vunpack.c.l.b16 %v4767
        %v4897 = vunpack.c.l.b16 %v4768
        %v4898 = vunpack.c.l.b16 %v4769
        %v4899 = vunpack.c.l.b16 %v4770
        %v4900 = vunpack.c.l.b16 %v4771
        %v4901 = vunpack.c.l.b16 %v4772
        %v4902 = vunpack.c.l.b16 %v4773
        %v4903 = vunpack.c.l.b16 %v4774
        %v4904 = vunpack.c.l.b16 %v4775
        %v4905 = vunpack.c.l.b16 %v4776
        %v4906 = vunpack.c.l.b16 %v4777
        %v4907 = vunpack.c.l.b16 %v4778
        %v4908 = vunpack.c.l.b16 %v4779
        %v4909 = vunpack.c.l.b16 %v4780
        %v4910 = vunpack.c.l.b16 %v4781
        %v4911 = vunpack.c.l.b16 %v4782
        %v4912 = vunpack.c.l.b16 %v4783
        %v4913 = vunpack.c.l.b16 %v4784
        %v4914 = vunpack.c.l.b16 %v4785
        %v4915 = vunpack.c.l.b16 %v4786
        %v4916 = vunpack.c.l.b16 %v4787
        %v4917 = vunpack.c.l.b16 %v4788
        %v4918 = vunpack.c.l.b16 %v4789
        %v4919 = vunpack.c.l.b16 %v4790
        %v4920 = vunpack.c.l.b16 %v4791
        %v4921 = vunpack.c.l.b16 %v4792
        %v4922 = vunpack.c.l.b16 %v4793
        %v4923 = vunpack.c.l.b16 %v4794
        %v4924 = vunpack.c.l.b16 %v4795
        %v4925 = vunpack.c.l.b16 %v4796
        %v4926 = vunpack.c.l.b16 %v4797
        %v4927 = vunpack.c.l.b16 %v4798
        %v4928 = vunpack.c.l.b16 %v4799
        %v4929 = vunpack.c.l.b16 %v4800
        %v4930 = vunpack.c.l.b16 %v4801
        %v4931 = vunpack.c.l.b16 %v4802
        %v4932 = vpack.c.b16 %v4877, %v4876
        %v4933 = vpack.c.b16 %v4879, %v4878
        %v4934 = vpack.c.b16 %v4881, %v4880
        %v4935 = vpack.c.b16 %v4883, %v4882
        %v4936 = vpack.c.b16 %v4885, %v4884
        %v4937 = vpack.c.b16 %v4887, %v4886
        %v4938 = vpack.c.b16 %v4889, %v4888
        %v4939 = vpack.c.b16 %v4891, %v4890
        %v4940 = vpack.c.b16 %v4893, %v4892
        %v4941 = vpack.c.b16 %v4895, %v4894
        %v4942 = vpack.c.b16 %v4897, %v4896
        %v4943 = vpack.c.b16 %v4899, %v4898
        %v4944 = vpack.c.b16 %v4901, %v4900
        %v4945 = vpack.c.b16 %v4903, %v4902
        %v4946 = vpack.c.b16 %v4905, %v4904
        %v4947 = vpack.c.b16 %v4907, %v4906
        %v4948 = vpack.c.b16 %v4909, %v4908
        %v4949 = vpack.c.b16 %v4911, %v4910
        %v4950 = vpack.c.b16 %v4913, %v4912
        %v4951 = vpack.c.b16 %v4915, %v4914
        %v4952 = vpack.c.b16 %v4917, %v4916
        %v4953 = vpack.c.b16 %v4919, %v4918
        %v4954 = vpack.c.b16 %v4921, %v4920
        %v4955 = vpack.c.b16 %v4923, %v4922
        %v4956 = vpack.c.b16 %v4925, %v4924
        %v4957 = vpack.c.b16 %v4927, %v4926
        %v4958 = vpack.c.b16 %v4929, %v4928
        %v4959 = vpack.c.b16 %v4931, %v4930
        %v4989 = vsel %vm3378, %v4816, 0
        %4991 = vmatpush.bf16.msra.mxu0 %v4939
        %4992 = vmatpush.bf16.msra.mxu0 %v4938
        %4993 = vmatpush.bf16.msra.mxu0 %v4937
        %4994 = vmatpush.bf16.msra.mxu0 %v4936
        %4995 = vmatpush.bf16.msra.mxu0 %v4935
        %4996 = vmatpush.bf16.msra.mxu0 %v4934
        %4997 = vmatpush.bf16.msra.mxu0 %v4933
        %4998 = vmatpush.bf16.msra.mxu0 %v4932
        %4999 = vmatmul.bf16.gmra.mxu0 %v4813
        %v5000 = vpop.f32.mrf.mxu0
        %v5001 = vadd.f32 0.0, %v5000
        %v5002 = vpop.f32.mrf.mxu0
        %5003 = vdwg.mxu0
        %5004 = vmatpush.bf16.msra.mxu0 %v4947
        %5005 = vmatpush.bf16.msra.mxu0 %v4946
        %5006 = vmatpush.bf16.msra.mxu0 %v4945
        %5007 = vmatpush.bf16.msra.mxu0 %v4944
        %5008 = vmatpush.bf16.msra.mxu0 %v4943
        %5009 = vmatpush.bf16.msra.mxu0 %v4942
        %5010 = vmatpush.bf16.msra.mxu0 %v4941
        %5011 = vmatpush.bf16.msra.mxu0 %v4940
        %5012 = vmatmul.bf16.gmra.mxu0 %v4814
        %v5013 = vpop.f32.mrf.mxu0
        %v5014 = vadd.f32 %v5001, %v5013
        %v5015 = vpop.f32.mrf.mxu0
        %5016 = vdwg.mxu0
        %5017 = vmatpush.bf16.msra.mxu0 %v4955
        %5018 = vmatpush.bf16.msra.mxu0 %v4954
        %5019 = vmatpush.bf16.msra.mxu0 %v4953
        %5020 = vmatpush.bf16.msra.mxu0 %v4952
        %5021 = vmatpush.bf16.msra.mxu0 %v4951
        %5022 = vmatpush.bf16.msra.mxu0 %v4950
        %5023 = vmatpush.bf16.msra.mxu0 %v4949
        %5024 = vmatpush.bf16.msra.mxu0 %v4948
        %5025 = vmatmul.bf16.gmra.mxu0 %v4815
        %v5026 = vpop.f32.mrf.mxu0
        %v5027 = vadd.f32 %v5014, %v5026
        %v5028 = vpop.f32.mrf.mxu0
        %5029 = vdwg.mxu0
        %5030 = vmatpush.bf16.msra.mxu0 0
        %5031 = vmatpush.bf16.msra.mxu0 0
        %5032 = vmatpush.bf16.msra.mxu0 0
        %5033 = vmatpush.bf16.msra.mxu0 0
        %5034 = vmatpush.bf16.msra.mxu0 %v4959
        %5035 = vmatpush.bf16.msra.mxu0 %v4958
        %5036 = vmatpush.bf16.msra.mxu0 %v4957
        %5037 = vmatpush.bf16.msra.mxu0 %v4956
        %5038 = vmatmul.bf16.gmra.mxu0 %v4989
        %v5039 = vpop.f32.mrf.mxu0
        %v5040 = vadd.f32 %v5027, %v5039
        %v5041 = vpop.f32.mrf.mxu0
        %5042 = vdwg.mxu0
        %v5043 = vadd.f32 %v4743, %v5040
        %s5044 = scalar_lea.vmem %s5, 1120
        %v5045 = vld [vmem:[%s5044] sm:$0xf]
        %v5046 = vld [vmem:[%s5044 + $0x4] sm:$0xf]
        %v5047 = vld [vmem:[%s5044 + $0x8] sm:$0xf]
        %v5048 = vld [vmem:[%s5044 + $0xc] sm:$0xf]
        %v5049 = vld [vmem:[%s5044 + $0x10] sm:$0xf]
        %v5050 = vld [vmem:[%s5044 + $0x14] sm:$0xf]
        %v5051 = vld [vmem:[%s5044 + $0x18] sm:$0xf]
        %v5052 = vld [vmem:[%s5044 + $0x1c] sm:$0xf]
        %v5053 = vld [vmem:[%s5044 + $0x20] sm:$0xf]
        %v5054 = vld [vmem:[%s5044 + $0x24] sm:$0xf]
        %v5055 = vld [vmem:[%s5044 + $0x28] sm:$0xf]
        %v5056 = vld [vmem:[%s5044 + $0x2c] sm:$0xf]
        %v5057 = vld [vmem:[%s5044 + $0x30] sm:$0xf]
        %v5058 = vld [vmem:[%s5044 + $0x34] sm:$0xf]
        %v5059 = vld [vmem:[%s5044 + $0x38] sm:$0xf]
        %v5060 = vld [vmem:[%s5044 + $0x3c] sm:$0xf]
        %v5061 = vld [vmem:[%s5044 + $0x40] sm:$0xf]
        %v5062 = vld [vmem:[%s5044 + $0x44] sm:$0xf]
        %v5063 = vld [vmem:[%s5044 + $0x48] sm:$0xf]
        %v5064 = vld [vmem:[%s5044 + $0x4c] sm:$0xf]
        %v5065 = vld [vmem:[%s5044 + $0x50] sm:$0xf]
        %v5066 = vld [vmem:[%s5044 + $0x54] sm:$0xf]
        %v5067 = vld [vmem:[%s5044 + $0x58] sm:$0xf]
        %v5068 = vld [vmem:[%s5044 + $0x5c] sm:$0xf]
        %v5069 = vld [vmem:[%s5044 + $0x60] sm:$0xf]
        %v5070 = vld [vmem:[%s5044 + $0x64] sm:$0xf]
        %v5071 = vld [vmem:[%s5044 + $0x68] sm:$0xf]
        %v5072 = vld [vmem:[%s5044 + $0x6c] sm:$0xf]
        %v5073 = vld [vmem:[%s5044 + $0x70] sm:$0xf]
        %v5074 = vld [vmem:[%s5044 + $0x74] sm:$0xf]
        %v5075 = vld [vmem:[%s5044 + $0x78] sm:$0xf]
        %v5076 = vld [vmem:[%s5044 + $0x7c] sm:$0xf]
        %v5077 = vld [vmem:[%s5044 + $0x80] sm:$0xf]
        %v5078 = vld [vmem:[%s5044 + $0x84] sm:$0xf]
        %v5079 = vld [vmem:[%s5044 + $0x88] sm:$0xf]
        %v5080 = vld [vmem:[%s5044 + $0x8c] sm:$0xf]
        %v5081 = vld [vmem:[%s5044 + $0x90] sm:$0xf]
        %v5082 = vld [vmem:[%s5044 + $0x94] sm:$0xf]
        %v5083 = vld [vmem:[%s5044 + $0x98] sm:$0xf]
        %v5084 = vld [vmem:[%s5044 + $0x9c] sm:$0xf]
        %v5085 = vld [vmem:[%s5044 + $0xa0] sm:$0xf]
        %v5086 = vld [vmem:[%s5044 + $0xa4] sm:$0xf]
        %v5087 = vld [vmem:[%s5044 + $0xa8] sm:$0xf]
        %v5088 = vld [vmem:[%s5044 + $0xac] sm:$0xf]
        %v5089 = vld [vmem:[%s5044 + $0xb0] sm:$0xf]
        %v5090 = vld [vmem:[%s5044 + $0xb4] sm:$0xf]
        %v5091 = vld [vmem:[%s5044 + $0xb8] sm:$0xf]
        %v5092 = vld [vmem:[%s5044 + $0xbc] sm:$0xf]
        %v5093 = vld [vmem:[%s5044 + $0xc0] sm:$0xf]
        %v5094 = vld [vmem:[%s5044 + $0xc4] sm:$0xf]
        %v5095 = vld [vmem:[%s5044 + $0xc8] sm:$0xf]
        %v5096 = vld [vmem:[%s5044 + $0xcc] sm:$0xf]
        %v5097 = vld [vmem:[%s5044 + $0xd0] sm:$0xf]
        %v5098 = vld [vmem:[%s5044 + $0xd4] sm:$0xf]
        %v5099 = vld [vmem:[%s5044 + $0xd8] sm:$0xf]
        %v5100 = vld [vmem:[%s5044 + $0xdc] sm:$0xf]
        %v5102 = vshrl.u32 %v4809, 16
        %v5104 = vrot.slane %v5102, 2
        %v5106 = vshrl.u32 %v4810, 16
        %v5108 = vrot.slane %v5106, 2
        %v5110 = vshrl.u32 %v4811, 16
        %v5112 = vrot.slane %v5110, 2
        %v5114 = vshrl.u32 %v4812, 16
        %v5116 = vrot.slane %v5114, 2
        %v5176 = vunpack.c.l.b16 %v5045
        %v5177 = vunpack.c.l.b16 %v5046
        %v5178 = vunpack.c.l.b16 %v5047
        %v5179 = vunpack.c.l.b16 %v5048
        %v5180 = vunpack.c.l.b16 %v5049
        %v5181 = vunpack.c.l.b16 %v5050
        %v5182 = vunpack.c.l.b16 %v5051
        %v5183 = vunpack.c.l.b16 %v5052
        %v5184 = vunpack.c.l.b16 %v5053
        %v5185 = vunpack.c.l.b16 %v5054
        %v5186 = vunpack.c.l.b16 %v5055
        %v5187 = vunpack.c.l.b16 %v5056
        %v5188 = vunpack.c.l.b16 %v5057
        %v5189 = vunpack.c.l.b16 %v5058
        %v5190 = vunpack.c.l.b16 %v5059
        %v5191 = vunpack.c.l.b16 %v5060
        %v5192 = vunpack.c.l.b16 %v5061
        %v5193 = vunpack.c.l.b16 %v5062
        %v5194 = vunpack.c.l.b16 %v5063
        %v5195 = vunpack.c.l.b16 %v5064
        %v5196 = vunpack.c.l.b16 %v5065
        %v5197 = vunpack.c.l.b16 %v5066
        %v5198 = vunpack.c.l.b16 %v5067
        %v5199 = vunpack.c.l.b16 %v5068
        %v5200 = vunpack.c.l.b16 %v5069
        %v5201 = vunpack.c.l.b16 %v5070
        %v5202 = vunpack.c.l.b16 %v5071
        %v5203 = vunpack.c.l.b16 %v5072
        %v5204 = vunpack.c.l.b16 %v5073
        %v5205 = vunpack.c.l.b16 %v5074
        %v5206 = vunpack.c.l.b16 %v5075
        %v5207 = vunpack.c.l.b16 %v5076
        %v5208 = vunpack.c.l.b16 %v5077
        %v5209 = vunpack.c.l.b16 %v5078
        %v5210 = vunpack.c.l.b16 %v5079
        %v5211 = vunpack.c.l.b16 %v5080
        %v5212 = vunpack.c.l.b16 %v5081
        %v5213 = vunpack.c.l.b16 %v5082
        %v5214 = vunpack.c.l.b16 %v5083
        %v5215 = vunpack.c.l.b16 %v5084
        %v5216 = vunpack.c.l.b16 %v5085
        %v5217 = vunpack.c.l.b16 %v5086
        %v5218 = vunpack.c.l.b16 %v5087
        %v5219 = vunpack.c.l.b16 %v5088
        %v5220 = vunpack.c.l.b16 %v5089
        %v5221 = vunpack.c.l.b16 %v5090
        %v5222 = vunpack.c.l.b16 %v5091
        %v5223 = vunpack.c.l.b16 %v5092
        %v5224 = vunpack.c.l.b16 %v5093
        %v5225 = vunpack.c.l.b16 %v5094
        %v5226 = vunpack.c.l.b16 %v5095
        %v5227 = vunpack.c.l.b16 %v5096
        %v5228 = vunpack.c.l.b16 %v5097
        %v5229 = vunpack.c.l.b16 %v5098
        %v5230 = vunpack.c.l.b16 %v5099
        %v5231 = vunpack.c.l.b16 %v5100
        %v5232 = vpack.c.b16 %v5177, %v5176
        %v5233 = vpack.c.b16 %v5179, %v5178
        %v5234 = vpack.c.b16 %v5181, %v5180
        %v5235 = vpack.c.b16 %v5183, %v5182
        %v5236 = vpack.c.b16 %v5185, %v5184
        %v5237 = vpack.c.b16 %v5187, %v5186
        %v5238 = vpack.c.b16 %v5189, %v5188
        %v5239 = vpack.c.b16 %v5191, %v5190
        %v5240 = vpack.c.b16 %v5193, %v5192
        %v5241 = vpack.c.b16 %v5195, %v5194
        %v5242 = vpack.c.b16 %v5197, %v5196
        %v5243 = vpack.c.b16 %v5199, %v5198
        %v5244 = vpack.c.b16 %v5201, %v5200
        %v5245 = vpack.c.b16 %v5203, %v5202
        %v5246 = vpack.c.b16 %v5205, %v5204
        %v5247 = vpack.c.b16 %v5207, %v5206
        %v5248 = vpack.c.b16 %v5209, %v5208
        %v5249 = vpack.c.b16 %v5211, %v5210
        %v5250 = vpack.c.b16 %v5213, %v5212
        %v5251 = vpack.c.b16 %v5215, %v5214
        %v5252 = vpack.c.b16 %v5217, %v5216
        %v5253 = vpack.c.b16 %v5219, %v5218
        %v5254 = vpack.c.b16 %v5221, %v5220
        %v5255 = vpack.c.b16 %v5223, %v5222
        %v5256 = vpack.c.b16 %v5225, %v5224
        %v5257 = vpack.c.b16 %v5227, %v5226
        %v5258 = vpack.c.b16 %v5229, %v5228
        %v5259 = vpack.c.b16 %v5231, %v5230
        %v5289 = vsel %vm3378, %v5116, 0
        %5291 = vmatpush.bf16.msra.mxu0 %v5239
        %5292 = vmatpush.bf16.msra.mxu0 %v5238
        %5293 = vmatpush.bf16.msra.mxu0 %v5237
        %5294 = vmatpush.bf16.msra.mxu0 %v5236
        %5295 = vmatpush.bf16.msra.mxu0 %v5235
        %5296 = vmatpush.bf16.msra.mxu0 %v5234
        %5297 = vmatpush.bf16.msra.mxu0 %v5233
        %5298 = vmatpush.bf16.msra.mxu0 %v5232
        %5299 = vmatmul.bf16.gmra.mxu0 %v5104
        %v5300 = vpop.f32.mrf.mxu0
        %v5301 = vadd.f32 0.0, %v5300
        %v5302 = vpop.f32.mrf.mxu0
        %5303 = vdwg.mxu0
        %5304 = vmatpush.bf16.msra.mxu0 %v5247
        %5305 = vmatpush.bf16.msra.mxu0 %v5246
        %5306 = vmatpush.bf16.msra.mxu0 %v5245
        %5307 = vmatpush.bf16.msra.mxu0 %v5244
        %5308 = vmatpush.bf16.msra.mxu0 %v5243
        %5309 = vmatpush.bf16.msra.mxu0 %v5242
        %5310 = vmatpush.bf16.msra.mxu0 %v5241
        %5311 = vmatpush.bf16.msra.mxu0 %v5240
        %5312 = vmatmul.bf16.gmra.mxu0 %v5108
        %v5313 = vpop.f32.mrf.mxu0
        %v5314 = vadd.f32 %v5301, %v5313
        %v5315 = vpop.f32.mrf.mxu0
        %5316 = vdwg.mxu0
        %5317 = vmatpush.bf16.msra.mxu0 %v5255
        %5318 = vmatpush.bf16.msra.mxu0 %v5254
        %5319 = vmatpush.bf16.msra.mxu0 %v5253
        %5320 = vmatpush.bf16.msra.mxu0 %v5252
        %5321 = vmatpush.bf16.msra.mxu0 %v5251
        %5322 = vmatpush.bf16.msra.mxu0 %v5250
        %5323 = vmatpush.bf16.msra.mxu0 %v5249
        %5324 = vmatpush.bf16.msra.mxu0 %v5248
        %5325 = vmatmul.bf16.gmra.mxu0 %v5112
        %v5326 = vpop.f32.mrf.mxu0
        %v5327 = vadd.f32 %v5314, %v5326
        %v5328 = vpop.f32.mrf.mxu0
        %5329 = vdwg.mxu0
        %5330 = vmatpush.bf16.msra.mxu0 0
        %5331 = vmatpush.bf16.msra.mxu0 0
        %5332 = vmatpush.bf16.msra.mxu0 0
        %5333 = vmatpush.bf16.msra.mxu0 0
        %5334 = vmatpush.bf16.msra.mxu0 %v5259
        %5335 = vmatpush.bf16.msra.mxu0 %v5258
        %5336 = vmatpush.bf16.msra.mxu0 %v5257
        %5337 = vmatpush.bf16.msra.mxu0 %v5256
        %5338 = vmatmul.bf16.gmra.mxu0 %v5289
        %v5339 = vpop.f32.mrf.mxu0
        %v5340 = vadd.f32 %v5327, %v5339
        %v5341 = vpop.f32.mrf.mxu0
        %5342 = vdwg.mxu0
        %v5343 = vadd.f32 %v5043, %v5340
        %v5344 = vld [vmem:[#allocation5] sm:$0x88]
        %v5345 = vld [vmem:[#allocation5 + $0x8] sm:$0x88]
        %s5346 = scalar_lea.vmem %s5, 1344
        %v5347 = vld [vmem:[%s5346] sm:$0xf]
        %v5348 = vld [vmem:[%s5346 + $0x4] sm:$0xf]
        %v5349 = vld [vmem:[%s5346 + $0x8] sm:$0xf]
        %v5350 = vld [vmem:[%s5346 + $0xc] sm:$0xf]
        %v5351 = vld [vmem:[%s5346 + $0x10] sm:$0xf]
        %v5352 = vld [vmem:[%s5346 + $0x14] sm:$0xf]
        %v5353 = vld [vmem:[%s5346 + $0x18] sm:$0xf]
        %v5354 = vld [vmem:[%s5346 + $0x1c] sm:$0xf]
        %v5355 = vld [vmem:[%s5346 + $0x20] sm:$0xf]
        %v5356 = vld [vmem:[%s5346 + $0x24] sm:$0xf]
        %v5357 = vld [vmem:[%s5346 + $0x28] sm:$0xf]
        %v5358 = vld [vmem:[%s5346 + $0x2c] sm:$0xf]
        %v5359 = vld [vmem:[%s5346 + $0x30] sm:$0xf]
        %v5360 = vld [vmem:[%s5346 + $0x34] sm:$0xf]
        %v5361 = vld [vmem:[%s5346 + $0x38] sm:$0xf]
        %v5362 = vld [vmem:[%s5346 + $0x3c] sm:$0xf]
        %v5363 = vld [vmem:[%s5346 + $0x40] sm:$0xf]
        %v5364 = vld [vmem:[%s5346 + $0x44] sm:$0xf]
        %v5365 = vld [vmem:[%s5346 + $0x48] sm:$0xf]
        %v5366 = vld [vmem:[%s5346 + $0x4c] sm:$0xf]
        %v5367 = vld [vmem:[%s5346 + $0x50] sm:$0xf]
        %v5368 = vld [vmem:[%s5346 + $0x54] sm:$0xf]
        %v5369 = vld [vmem:[%s5346 + $0x58] sm:$0xf]
        %v5370 = vld [vmem:[%s5346 + $0x5c] sm:$0xf]
        %v5371 = vld [vmem:[%s5346 + $0x60] sm:$0xf]
        %v5372 = vld [vmem:[%s5346 + $0x64] sm:$0xf]
        %v5373 = vld [vmem:[%s5346 + $0x68] sm:$0xf]
        %v5374 = vld [vmem:[%s5346 + $0x6c] sm:$0xf]
        %v5375 = vld [vmem:[%s5346 + $0x70] sm:$0xf]
        %v5376 = vld [vmem:[%s5346 + $0x74] sm:$0xf]
        %v5377 = vld [vmem:[%s5346 + $0x78] sm:$0xf]
        %v5378 = vld [vmem:[%s5346 + $0x7c] sm:$0xf]
        %v5379 = vld [vmem:[%s5346 + $0x80] sm:$0xf]
        %v5380 = vld [vmem:[%s5346 + $0x84] sm:$0xf]
        %v5381 = vld [vmem:[%s5346 + $0x88] sm:$0xf]
        %v5382 = vld [vmem:[%s5346 + $0x8c] sm:$0xf]
        %v5383 = vld [vmem:[%s5346 + $0x90] sm:$0xf]
        %v5384 = vld [vmem:[%s5346 + $0x94] sm:$0xf]
        %v5385 = vld [vmem:[%s5346 + $0x98] sm:$0xf]
        %v5386 = vld [vmem:[%s5346 + $0x9c] sm:$0xf]
        %v5387 = vld [vmem:[%s5346 + $0xa0] sm:$0xf]
        %v5388 = vld [vmem:[%s5346 + $0xa4] sm:$0xf]
        %v5389 = vld [vmem:[%s5346 + $0xa8] sm:$0xf]
        %v5390 = vld [vmem:[%s5346 + $0xac] sm:$0xf]
        %v5391 = vld [vmem:[%s5346 + $0xb0] sm:$0xf]
        %v5392 = vld [vmem:[%s5346 + $0xb4] sm:$0xf]
        %v5393 = vld [vmem:[%s5346 + $0xb8] sm:$0xf]
        %v5394 = vld [vmem:[%s5346 + $0xbc] sm:$0xf]
        %v5395 = vld [vmem:[%s5346 + $0xc0] sm:$0xf]
        %v5396 = vld [vmem:[%s5346 + $0xc4] sm:$0xf]
        %v5397 = vld [vmem:[%s5346 + $0xc8] sm:$0xf]
        %v5398 = vld [vmem:[%s5346 + $0xcc] sm:$0xf]
        %v5399 = vld [vmem:[%s5346 + $0xd0] sm:$0xf]
        %v5400 = vld [vmem:[%s5346 + $0xd4] sm:$0xf]
        %v5401 = vld [vmem:[%s5346 + $0xd8] sm:$0xf]
        %v5402 = vld [vmem:[%s5346 + $0xdc] sm:$0xf]
        %v5405 = vunpack.c.l.b16 %v5344
        %v5406 = vunpack.c.h.b16 %v5344
        %v5407 = vunpack.c.l.b16 %v5345
        %v5408 = vunpack.c.h.b16 %v5345
        %v5409 = vpack.c.b16 %v5405, %v5405
        %v5410 = vpack.c.b16 %v5406, %v5406
        %v5411 = vpack.c.b16 %v5407, %v5407
        %v5412 = vpack.c.b16 %v5408, %v5408
        %v5413 = vrot.slane %v5409, 3
        %v5414 = vrot.slane %v5410, 3
        %v5415 = vrot.slane %v5411, 3
        %v5416 = vrot.slane %v5412, 3
        %v5476 = vunpack.c.l.b16 %v5347
        %v5477 = vunpack.c.l.b16 %v5348
        %v5478 = vunpack.c.l.b16 %v5349
        %v5479 = vunpack.c.l.b16 %v5350
        %v5480 = vunpack.c.l.b16 %v5351
        %v5481 = vunpack.c.l.b16 %v5352
        %v5482 = vunpack.c.l.b16 %v5353
        %v5483 = vunpack.c.l.b16 %v5354
        %v5484 = vunpack.c.l.b16 %v5355
        %v5485 = vunpack.c.l.b16 %v5356
        %v5486 = vunpack.c.l.b16 %v5357
        %v5487 = vunpack.c.l.b16 %v5358
        %v5488 = vunpack.c.l.b16 %v5359
        %v5489 = vunpack.c.l.b16 %v5360
        %v5490 = vunpack.c.l.b16 %v5361
        %v5491 = vunpack.c.l.b16 %v5362
        %v5492 = vunpack.c.l.b16 %v5363
        %v5493 = vunpack.c.l.b16 %v5364
        %v5494 = vunpack.c.l.b16 %v5365
        %v5495 = vunpack.c.l.b16 %v5366
        %v5496 = vunpack.c.l.b16 %v5367
        %v5497 = vunpack.c.l.b16 %v5368
        %v5498 = vunpack.c.l.b16 %v5369
        %v5499 = vunpack.c.l.b16 %v5370
        %v5500 = vunpack.c.l.b16 %v5371
        %v5501 = vunpack.c.l.b16 %v5372
        %v5502 = vunpack.c.l.b16 %v5373
        %v5503 = vunpack.c.l.b16 %v5374
        %v5504 = vunpack.c.l.b16 %v5375
        %v5505 = vunpack.c.l.b16 %v5376
        %v5506 = vunpack.c.l.b16 %v5377
        %v5507 = vunpack.c.l.b16 %v5378
        %v5508 = vunpack.c.l.b16 %v5379
        %v5509 = vunpack.c.l.b16 %v5380
        %v5510 = vunpack.c.l.b16 %v5381
        %v5511 = vunpack.c.l.b16 %v5382
        %v5512 = vunpack.c.l.b16 %v5383
        %v5513 = vunpack.c.l.b16 %v5384
        %v5514 = vunpack.c.l.b16 %v5385
        %v5515 = vunpack.c.l.b16 %v5386
        %v5516 = vunpack.c.l.b16 %v5387
        %v5517 = vunpack.c.l.b16 %v5388
        %v5518 = vunpack.c.l.b16 %v5389
        %v5519 = vunpack.c.l.b16 %v5390
        %v5520 = vunpack.c.l.b16 %v5391
        %v5521 = vunpack.c.l.b16 %v5392
        %v5522 = vunpack.c.l.b16 %v5393
        %v5523 = vunpack.c.l.b16 %v5394
        %v5524 = vunpack.c.l.b16 %v5395
        %v5525 = vunpack.c.l.b16 %v5396
        %v5526 = vunpack.c.l.b16 %v5397
        %v5527 = vunpack.c.l.b16 %v5398
        %v5528 = vunpack.c.l.b16 %v5399
        %v5529 = vunpack.c.l.b16 %v5400
        %v5530 = vunpack.c.l.b16 %v5401
        %v5531 = vunpack.c.l.b16 %v5402
        %v5532 = vpack.c.b16 %v5477, %v5476
        %v5533 = vpack.c.b16 %v5479, %v5478
        %v5534 = vpack.c.b16 %v5481, %v5480
        %v5535 = vpack.c.b16 %v5483, %v5482
        %v5536 = vpack.c.b16 %v5485, %v5484
        %v5537 = vpack.c.b16 %v5487, %v5486
        %v5538 = vpack.c.b16 %v5489, %v5488
        %v5539 = vpack.c.b16 %v5491, %v5490
        %v5540 = vpack.c.b16 %v5493, %v5492
        %v5541 = vpack.c.b16 %v5495, %v5494
        %v5542 = vpack.c.b16 %v5497, %v5496
        %v5543 = vpack.c.b16 %v5499, %v5498
        %v5544 = vpack.c.b16 %v5501, %v5500
        %v5545 = vpack.c.b16 %v5503, %v5502
        %v5546 = vpack.c.b16 %v5505, %v5504
        %v5547 = vpack.c.b16 %v5507, %v5506
        %v5548 = vpack.c.b16 %v5509, %v5508
        %v5549 = vpack.c.b16 %v5511, %v5510
        %v5550 = vpack.c.b16 %v5513, %v5512
        %v5551 = vpack.c.b16 %v5515, %v5514
        %v5552 = vpack.c.b16 %v5517, %v5516
        %v5553 = vpack.c.b16 %v5519, %v5518
        %v5554 = vpack.c.b16 %v5521, %v5520
        %v5555 = vpack.c.b16 %v5523, %v5522
        %v5556 = vpack.c.b16 %v5525, %v5524
        %v5557 = vpack.c.b16 %v5527, %v5526
        %v5558 = vpack.c.b16 %v5529, %v5528
        %v5559 = vpack.c.b16 %v5531, %v5530
        %v5589 = vsel %vm3378, %v5416, 0
        %5591 = vmatpush.bf16.msra.mxu0 %v5539
        %5592 = vmatpush.bf16.msra.mxu0 %v5538
        %5593 = vmatpush.bf16.msra.mxu0 %v5537
        %5594 = vmatpush.bf16.msra.mxu0 %v5536
        %5595 = vmatpush.bf16.msra.mxu0 %v5535
        %5596 = vmatpush.bf16.msra.mxu0 %v5534
        %5597 = vmatpush.bf16.msra.mxu0 %v5533
        %5598 = vmatpush.bf16.msra.mxu0 %v5532
        %5599 = vmatmul.bf16.gmra.mxu0 %v5413
        %v5600 = vpop.f32.mrf.mxu0
        %v5601 = vadd.f32 0.0, %v5600
        %v5602 = vpop.f32.mrf.mxu0
        %5603 = vdwg.mxu0
        %5604 = vmatpush.bf16.msra.mxu0 %v5547
        %5605 = vmatpush.bf16.msra.mxu0 %v5546
        %5606 = vmatpush.bf16.msra.mxu0 %v5545
        %5607 = vmatpush.bf16.msra.mxu0 %v5544
        %5608 = vmatpush.bf16.msra.mxu0 %v5543
        %5609 = vmatpush.bf16.msra.mxu0 %v5542
        %5610 = vmatpush.bf16.msra.mxu0 %v5541
        %5611 = vmatpush.bf16.msra.mxu0 %v5540
        %5612 = vmatmul.bf16.gmra.mxu0 %v5414
        %v5613 = vpop.f32.mrf.mxu0
        %v5614 = vadd.f32 %v5601, %v5613
        %v5615 = vpop.f32.mrf.mxu0
        %5616 = vdwg.mxu0
        %5617 = vmatpush.bf16.msra.mxu0 %v5555
        %5618 = vmatpush.bf16.msra.mxu0 %v5554
        %5619 = vmatpush.bf16.msra.mxu0 %v5553
        %5620 = vmatpush.bf16.msra.mxu0 %v5552
        %5621 = vmatpush.bf16.msra.mxu0 %v5551
        %5622 = vmatpush.bf16.msra.mxu0 %v5550
        %5623 = vmatpush.bf16.msra.mxu0 %v5549
        %5624 = vmatpush.bf16.msra.mxu0 %v5548
        %5625 = vmatmul.bf16.gmra.mxu0 %v5415
        %v5626 = vpop.f32.mrf.mxu0
        %v5627 = vadd.f32 %v5614, %v5626
        %v5628 = vpop.f32.mrf.mxu0
        %5629 = vdwg.mxu0
        %5630 = vmatpush.bf16.msra.mxu0 0
        %5631 = vmatpush.bf16.msra.mxu0 0
        %5632 = vmatpush.bf16.msra.mxu0 0
        %5633 = vmatpush.bf16.msra.mxu0 0
        %5634 = vmatpush.bf16.msra.mxu0 %v5559
        %5635 = vmatpush.bf16.msra.mxu0 %v5558
        %5636 = vmatpush.bf16.msra.mxu0 %v5557
        %5637 = vmatpush.bf16.msra.mxu0 %v5556
        %5638 = vmatmul.bf16.gmra.mxu0 %v5589
        %v5639 = vpop.f32.mrf.mxu0
        %v5640 = vadd.f32 %v5627, %v5639
        %v5641 = vpop.f32.mrf.mxu0
        %5642 = vdwg.mxu0
        %v5643 = vadd.f32 %v5343, %v5640
        %v5644 = vld [vmem:[%s6] sm:$0x1]
        %v5645 = vadd.f32 %v5643, %v5644
        %vm5646 = vcmask 73728
        %5647 = vst.msk [vmem:[%s270] sm:$0x1] %vm5646, %v5645
        %s5648 = sand.u32 %s181, 1
        %s5649 = scalar_lea.sflag [#allocation7], %s5648
        %s5650 = sand.u32 %s181, 1
        %s5651 = scalar_lea.vmem [#allocation6], %s5650
        // Predicated region
        $region49: #{cnn_forward.1} parent=47 // pred_check
          %p5652 = pneg %p191
        $region50: #{cnn_forward.1} parent=47 // pred_check_branch
          %5654 = sbr.rel (%p5652) target = $region52
        $region51: #{cnn_forward.1} parent=47 // pred_region
          %5656 = vsyncadd %s5649, 0
          %s5657 = scalar_lea.hbm %s7, %s21
          %s5659 = sshll.u32 %s5651, 4
          %s5660 = int_to_ptr.vmem [resolvable:$true] %s5659
          %s5661 = sshll.u32 %s5657, 4
          %s5662 = int_to_ptr.hbm [resolvable:$true] %s5661
          %5664 = dma.vmem_to_hbm [thread:$0]  %s5660, 16, %s5662, %s5649
        $region52: #{cnn_forward.1} parent=47 // pred_fallthru
          _
      $region48: #{cnn_forward.1} parent=5 // pred_fallthru
        _
      %p5665 = scmp.le.s32.totalorder 2, %s16
      // Predicated region
      $region53: #{cnn_forward.1} parent=5 // pred_check
        %p5666 = pneg %p5665
      $region54: #{cnn_forward.1} parent=5 // pred_check_branch
        %5668 = sbr.rel (%p5666) target = $region56
      $region55: #{cnn_forward.1} parent=5 // pred_region
        %s5669 = ssub.s32 %s16, 2
        // Predicated region
        $region57: #{cnn_forward.1} parent=55 // pred_check
          %p5670 = pneg %p197
        $region58: #{cnn_forward.1} parent=55 // pred_check_branch
          %5672 = sbr.rel (%p5670) target = $region60
        $region59: #{cnn_forward.1} parent=55 // pred_region
          %s5673 = sand.u32 %s182, 1
          %s5674 = scalar_lea.sflag [#allocation7], %s5673
          %s5675 = sand.u32 %s182, 1
          %s5676 = scalar_lea.vmem [#allocation6], %s5675
          %5678 = dma.done %s5674, 16
        $region60: #{cnn_forward.1} parent=55 // pred_fallthru
          _
      $region56: #{cnn_forward.1} parent=5 // pred_fallthru
        _
    $region6: #{cnn_forward.1} parent=1 // loop_footer
      %s20 = sadd.s32 1, %s16
    $region7: #{cnn_forward.1} parent=1 // loop_footer_branch
      %15 = sbr.rel target = $region3
    $region8: #{cnn_forward.1} parent=1 // loop_exit
      _
    %5679 = vsyncpa [#allocation7], 1
    %s5680 = scalar_lea.sflag [#allocation7], 1
    %5681 = vsyncpa %s5680, 1

</llo_original>
